<compile_context>
chip_gen: v7x
topology: tpu7x:2x2x1
jax: 0.10.0
libtpu: 0.0.40
codegen_flags: <defaults>
</compile_context>

<pallas_src>
import jax
import jax.numpy as jnp
from jax import lax
from jax.experimental import pallas as pl
from jax.experimental.pallas import tpu as pltpu

CP = 128       # padded output-channel (lane) width
LT_MAX = 512   # L-tile rows when the spatial extent is large


def _round_up(x, m):
    return (x + m - 1) // m * m


# ----------------------------------------------------------------------------
# Pallas kernels
# ----------------------------------------------------------------------------
def conv_relu_kernel(xcol_ref, w_ref, b_ref, o_ref):
    """Fused 3x3 'valid' conv (one big-K matmul) + bias + ReLU.

    xcol_ref : (1, LT, Kp)   im2col'd input tile, K = 9*Cin (zero padded)
    w_ref    : (Kp, 128)     packed lane-dense weights (Cout zero padded)
    b_ref    : (1, 128)
    o_ref    : (1, LT, 128)
    """
    acc = jnp.dot(xcol_ref[0], w_ref[...], preferred_element_type=jnp.float32)
    o_ref[0] = jnp.maximum(acc + b_ref[...], 0.0)


def maxpool_kernel(p00_ref, p01_ref, p10_ref, p11_ref, o_ref):
    """MaxPool2d(2) as an elementwise max over the 4 pooling phases."""
    o_ref[...] = jnp.maximum(
        jnp.maximum(p00_ref[...], p01_ref[...]),
        jnp.maximum(p10_ref[...], p11_ref[...]))


def mlp_head_kernel(x_ref, w1_ref, b1_ref, w2_ref, b2_ref, o_ref):
    """Fused Linear(640,256) + ReLU + Linear(256,out_pad) + Sigmoid."""
    h = jnp.maximum(
        jnp.dot(x_ref[...], w1_ref[...], preferred_element_type=jnp.float32)
        + b1_ref[...], 0.0)
    z = (jnp.dot(h, w2_ref[...], preferred_element_type=jnp.float32)
         + b2_ref[...])
    o_ref[...] = 1.0 / (1.0 + jnp.exp(-z))


# ----------------------------------------------------------------------------
# Pallas call wrappers
# ----------------------------------------------------------------------------
def conv_relu_pallas(xcol, w, b, lt):
    """xcol: (N, Lp, Kp), w: (Kp, 128), b: (1, 128) -> (N, Lp, 128)."""
    N, Lp, Kp = xcol.shape
    Cp = w.shape[-1]
    nl = Lp // lt
    return pl.pallas_call(
        conv_relu_kernel,
        out_shape=jax.ShapeDtypeStruct((N, Lp, Cp), jnp.float32),
        grid=(N, nl),
        in_specs=[
            pl.BlockSpec((1, lt, Kp), lambda n, l: (n, l, 0)),
            pl.BlockSpec((Kp, Cp), lambda n, l: (0, 0)),
            pl.BlockSpec((1, Cp), lambda n, l: (0, 0)),
        ],
        out_specs=pl.BlockSpec((1, lt, Cp), lambda n, l: (n, l, 0)),
        compiler_params=pltpu.CompilerParams(
            dimension_semantics=("parallel", "parallel")),
        cost_estimate=pl.CostEstimate(
            flops=2 * N * Lp * Kp * Cp,
            transcendentals=0,
            bytes_accessed=4 * (xcol.size + w.size + b.size + N * Lp * Cp)),
    )(xcol, w, b)


def maxpool2(y):
    """(N, H, W, C) -> (N, H//2, W//2, C) with PyTorch floor semantics."""
    N, H, W, C = y.shape
    Hp, Wp = H // 2, W // 2
    y = y[:, :2 * Hp, :2 * Wp, :]
    phases = [y[:, i::2, j::2, :] for i in (0, 1) for j in (0, 1)]
    spec = pl.BlockSpec((1, Hp, Wp, C), lambda n: (n, 0, 0, 0))
    return pl.pallas_call(
        maxpool_kernel,
        out_shape=jax.ShapeDtypeStruct((N, Hp, Wp, C), jnp.float32),
        grid=(N,),
        in_specs=[spec] * 4,
        out_specs=spec,
        compiler_params=pltpu.CompilerParams(dimension_semantics=("parallel",)),
    )(*phases)


def mlp_head(xf, wl1, bl1, wl2, bl2):
    """xf: (N, 640) -> (N, out). Fused Linear+ReLU+Linear+Sigmoid."""
    N, F = xf.shape
    Hd = wl1.shape[-1]
    out_dim = wl2.shape[-1]
    Op = _round_up(max(out_dim, CP), CP)          # lane-dense final store
    wl2p = jnp.pad(wl2, ((0, 0), (0, Op - out_dim)))
    bl2p = jnp.pad(bl2.reshape(1, out_dim), ((0, 0), (0, Op - out_dim)))
    bl1p = bl1.reshape(1, Hd)
    o = pl.pallas_call(
        mlp_head_kernel,
        out_shape=jax.ShapeDtypeStruct((N, Op), jnp.float32),
        grid=(1,),
        in_specs=[
            pl.BlockSpec((N, F), lambda i: (0, 0)),
            pl.BlockSpec((F, Hd), lambda i: (0, 0)),
            pl.BlockSpec((1, Hd), lambda i: (0, 0)),
            pl.BlockSpec((Hd, Op), lambda i: (0, 0)),
            pl.BlockSpec((1, Op), lambda i: (0, 0)),
        ],
        out_specs=pl.BlockSpec((N, Op), lambda i: (0, 0)),
        cost_estimate=pl.CostEstimate(
            flops=2 * N * (F * Hd + Hd * Op),
            transcendentals=N * Op,
            bytes_accessed=4 * (N * F + F * Hd + Hd + Hd * Op + Op + N * Op)),
    )(xf, wl1, bl1p, wl2p, bl2p)
    return o[:, :out_dim]


# ----------------------------------------------------------------------------
# JAX glue (im2col / padding / layout)
# ----------------------------------------------------------------------------
def conv_relu_block(x_nhwc, cin, w_hwio, b):
    """Conv2d(cin, cout, 3, valid) + ReLU.

    x_nhwc may carry padded channels; only the first `cin` are used.
    Returns ((N, H-2, W-2, 128) channel-padded activation, cout).
    """
    N, H, W, _ = x_nhwc.shape
    cout = w_hwio.shape[-1]
    Ho, Wo = H - 2, W - 2
    L = Ho * Wo
    K = 9 * cin
    Kp = _round_up(K, 128)
    LT = LT_MAX if L > LT_MAX else _round_up(L, 8)
    Lp = _round_up(L, LT)

    x = x_nhwc[..., :cin]
    cols = []
    for kh in range(3):                      # im2col: (kh, kw) taps, C fastest
        for kw in range(3):
            cols.append(x[:, kh:kh + Ho, kw:kw + Wo, :].reshape(N, L, cin))
    xcol = jnp.concatenate(cols, axis=-1)                         # (N, L, K)
    xcol = jnp.pad(xcol, ((0, 0), (0, Lp - L), (0, Kp - K)))

    wf = jnp.pad(w_hwio.reshape(K, cout), ((0, Kp - K), (0, CP - cout)))
    bf = jnp.pad(b.reshape(1, cout), ((0, 0), (0, CP - cout)))

    y = conv_relu_pallas(xcol, wf, bf, LT)                        # (N, Lp, CP)
    return y[:, :L, :].reshape(N, Ho, Wo, CP), cout


@jax.jit
def another_disc2d_forward(x_nchw, params):
    (w1, b1, w2, b2, w3, b3, w4, b4, wl1, bl1, wl2, bl2) = params
    x = jnp.transpose(x_nchw, (0, 2, 3, 1)).astype(jnp.float32)   # NCHW->NHWC

    y, c = conv_relu_block(x, x.shape[-1], w1, b1)   # Conv(inp,20,3)+ReLU
    y = maxpool2(y)                                  # MaxPool2d(2)
    y, c = conv_relu_block(y, c, w2, b2)             # Conv(20,40,3)+ReLU
    y = maxpool2(y)                                  # MaxPool2d(2)
    y, c = conv_relu_block(y, c, w3, b3)             # Conv(40,80,3)+ReLU
    y, c = conv_relu_block(y, c, w4, b4)             # Conv(80,80,3)+ReLU

    y = y[..., :c]                                   # drop channel padding
    N = y.shape[0]
    xf = jnp.transpose(y, (0, 3, 1, 2)).reshape(N, -1)   # PyTorch (C,H,W) flatten
    return mlp_head(xf, wl1, bl1, wl2, bl2)          # Linear+ReLU+Linear+Sigmoid


# ----------------------------------------------------------------------------
# Pure-JAX reference (for verification)
# ----------------------------------------------------------------------------
def ref_another_disc2d(x_nchw, params):
    (w1, b1, w2, b2, w3, b3, w4, b4, wl1, bl1, wl2, bl2) = params
    x = jnp.transpose(x_nchw, (0, 2, 3, 1))

    def conv_relu(x, w, b):
        y = lax.conv_general_dilated(
            x, w, (1, 1), "VALID",
            dimension_numbers=("NHWC", "HWIO", "NHWC"),
            precision=lax.Precision.HIGHEST)
        return jnp.maximum(y + b.reshape(1, 1, 1, -1), 0.0)

    def pool(x):
        return lax.reduce_window(x, -jnp.inf, lax.max,
                                 (1, 2, 2, 1), (1, 2, 2, 1), "VALID")

    y = pool(conv_relu(x, w1, b1))
    y = pool(conv_relu(y, w2, b2))
    y = conv_relu(y, w3, b3)
    y = conv_relu(y, w4, b4)
    N = y.shape[0]
    xf = jnp.transpose(y, (0, 3, 1, 2)).reshape(N, -1)
    h = jnp.maximum(jnp.dot(xf, wl1, precision=lax.Precision.HIGHEST)
                    + bl1.reshape(1, -1), 0.0)
    z = jnp.dot(h, wl2, precision=lax.Precision.HIGHEST) + bl2.reshape(1, -1)
    return jax.nn.sigmoid(z)


# ----------------------------------------------------------------------------
if __name__ == "__main__":
    # Input spatial size must make the flattened conv features 640
    # (Linear(640, 256) in the module): 32x40 -> 2x4x80 = 640.
    N, Cin, Himg, Wimg = 2, 4, 32, 40
    OUT = 2
    X0 = 20

    key = jax.random.PRNGKey(0)
    ks = jax.random.split(key, 7)

    def conv_init(k, cin, cout):
        bound = 1.0 / (cin * 9) ** 0.5
        kw, kb = jax.random.split(k)
        w = jax.random.uniform(kw, (3, 3, cin, cout), jnp.float32, -bound, bound)
        b = jax.random.uniform(kb, (cout,), jnp.float32, -bound, bound)
        return w, b

    def lin_init(k, fin, fout):
        bound = 1.0 / fin ** 0.5
        kw, kb = jax.random.split(k)
        w = jax.random.uniform(kw, (fin, fout), jnp.float32, -bound, bound)
        b = jax.random.uniform(kb, (fout,), jnp.float32, -bound, bound)
        return w, b

    x = jax.random.normal(ks[0], (N, Cin, Himg, Wimg), jnp.float32)
    w1, b1 = conv_init(ks[1], Cin, X0)
    w2, b2 = conv_init(ks[2], X0, 2 * X0)
    w3, b3 = conv_init(ks[3], 2 * X0, 4 * X0)
    w4, b4 = conv_init(ks[4], 4 * X0, 4 * X0)
    wl1, bl1 = lin_init(ks[5], 640, 256)
    wl2, bl2 = lin_init(ks[6], 256, OUT)

    params = (w1, b1, w2, b2, w3, b3, w4, b4, wl1, bl1, wl2, bl2)

    out = jax.block_until_ready(another_disc2d_forward(x, params))
    assert out.shape == (N, OUT), out.shape

    ref = jax.block_until_ready(ref_another_disc2d(x, params))
    max_err = float(jnp.max(jnp.abs(out - ref)))
    assert jnp.allclose(out, ref, atol=2e-2, rtol=2e-2), max_err

    # TODO(synk): im2col / pooling-phase slicing / flatten transpose remain XLA
    # glue (pure layout work; in-kernel halo DMA is overkill at these sizes).
    print("KERNEL_OK")
</pallas_src>

<mosaic_0001>
module attributes {stable_mosaic.version = 11 : i64} {
  func.func @conv_relu_kernel(%arg0: i32, %arg1: i32, %arg2: memref<1x512x128xf32, #tpu.memory_space<vmem>>, %arg3: memref<128x128xf32, #tpu.memory_space<vmem>>, %arg4: memref<1x128xf32, #tpu.memory_space<vmem>>, %arg5: memref<1x512x128xf32, #tpu.memory_space<vmem>>) attributes {dimension_semantics = [#tpu.dimension_semantics<parallel>, #tpu.dimension_semantics<parallel>], iteration_bounds = array<i64: 2, 3>, scalar_prefetch = 0 : i64, scratch_operands = 0 : i64, tpu.core_type = #tpu.core_type<tc>, window_params = [{transform_indices = @transform_0, window_bounds = array<i64: 1, 512, 128>}, {pipeline_mode = #tpu.pipeline_mode<synchronous>, transform_indices = @transform_1, window_bounds = array<i64: 128, 128>}, {pipeline_mode = #tpu.pipeline_mode<synchronous>, transform_indices = @transform_2, window_bounds = array<i64: 1, 128>}, {transform_indices = @transform_3, window_bounds = array<i64: 1, 512, 128>}]} {
    %c0 = arith.constant 0 : index
    %c0_0 = arith.constant 0 : index
    %c0_1 = arith.constant 0 : index
    %0 = vector.load %arg2[%c0, %c0_0, %c0_1] : memref<1x512x128xf32, #tpu.memory_space<vmem>>, vector<1x512x128xf32>
    %1 = vector.shape_cast %0 : vector<1x512x128xf32> to vector<512x128xf32>
    %c0_2 = arith.constant 0 : index
    %c0_3 = arith.constant 0 : index
    %2 = vector.load %arg3[%c0_2, %c0_3] : memref<128x128xf32, #tpu.memory_space<vmem>>, vector<128x128xf32>
    %cst = arith.constant dense<0.000000e+00> : vector<512x128xf32>
    %3 = tpu.matmul %1, %2, %cst {dimension_numbers = #tpu.dot_dimension_numbers<[1], [0], [0], [1], [0, 0, 1, 1], [], []>} : vector<512x128xf32>, vector<128x128xf32>, vector<512x128xf32> -> vector<512x128xf32>
    %c0_4 = arith.constant 0 : index
    %c0_5 = arith.constant 0 : index
    %4 = vector.load %arg4[%c0_4, %c0_5] : memref<1x128xf32, #tpu.memory_space<vmem>>, vector<1x128xf32>
    %5 = vector.broadcast %4 : vector<1x128xf32> to vector<512x128xf32>
    %6 = arith.addf %3, %5 : vector<512x128xf32>
    %cst_6 = arith.constant 0.000000e+00 : f32
    %7 = vector.broadcast %cst_6 : f32 to vector<512x128xf32>
    %8 = arith.maximumf %6, %7 : vector<512x128xf32>
    %c0_7 = arith.constant 0 : index
    %c0_8 = arith.constant 0 : index
    %c0_9 = arith.constant 0 : index
    %9 = vector.load %arg5[%c0_7, %c0_8, %c0_9] : memref<1x512x128xf32, #tpu.memory_space<vmem>>, vector<1x512x128xf32>
    %10 = vector.shape_cast %9 : vector<1x512x128xf32> to vector<512x128xf32>
    %11 = vector.shape_cast %8 : vector<512x128xf32> to vector<1x512x128xf32>
    tpu.vector_store %arg5[%c0_7, %c0_8, %c0_9], %11 {strides = array<i32>} : memref<1x512x128xf32, #tpu.memory_space<vmem>>, vector<1x512x128xf32>,
    return
  }
  func.func @transform_0(%arg0: i32, %arg1: i32) -> (i32, i32, i32) {
    %c0_i32 = arith.constant 0 : i32
    %c0_i32_0 = arith.constant 0 : i32
    return %arg0, %arg1, %c0_i32 : i32, i32, i32
  }
  func.func @transform_1(%arg0: i32, %arg1: i32) -> (i32, i32) {
    %c0_i32 = arith.constant 0 : i32
    %c0_i32_0 = arith.constant 0 : i32
    %c0_i32_1 = arith.constant 0 : i32
    return %c0_i32, %c0_i32_0 : i32, i32
  }
  func.func @transform_2(%arg0: i32, %arg1: i32) -> (i32, i32) {
    %c0_i32 = arith.constant 0 : i32
    %c0_i32_0 = arith.constant 0 : i32
    %c0_i32_1 = arith.constant 0 : i32
    return %c0_i32, %c0_i32_0 : i32, i32
  }
  func.func @transform_3(%arg0: i32, %arg1: i32) -> (i32, i32, i32) {
    %c0_i32 = arith.constant 0 : i32
    %c0_i32_0 = arith.constant 0 : i32
    return %arg0, %arg1, %c0_i32 : i32, i32, i32
  }
}

module attributes {stable_mosaic.version = 11 : i64} {
  func.func @maxpool_kernel(%arg0: i32, %arg1: memref<1x15x19x128xf32, #tpu.memory_space<vmem>>, %arg2: memref<1x15x19x128xf32, #tpu.memory_space<vmem>>, %arg3: memref<1x15x19x128xf32, #tpu.memory_space<vmem>>, %arg4: memref<1x15x19x128xf32, #tpu.memory_space<vmem>>, %arg5: memref<1x15x19x128xf32, #tpu.memory_space<vmem>>) attributes {dimension_semantics = [#tpu.dimension_semantics<parallel>], iteration_bounds = array<i64: 2>, scalar_prefetch = 0 : i64, scratch_operands = 0 : i64, tpu.core_type = #tpu.core_type<tc>, window_params = [{transform_indices = @transform_0, window_bounds = array<i64: 1, 15, 19, 128>}, {transform_indices = @transform_1, window_bounds = array<i64: 1, 15, 19, 128>}, {transform_indices = @transform_2, window_bounds = array<i64: 1, 15, 19, 128>}, {transform_indices = @transform_3, window_bounds = array<i64: 1, 15, 19, 128>}, {transform_indices = @transform_4, window_bounds = array<i64: 1, 15, 19, 128>}]} {
    %c0 = arith.constant 0 : index
    %c0_0 = arith.constant 0 : index
    %c0_1 = arith.constant 0 : index
    %c0_2 = arith.constant 0 : index
    %0 = vector.load %arg1[%c0, %c0_0, %c0_1, %c0_2] : memref<1x15x19x128xf32, #tpu.memory_space<vmem>>, vector<1x15x19x128xf32>
    %c0_3 = arith.constant 0 : index
    %c0_4 = arith.constant 0 : index
    %c0_5 = arith.constant 0 : index
    %c0_6 = arith.constant 0 : index
    %1 = vector.load %arg2[%c0_3, %c0_4, %c0_5, %c0_6] : memref<1x15x19x128xf32, #tpu.memory_space<vmem>>, vector<1x15x19x128xf32>
    %2 = arith.maximumf %0, %1 : vector<1x15x19x128xf32>
    %c0_7 = arith.constant 0 : index
    %c0_8 = arith.constant 0 : index
    %c0_9 = arith.constant 0 : index
    %c0_10 = arith.constant 0 : index
    %3 = vector.load %arg3[%c0_7, %c0_8, %c0_9, %c0_10] : memref<1x15x19x128xf32, #tpu.memory_space<vmem>>, vector<1x15x19x128xf32>
    %c0_11 = arith.constant 0 : index
    %c0_12 = arith.constant 0 : index
    %c0_13 = arith.constant 0 : index
    %c0_14 = arith.constant 0 : index
    %4 = vector.load %arg4[%c0_11, %c0_12, %c0_13, %c0_14] : memref<1x15x19x128xf32, #tpu.memory_space<vmem>>, vector<1x15x19x128xf32>
    %5 = arith.maximumf %3, %4 : vector<1x15x19x128xf32>
    %6 = arith.maximumf %2, %5 : vector<1x15x19x128xf32>
    %c0_15 = arith.constant 0 : index
    %c0_16 = arith.constant 0 : index
    %c0_17 = arith.constant 0 : index
    %c0_18 = arith.constant 0 : index
    %7 = vector.load %arg5[%c0_15, %c0_16, %c0_17, %c0_18] : memref<1x15x19x128xf32, #tpu.memory_space<vmem>>, vector<1x15x19x128xf32>
    tpu.vector_store %arg5[%c0_15, %c0_16, %c0_17, %c0_18], %6 {strides = array<i32>} : memref<1x15x19x128xf32, #tpu.memory_space<vmem>>, vector<1x15x19x128xf32>,
    return
  }
  func.func @transform_0(%arg0: i32) -> (i32, i32, i32, i32) {
    %c0_i32 = arith.constant 0 : i32
    %c0_i32_0 = arith.constant 0 : i32
    %c0_i32_1 = arith.constant 0 : i32
    %c0_i32_2 = arith.constant 0 : i32
    return %arg0, %c0_i32, %c0_i32_0, %c0_i32_1 : i32, i32, i32, i32
  }
  func.func @transform_1(%arg0: i32) -> (i32, i32, i32, i32) {
    %c0_i32 = arith.constant 0 : i32
    %c0_i32_0 = arith.constant 0 : i32
    %c0_i32_1 = arith.constant 0 : i32
    %c0_i32_2 = arith.constant 0 : i32
    return %arg0, %c0_i32, %c0_i32_0, %c0_i32_1 : i32, i32, i32, i32
  }
  func.func @transform_2(%arg0: i32) -> (i32, i32, i32, i32) {
    %c0_i32 = arith.constant 0 : i32
    %c0_i32_0 = arith.constant 0 : i32
    %c0_i32_1 = arith.constant 0 : i32
    %c0_i32_2 = arith.constant 0 : i32
    return %arg0, %c0_i32, %c0_i32_0, %c0_i32_1 : i32, i32, i32, i32
  }
  func.func @transform_3(%arg0: i32) -> (i32, i32, i32, i32) {
    %c0_i32 = arith.constant 0 : i32
    %c0_i32_0 = arith.constant 0 : i32
    %c0_i32_1 = arith.constant 0 : i32
    %c0_i32_2 = arith.constant 0 : i32
    return %arg0, %c0_i32, %c0_i32_0, %c0_i32_1 : i32, i32, i32, i32
  }
  func.func @transform_4(%arg0: i32) -> (i32, i32, i32, i32) {
    %c0_i32 = arith.constant 0 : i32
    %c0_i32_0 = arith.constant 0 : i32
    %c0_i32_1 = arith.constant 0 : i32
    %c0_i32_2 = arith.constant 0 : i32
    return %arg0, %c0_i32, %c0_i32_0, %c0_i32_1 : i32, i32, i32, i32
  }
}

module attributes {stable_mosaic.version = 11 : i64} {
  func.func @conv_relu_kernel(%arg0: i32, %arg1: i32, %arg2: memref<1x224x256xf32, #tpu.memory_space<vmem>>, %arg3: memref<256x128xf32, #tpu.memory_space<vmem>>, %arg4: memref<1x128xf32, #tpu.memory_space<vmem>>, %arg5: memref<1x224x128xf32, #tpu.memory_space<vmem>>) attributes {dimension_semantics = [#tpu.dimension_semantics<parallel>, #tpu.dimension_semantics<parallel>], iteration_bounds = array<i64: 2, 1>, scalar_prefetch = 0 : i64, scratch_operands = 0 : i64, tpu.core_type = #tpu.core_type<tc>, window_params = [{transform_indices = @transform_0, window_bounds = array<i64: 1, 224, 256>}, {pipeline_mode = #tpu.pipeline_mode<synchronous>, transform_indices = @transform_1, window_bounds = array<i64: 256, 128>}, {pipeline_mode = #tpu.pipeline_mode<synchronous>, transform_indices = @transform_2, window_bounds = array<i64: 1, 128>}, {transform_indices = @transform_3, window_bounds = array<i64: 1, 224, 128>}]} {
    %c0 = arith.constant 0 : index
    %c0_0 = arith.constant 0 : index
    %c0_1 = arith.constant 0 : index
    %0 = vector.load %arg2[%c0, %c0_0, %c0_1] : memref<1x224x256xf32, #tpu.memory_space<vmem>>, vector<1x224x256xf32>
    %1 = vector.shape_cast %0 : vector<1x224x256xf32> to vector<224x256xf32>
    %c0_2 = arith.constant 0 : index
    %c0_3 = arith.constant 0 : index
    %2 = vector.load %arg3[%c0_2, %c0_3] : memref<256x128xf32, #tpu.memory_space<vmem>>, vector<256x128xf32>
    %cst = arith.constant dense<0.000000e+00> : vector<224x128xf32>
    %3 = tpu.matmul %1, %2, %cst {dimension_numbers = #tpu.dot_dimension_numbers<[1], [0], [0], [1], [0, 0, 1, 1], [], []>} : vector<224x256xf32>, vector<256x128xf32>, vector<224x128xf32> -> vector<224x128xf32>
    %c0_4 = arith.constant 0 : index
    %c0_5 = arith.constant 0 : index
    %4 = vector.load %arg4[%c0_4, %c0_5] : memref<1x128xf32, #tpu.memory_space<vmem>>, vector<1x128xf32>
    %5 = vector.broadcast %4 : vector<1x128xf32> to vector<224x128xf32>
    %6 = arith.addf %3, %5 : vector<224x128xf32>
    %cst_6 = arith.constant 0.000000e+00 : f32
    %7 = vector.broadcast %cst_6 : f32 to vector<224x128xf32>
    %8 = arith.maximumf %6, %7 : vector<224x128xf32>
    %c0_7 = arith.constant 0 : index
    %c0_8 = arith.constant 0 : index
    %c0_9 = arith.constant 0 : index
    %9 = vector.load %arg5[%c0_7, %c0_8, %c0_9] : memref<1x224x128xf32, #tpu.memory_space<vmem>>, vector<1x224x128xf32>
    %10 = vector.shape_cast %9 : vector<1x224x128xf32> to vector<224x128xf32>
    %11 = vector.shape_cast %8 : vector<224x128xf32> to vector<1x224x128xf32>
    tpu.vector_store %arg5[%c0_7, %c0_8, %c0_9], %11 {strides = array<i32>} : memref<1x224x128xf32, #tpu.memory_space<vmem>>, vector<1x224x128xf32>,
    return
  }
  func.func @transform_0(%arg0: i32, %arg1: i32) -> (i32, i32, i32) {
    %c0_i32 = arith.constant 0 : i32
    %c0_i32_0 = arith.constant 0 : i32
    return %arg0, %arg1, %c0_i32 : i32, i32, i32
  }
  func.func @transform_1(%arg0: i32, %arg1: i32) -> (i32, i32) {
    %c0_i32 = arith.constant 0 : i32
    %c0_i32_0 = arith.constant 0 : i32
    %c0_i32_1 = arith.constant 0 : i32
    return %c0_i32, %c0_i32_0 : i32, i32
  }
  func.func @transform_2(%arg0: i32, %arg1: i32) -> (i32, i32) {
    %c0_i32 = arith.constant 0 : i32
    %c0_i32_0 = arith.constant 0 : i32
    %c0_i32_1 = arith.constant 0 : i32
    return %c0_i32, %c0_i32_0 : i32, i32
  }
  func.func @transform_3(%arg0: i32, %arg1: i32) -> (i32, i32, i32) {
    %c0_i32 = arith.constant 0 : i32
    %c0_i32_0 = arith.constant 0 : i32
    return %arg0, %arg1, %c0_i32 : i32, i32, i32
  }
}

module attributes {stable_mosaic.version = 11 : i64} {
  func.func @maxpool_kernel(%arg0: i32, %arg1: memref<1x6x8x128xf32, #tpu.memory_space<vmem>>, %arg2: memref<1x6x8x128xf32, #tpu.memory_space<vmem>>, %arg3: memref<1x6x8x128xf32, #tpu.memory_space<vmem>>, %arg4: memref<1x6x8x128xf32, #tpu.memory_space<vmem>>, %arg5: memref<1x6x8x128xf32, #tpu.memory_space<vmem>>) attributes {dimension_semantics = [#tpu.dimension_semantics<parallel>], iteration_bounds = array<i64: 2>, scalar_prefetch = 0 : i64, scratch_operands = 0 : i64, tpu.core_type = #tpu.core_type<tc>, window_params = [{transform_indices = @transform_0, window_bounds = array<i64: 1, 6, 8, 128>}, {transform_indices = @transform_1, window_bounds = array<i64: 1, 6, 8, 128>}, {transform_indices = @transform_2, window_bounds = array<i64: 1, 6, 8, 128>}, {transform_indices = @transform_3, window_bounds = array<i64: 1, 6, 8, 128>}, {transform_indices = @transform_4, window_bounds = array<i64: 1, 6, 8, 128>}]} {
    %c0 = arith.constant 0 : index
    %c0_0 = arith.constant 0 : index
    %c0_1 = arith.constant 0 : index
    %c0_2 = arith.constant 0 : index
    %0 = vector.load %arg1[%c0, %c0_0, %c0_1, %c0_2] : memref<1x6x8x128xf32, #tpu.memory_space<vmem>>, vector<1x6x8x128xf32>
    %c0_3 = arith.constant 0 : index
    %c0_4 = arith.constant 0 : index
    %c0_5 = arith.constant 0 : index
    %c0_6 = arith.constant 0 : index
    %1 = vector.load %arg2[%c0_3, %c0_4, %c0_5, %c0_6] : memref<1x6x8x128xf32, #tpu.memory_space<vmem>>, vector<1x6x8x128xf32>
    %2 = arith.maximumf %0, %1 : vector<1x6x8x128xf32>
    %c0_7 = arith.constant 0 : index
    %c0_8 = arith.constant 0 : index
    %c0_9 = arith.constant 0 : index
    %c0_10 = arith.constant 0 : index
    %3 = vector.load %arg3[%c0_7, %c0_8, %c0_9, %c0_10] : memref<1x6x8x128xf32, #tpu.memory_space<vmem>>, vector<1x6x8x128xf32>
    %c0_11 = arith.constant 0 : index
    %c0_12 = arith.constant 0 : index
    %c0_13 = arith.constant 0 : index
    %c0_14 = arith.constant 0 : index
    %4 = vector.load %arg4[%c0_11, %c0_12, %c0_13, %c0_14] : memref<1x6x8x128xf32, #tpu.memory_space<vmem>>, vector<1x6x8x128xf32>
    %5 = arith.maximumf %3, %4 : vector<1x6x8x128xf32>
    %6 = arith.maximumf %2, %5 : vector<1x6x8x128xf32>
    %c0_15 = arith.constant 0 : index
    %c0_16 = arith.constant 0 : index
    %c0_17 = arith.constant 0 : index
    %c0_18 = arith.constant 0 : index
    %7 = vector.load %arg5[%c0_15, %c0_16, %c0_17, %c0_18] : memref<1x6x8x128xf32, #tpu.memory_space<vmem>>, vector<1x6x8x128xf32>
    tpu.vector_store %arg5[%c0_15, %c0_16, %c0_17, %c0_18], %6 {strides = array<i32>} : memref<1x6x8x128xf32, #tpu.memory_space<vmem>>, vector<1x6x8x128xf32>,
    return
  }
  func.func @transform_0(%arg0: i32) -> (i32, i32, i32, i32) {
    %c0_i32 = arith.constant 0 : i32
    %c0_i32_0 = arith.constant 0 : i32
    %c0_i32_1 = arith.constant 0 : i32
    %c0_i32_2 = arith.constant 0 : i32
    return %arg0, %c0_i32, %c0_i32_0, %c0_i32_1 : i32, i32, i32, i32
  }
  func.func @transform_1(%arg0: i32) -> (i32, i32, i32, i32) {
    %c0_i32 = arith.constant 0 : i32
    %c0_i32_0 = arith.constant 0 : i32
    %c0_i32_1 = arith.constant 0 : i32
    %c0_i32_2 = arith.constant 0 : i32
    return %arg0, %c0_i32, %c0_i32_0, %c0_i32_1 : i32, i32, i32, i32
  }
  func.func @transform_2(%arg0: i32) -> (i32, i32, i32, i32) {
    %c0_i32 = arith.constant 0 : i32
    %c0_i32_0 = arith.constant 0 : i32
    %c0_i32_1 = arith.constant 0 : i32
    %c0_i32_2 = arith.constant 0 : i32
    return %arg0, %c0_i32, %c0_i32_0, %c0_i32_1 : i32, i32, i32, i32
  }
  func.func @transform_3(%arg0: i32) -> (i32, i32, i32, i32) {
    %c0_i32 = arith.constant 0 : i32
    %c0_i32_0 = arith.constant 0 : i32
    %c0_i32_1 = arith.constant 0 : i32
    %c0_i32_2 = arith.constant 0 : i32
    return %arg0, %c0_i32, %c0_i32_0, %c0_i32_1 : i32, i32, i32, i32
  }
  func.func @transform_4(%arg0: i32) -> (i32, i32, i32, i32) {
    %c0_i32 = arith.constant 0 : i32
    %c0_i32_0 = arith.constant 0 : i32
    %c0_i32_1 = arith.constant 0 : i32
    %c0_i32_2 = arith.constant 0 : i32
    return %arg0, %c0_i32, %c0_i32_0, %c0_i32_1 : i32, i32, i32, i32
  }
}

module attributes {stable_mosaic.version = 11 : i64} {
  func.func @conv_relu_kernel(%arg0: i32, %arg1: i32, %arg2: memref<1x24x384xf32, #tpu.memory_space<vmem>>, %arg3: memref<384x128xf32, #tpu.memory_space<vmem>>, %arg4: memref<1x128xf32, #tpu.memory_space<vmem>>, %arg5: memref<1x24x128xf32, #tpu.memory_space<vmem>>) attributes {dimension_semantics = [#tpu.dimension_semantics<parallel>, #tpu.dimension_semantics<parallel>], iteration_bounds = array<i64: 2, 1>, scalar_prefetch = 0 : i64, scratch_operands = 0 : i64, tpu.core_type = #tpu.core_type<tc>, window_params = [{transform_indices = @transform_0, window_bounds = array<i64: 1, 24, 384>}, {pipeline_mode = #tpu.pipeline_mode<synchronous>, transform_indices = @transform_1, window_bounds = array<i64: 384, 128>}, {pipeline_mode = #tpu.pipeline_mode<synchronous>, transform_indices = @transform_2, window_bounds = array<i64: 1, 128>}, {transform_indices = @transform_3, window_bounds = array<i64: 1, 24, 128>}]} {
    %c0 = arith.constant 0 : index
    %c0_0 = arith.constant 0 : index
    %c0_1 = arith.constant 0 : index
    %0 = vector.load %arg2[%c0, %c0_0, %c0_1] : memref<1x24x384xf32, #tpu.memory_space<vmem>>, vector<1x24x384xf32>
    %1 = vector.shape_cast %0 : vector<1x24x384xf32> to vector<24x384xf32>
    %c0_2 = arith.constant 0 : index
    %c0_3 = arith.constant 0 : index
    %2 = vector.load %arg3[%c0_2, %c0_3] : memref<384x128xf32, #tpu.memory_space<vmem>>, vector<384x128xf32>
    %cst = arith.constant dense<0.000000e+00> : vector<24x128xf32>
    %3 = tpu.matmul %1, %2, %cst {dimension_numbers = #tpu.dot_dimension_numbers<[1], [0], [0], [1], [0, 0, 1, 1], [], []>} : vector<24x384xf32>, vector<384x128xf32>, vector<24x128xf32> -> vector<24x128xf32>
    %c0_4 = arith.constant 0 : index
    %c0_5 = arith.constant 0 : index
    %4 = vector.load %arg4[%c0_4, %c0_5] : memref<1x128xf32, #tpu.memory_space<vmem>>, vector<1x128xf32>
    %5 = vector.broadcast %4 : vector<1x128xf32> to vector<24x128xf32>
    %6 = arith.addf %3, %5 : vector<24x128xf32>
    %cst_6 = arith.constant 0.000000e+00 : f32
    %7 = vector.broadcast %cst_6 : f32 to vector<24x128xf32>
    %8 = arith.maximumf %6, %7 : vector<24x128xf32>
    %c0_7 = arith.constant 0 : index
    %c0_8 = arith.constant 0 : index
    %c0_9 = arith.constant 0 : index
    %9 = vector.load %arg5[%c0_7, %c0_8, %c0_9] : memref<1x24x128xf32, #tpu.memory_space<vmem>>, vector<1x24x128xf32>
    %10 = vector.shape_cast %9 : vector<1x24x128xf32> to vector<24x128xf32>
    %11 = vector.shape_cast %8 : vector<24x128xf32> to vector<1x24x128xf32>
    tpu.vector_store %arg5[%c0_7, %c0_8, %c0_9], %11 {strides = array<i32>} : memref<1x24x128xf32, #tpu.memory_space<vmem>>, vector<1x24x128xf32>,
    return
  }
  func.func @transform_0(%arg0: i32, %arg1: i32) -> (i32, i32, i32) {
    %c0_i32 = arith.constant 0 : i32
    %c0_i32_0 = arith.constant 0 : i32
    return %arg0, %arg1, %c0_i32 : i32, i32, i32
  }
  func.func @transform_1(%arg0: i32, %arg1: i32) -> (i32, i32) {
    %c0_i32 = arith.constant 0 : i32
    %c0_i32_0 = arith.constant 0 : i32
    %c0_i32_1 = arith.constant 0 : i32
    return %c0_i32, %c0_i32_0 : i32, i32
  }
  func.func @transform_2(%arg0: i32, %arg1: i32) -> (i32, i32) {
    %c0_i32 = arith.constant 0 : i32
    %c0_i32_0 = arith.constant 0 : i32
    %c0_i32_1 = arith.constant 0 : i32
    return %c0_i32, %c0_i32_0 : i32, i32
  }
  func.func @transform_3(%arg0: i32, %arg1: i32) -> (i32, i32, i32) {
    %c0_i32 = arith.constant 0 : i32
    %c0_i32_0 = arith.constant 0 : i32
    return %arg0, %arg1, %c0_i32 : i32, i32, i32
  }
}

module attributes {stable_mosaic.version = 11 : i64} {
  func.func @conv_relu_kernel(%arg0: i32, %arg1: i32, %arg2: memref<1x8x768xf32, #tpu.memory_space<vmem>>, %arg3: memref<768x128xf32, #tpu.memory_space<vmem>>, %arg4: memref<1x128xf32, #tpu.memory_space<vmem>>, %arg5: memref<1x8x128xf32, #tpu.memory_space<vmem>>) attributes {dimension_semantics = [#tpu.dimension_semantics<parallel>, #tpu.dimension_semantics<parallel>], iteration_bounds = array<i64: 2, 1>, scalar_prefetch = 0 : i64, scratch_operands = 0 : i64, tpu.core_type = #tpu.core_type<tc>, window_params = [{transform_indices = @transform_0, window_bounds = array<i64: 1, 8, 768>}, {pipeline_mode = #tpu.pipeline_mode<synchronous>, transform_indices = @transform_1, window_bounds = array<i64: 768, 128>}, {pipeline_mode = #tpu.pipeline_mode<synchronous>, transform_indices = @transform_2, window_bounds = array<i64: 1, 128>}, {transform_indices = @transform_3, window_bounds = array<i64: 1, 8, 128>}]} {
    %c0 = arith.constant 0 : index
    %c0_0 = arith.constant 0 : index
    %c0_1 = arith.constant 0 : index
    %0 = vector.load %arg2[%c0, %c0_0, %c0_1] : memref<1x8x768xf32, #tpu.memory_space<vmem>>, vector<1x8x768xf32>
    %1 = vector.shape_cast %0 : vector<1x8x768xf32> to vector<8x768xf32>
    %c0_2 = arith.constant 0 : index
    %c0_3 = arith.constant 0 : index
    %2 = vector.load %arg3[%c0_2, %c0_3] : memref<768x128xf32, #tpu.memory_space<vmem>>, vector<768x128xf32>
    %cst = arith.constant dense<0.000000e+00> : vector<8x128xf32>
    %3 = tpu.matmul %1, %2, %cst {dimension_numbers = #tpu.dot_dimension_numbers<[1], [0], [0], [1], [0, 0, 1, 1], [], []>} : vector<8x768xf32>, vector<768x128xf32>, vector<8x128xf32> -> vector<8x128xf32>
    %c0_4 = arith.constant 0 : index
    %c0_5 = arith.constant 0 : index
    %4 = vector.load %arg4[%c0_4, %c0_5] : memref<1x128xf32, #tpu.memory_space<vmem>>, vector<1x128xf32>
    %5 = vector.broadcast %4 : vector<1x128xf32> to vector<8x128xf32>
    %6 = arith.addf %3, %5 : vector<8x128xf32>
    %cst_6 = arith.constant 0.000000e+00 : f32
    %7 = vector.broadcast %cst_6 : f32 to vector<8x128xf32>
    %8 = arith.maximumf %6, %7 : vector<8x128xf32>
    %c0_7 = arith.constant 0 : index
    %c0_8 = arith.constant 0 : index
    %c0_9 = arith.constant 0 : index
    %9 = vector.load %arg5[%c0_7, %c0_8, %c0_9] : memref<1x8x128xf32, #tpu.memory_space<vmem>>, vector<1x8x128xf32>
    %10 = vector.shape_cast %9 : vector<1x8x128xf32> to vector<8x128xf32>
    %11 = vector.shape_cast %8 : vector<8x128xf32> to vector<1x8x128xf32>
    tpu.vector_store %arg5[%c0_7, %c0_8, %c0_9], %11 {strides = array<i32>} : memref<1x8x128xf32, #tpu.memory_space<vmem>>, vector<1x8x128xf32>,
    return
  }
  func.func @transform_0(%arg0: i32, %arg1: i32) -> (i32, i32, i32) {
    %c0_i32 = arith.constant 0 : i32
    %c0_i32_0 = arith.constant 0 : i32
    return %arg0, %arg1, %c0_i32 : i32, i32, i32
  }
  func.func @transform_1(%arg0: i32, %arg1: i32) -> (i32, i32) {
    %c0_i32 = arith.constant 0 : i32
    %c0_i32_0 = arith.constant 0 : i32
    %c0_i32_1 = arith.constant 0 : i32
    return %c0_i32, %c0_i32_0 : i32, i32
  }
  func.func @transform_2(%arg0: i32, %arg1: i32) -> (i32, i32) {
    %c0_i32 = arith.constant 0 : i32
    %c0_i32_0 = arith.constant 0 : i32
    %c0_i32_1 = arith.constant 0 : i32
    return %c0_i32, %c0_i32_0 : i32, i32
  }
  func.func @transform_3(%arg0: i32, %arg1: i32) -> (i32, i32, i32) {
    %c0_i32 = arith.constant 0 : i32
    %c0_i32_0 = arith.constant 0 : i32
    return %arg0, %arg1, %c0_i32 : i32, i32, i32
  }
}

module attributes {stable_mosaic.version = 11 : i64} {
  func.func @mlp_head_kernel(%arg0: i32, %arg1: memref<2x640xf32, #tpu.memory_space<vmem>>, %arg2: memref<640x256xf32, #tpu.memory_space<vmem>>, %arg3: memref<1x256xf32, #tpu.memory_space<vmem>>, %arg4: memref<256x128xf32, #tpu.memory_space<vmem>>, %arg5: memref<1x128xf32, #tpu.memory_space<vmem>>, %arg6: memref<2x128xf32, #tpu.memory_space<vmem>>) attributes {dimension_semantics = [#tpu.dimension_semantics<arbitrary>], iteration_bounds = array<i64: 1>, scalar_prefetch = 0 : i64, scratch_operands = 0 : i64, tpu.core_type = #tpu.core_type<tc>, window_params = [{pipeline_mode = #tpu.pipeline_mode<synchronous>, transform_indices = @transform_0, window_bounds = array<i64: 2, 640>}, {pipeline_mode = #tpu.pipeline_mode<synchronous>, transform_indices = @transform_1, window_bounds = array<i64: 640, 256>}, {pipeline_mode = #tpu.pipeline_mode<synchronous>, transform_indices = @transform_2, window_bounds = array<i64: 1, 256>}, {pipeline_mode = #tpu.pipeline_mode<synchronous>, transform_indices = @transform_3, window_bounds = array<i64: 256, 128>}, {pipeline_mode = #tpu.pipeline_mode<synchronous>, transform_indices = @transform_4, window_bounds = array<i64: 1, 128>}, {pipeline_mode = #tpu.pipeline_mode<synchronous>, transform_indices = @transform_5, window_bounds = array<i64: 2, 128>}]} {
    %c0 = arith.constant 0 : index
    %c0_0 = arith.constant 0 : index
    %0 = vector.load %arg1[%c0, %c0_0] : memref<2x640xf32, #tpu.memory_space<vmem>>, vector<2x640xf32>
    %c0_1 = arith.constant 0 : index
    %c0_2 = arith.constant 0 : index
    %1 = vector.load %arg2[%c0_1, %c0_2] : memref<640x256xf32, #tpu.memory_space<vmem>>, vector<640x256xf32>
    %cst = arith.constant dense<0.000000e+00> : vector<2x256xf32>
    %2 = tpu.matmul %0, %1, %cst {dimension_numbers = #tpu.dot_dimension_numbers<[1], [0], [0], [1], [0, 0, 1, 1], [], []>} : vector<2x640xf32>, vector<640x256xf32>, vector<2x256xf32> -> vector<2x256xf32>
    %c0_3 = arith.constant 0 : index
    %c0_4 = arith.constant 0 : index
    %3 = vector.load %arg3[%c0_3, %c0_4] : memref<1x256xf32, #tpu.memory_space<vmem>>, vector<1x256xf32>
    %4 = vector.broadcast %3 : vector<1x256xf32> to vector<2x256xf32>
    %5 = arith.addf %2, %4 : vector<2x256xf32>
    %cst_5 = arith.constant 0.000000e+00 : f32
    %6 = vector.broadcast %cst_5 : f32 to vector<2x256xf32>
    %7 = arith.maximumf %5, %6 : vector<2x256xf32>
    %c0_6 = arith.constant 0 : index
    %c0_7 = arith.constant 0 : index
    %8 = vector.load %arg4[%c0_6, %c0_7] : memref<256x128xf32, #tpu.memory_space<vmem>>, vector<256x128xf32>
    %cst_8 = arith.constant dense<0.000000e+00> : vector<2x128xf32>
    %9 = tpu.matmul %7, %8, %cst_8 {dimension_numbers = #tpu.dot_dimension_numbers<[1], [0], [0], [1], [0, 0, 1, 1], [], []>} : vector<2x256xf32>, vector<256x128xf32>, vector<2x128xf32> -> vector<2x128xf32>
    %c0_9 = arith.constant 0 : index
    %c0_10 = arith.constant 0 : index
    %10 = vector.load %arg5[%c0_9, %c0_10] : memref<1x128xf32, #tpu.memory_space<vmem>>, vector<1x128xf32>
    %11 = vector.broadcast %10 : vector<1x128xf32> to vector<2x128xf32>
    %12 = arith.addf %9, %11 : vector<2x128xf32>
    %cst_11 = arith.constant 0.000000e+00 : f32
    %13 = vector.broadcast %cst_11 : f32 to vector<2x128xf32>
    %14 = arith.subf %13, %12 : vector<2x128xf32>
    %15 = math.exp %14 : vector<2x128xf32>
    %cst_12 = arith.constant 1.000000e+00 : f32
    %16 = vector.broadcast %cst_12 : f32 to vector<2x128xf32>
    %17 = arith.addf %16, %15 : vector<2x128xf32>
    %cst_13 = arith.constant 1.000000e+00 : f32
    %18 = vector.broadcast %cst_13 : f32 to vector<2x128xf32>
    %19 = arith.divf %18, %17 : vector<2x128xf32>
    %c0_14 = arith.constant 0 : index
    %c0_15 = arith.constant 0 : index
    %20 = vector.load %arg6[%c0_14, %c0_15] : memref<2x128xf32, #tpu.memory_space<vmem>>, vector<2x128xf32>
    tpu.vector_store %arg6[%c0_14, %c0_15], %19 {strides = array<i32>} : memref<2x128xf32, #tpu.memory_space<vmem>>, vector<2x128xf32>,
    return
  }
  func.func @transform_0(%arg0: i32) -> (i32, i32) {
    %c0_i32 = arith.constant 0 : i32
    %c0_i32_0 = arith.constant 0 : i32
    %c0_i32_1 = arith.constant 0 : i32
    return %c0_i32, %c0_i32_0 : i32, i32
  }
  func.func @transform_1(%arg0: i32) -> (i32, i32) {
    %c0_i32 = arith.constant 0 : i32
    %c0_i32_0 = arith.constant 0 : i32
    %c0_i32_1 = arith.constant 0 : i32
    return %c0_i32, %c0_i32_0 : i32, i32
  }
  func.func @transform_2(%arg0: i32) -> (i32, i32) {
    %c0_i32 = arith.constant 0 : i32
    %c0_i32_0 = arith.constant 0 : i32
    %c0_i32_1 = arith.constant 0 : i32
    return %c0_i32, %c0_i32_0 : i32, i32
  }
  func.func @transform_3(%arg0: i32) -> (i32, i32) {
    %c0_i32 = arith.constant 0 : i32
    %c0_i32_0 = arith.constant 0 : i32
    %c0_i32_1 = arith.constant 0 : i32
    return %c0_i32, %c0_i32_0 : i32, i32
  }
  func.func @transform_4(%arg0: i32) -> (i32, i32) {
    %c0_i32 = arith.constant 0 : i32
    %c0_i32_0 = arith.constant 0 : i32
    %c0_i32_1 = arith.constant 0 : i32
    return %c0_i32, %c0_i32_0 : i32, i32
  }
  func.func @transform_5(%arg0: i32) -> (i32, i32) {
    %c0_i32 = arith.constant 0 : i32
    %c0_i32_0 = arith.constant 0 : i32
    %c0_i32_1 = arith.constant 0 : i32
    return %c0_i32, %c0_i32_0 : i32, i32
  }
}

</mosaic_0001>

<llo_original>
// kernel: another_disc2d_forward.7
$region0: #{another_disc2d_forward.7}
  #allocation0 [shape = 'u32[]', space=smem, size = 0x4, offset = 0x4, fixed_abs, tag = 'smem constant byte address 0x4 - core index']
  #allocation1 [shape = 'u32[144,128]{1,0:T(1,128)}', space=vmem, size = 0x12000, scoped, tag = 'internal scratch']
  %s0 = inlined_call_operand.vmem [shape: f32[2,1536,128], index: 0, kind: input, shape index: {}]
  %s1 = inlined_call_operand.vmem [shape: f32[128,128], index: 1, kind: input, shape index: {}]
  %s2 = inlined_call_operand.vmem [shape: f32[1,128], index: 2, kind: input, shape index: {}]
  %s3 = inlined_call_operand.vmem [shape: f32[2,1536,128], index: 3, kind: output, shape index: {}]
  %s4 = sld [smem:[#allocation0]]
  $region45: #{another_disc2d_forward.7} parent=0
    _
  %s6 = ssub.s32 1, %s4
  %s7 = scalar_select 0, %s6, %s4
  loop: start=0, step=1, limit=8
  $region2: #{another_disc2d_forward.7} parent=0 // loop_pre_header
    _
  $region3: #{another_disc2d_forward.7} parent=0 // loop_header
    %s9 = sphi 0, %s13
    %p10 = scmp.ge.s32.totalorder %s9, 8
    %s16 = sphi 0, %s28
    %s17 = sphi 0, %s24
    %s18 = sphi 0, %s16
    %s19 = sphi 0, %s17
    %s20 = sphi 0, %s18
    %s21 = sphi 0, %s19
    %s33 = sphi 0, %s35
    %s36 = sphi 0, %s33
    %s37 = sphi 0, %s36
    %s53 = sphi 0, %s37
    %s57 = sphi 0, %s57
    %s59 = sphi 0, %s57
    %s60 = sphi 0, %s59
    %s74 = sphi 0, %s60
    %s78 = sphi 0, %s78
    %s80 = sphi 0, %s78
    %s81 = sphi 0, %s80
    %s95 = sphi 0, %s81
    %s103 = sphi 0, %s105
    %s106 = sphi 0, %s103
    %s107 = sphi 0, %s106
    %s123 = sphi 0, %s107
  $region4: #{another_disc2d_forward.7} parent=0 // loop_header_branch
    %12 = sbr.rel (%p10) target = $region8
  $region5: #{another_disc2d_forward.7} parent=0 // loop_body
    %s14 = ssub.s32 %s9, 1
    %s15 = ssub.s32 %s9, 2
    %s22 = sadd.s32 1, %s17
    %p23 = scmp.ge.s32.totalorder %s22, 3
    %s24 = scalar_select %p23, 0, %s22
    %s25 = sadd.s32 1, %s16
    %s26 = scalar_select %p23, %s25, %s16
    %p27 = scmp.ge.s32.totalorder %s26, 2
    %s28 = scalar_select %p27, 0, %s26
    %s29 = ssub.s32 %s16, %s28
    %s30 = ssub.s32 %s17, %s24
    %s31 = sor.u32 %s29, %s30
    %p32 = scmp.eq.s32.totalorder %s31, 0
    %s34 = sadd.s32 %s33, 1
    %s35 = scalar_select %p32, %s33, %s34
    %p38 = pneg %p32
    %p39 = scmp.eq.s32.totalorder %s9, 5
    %p40 = por %p38, %p39
    %p41 = scmp.ne.s32.totalorder %s33, %s36
    %p42 = scmp.eq.s32.totalorder %s9, 0
    %p43 = por %p41, %p42
    %p44 = scmp.ne.s32.totalorder %s33, %s36
    %p45 = scmp.eq.s32.totalorder %s14, 5
    %p46 = por %p44, %p45
    %p47 = scmp.ne.s32.totalorder %s36, %s37
    %p48 = scmp.eq.s32.totalorder %s14, 0
    %p49 = por %p47, %p48
    %p50 = scmp.ne.s32.totalorder %s36, %s37
    %p51 = scmp.eq.s32.totalorder %s15, 5
    %p52 = por %p50, %p51
    %p54 = scmp.ne.s32.totalorder %s37, %s53
    %p55 = scmp.eq.s32.totalorder %s15, 0
    %p56 = por %p54, %p55
    %s58 = sadd.s32 %s57, 1
    %p61 = scmp.eq.s32.totalorder %s9, 5
    %p62 = scmp.ne.s32.totalorder %s57, %s59
    %p63 = scmp.eq.s32.totalorder %s9, 0
    %p64 = por %p62, %p63
    %p65 = scmp.ne.s32.totalorder %s57, %s59
    %p66 = scmp.eq.s32.totalorder %s14, 5
    %p67 = por %p65, %p66
    %p68 = scmp.ne.s32.totalorder %s59, %s60
    %p69 = scmp.eq.s32.totalorder %s14, 0
    %p70 = por %p68, %p69
    %p71 = scmp.ne.s32.totalorder %s59, %s60
    %p72 = scmp.eq.s32.totalorder %s15, 5
    %p73 = por %p71, %p72
    %p75 = scmp.ne.s32.totalorder %s60, %s74
    %p76 = scmp.eq.s32.totalorder %s15, 0
    %p77 = por %p75, %p76
    %s79 = sadd.s32 %s78, 1
    %p82 = scmp.eq.s32.totalorder %s9, 5
    %p83 = scmp.ne.s32.totalorder %s78, %s80
    %p84 = scmp.eq.s32.totalorder %s9, 0
    %p85 = por %p83, %p84
    %p86 = scmp.ne.s32.totalorder %s78, %s80
    %p87 = scmp.eq.s32.totalorder %s14, 5
    %p88 = por %p86, %p87
    %p89 = scmp.ne.s32.totalorder %s80, %s81
    %p90 = scmp.eq.s32.totalorder %s14, 0
    %p91 = por %p89, %p90
    %p92 = scmp.ne.s32.totalorder %s80, %s81
    %p93 = scmp.eq.s32.totalorder %s15, 5
    %p94 = por %p92, %p93
    %p96 = scmp.ne.s32.totalorder %s81, %s95
    %p97 = scmp.eq.s32.totalorder %s15, 0
    %p98 = por %p96, %p97
    %s99 = ssub.s32 %s16, %s28
    %s100 = ssub.s32 %s17, %s24
    %s101 = sor.u32 %s99, %s100
    %p102 = scmp.eq.s32.totalorder %s101, 0
    %s104 = sadd.s32 %s103, 1
    %s105 = scalar_select %p102, %s103, %s104
    %p108 = pneg %p102
    %p109 = scmp.eq.s32.totalorder %s9, 5
    %p110 = por %p108, %p109
    %p111 = scmp.ne.s32.totalorder %s103, %s106
    %p112 = scmp.eq.s32.totalorder %s9, 0
    %p113 = por %p111, %p112
    %p114 = scmp.ne.s32.totalorder %s103, %s106
    %p115 = scmp.eq.s32.totalorder %s14, 5
    %p116 = por %p114, %p115
    %p117 = scmp.ne.s32.totalorder %s106, %s107
    %p118 = scmp.eq.s32.totalorder %s14, 0
    %p119 = por %p117, %p118
    %p120 = scmp.ne.s32.totalorder %s106, %s107
    %p121 = scmp.eq.s32.totalorder %s15, 5
    %p122 = por %p120, %p121
    %p124 = scmp.ne.s32.totalorder %s107, %s123
    %p125 = scmp.eq.s32.totalorder %s15, 0
    %p126 = por %p124, %p125
    %p127 = scmp.le.s32.totalorder 1, %s9
    %p128 = scmp.lt.s32.totalorder %s9, 7
    %p129 = pnand %p127, %p128
    %p130 = pneg %p129
    // Predicated region
    $region9: #{another_disc2d_forward.7} parent=5 // pred_check
      _
    $region10: #{another_disc2d_forward.7} parent=5 // pred_check_branch
      %132 = sbr.rel (%p129) target = $region12
    $region11: #{another_disc2d_forward.7} parent=5 // pred_region
      %s133 = ssub.s32 %s9, 1
      // Predicated region
      $region13: #{another_disc2d_forward.7} parent=11 // pred_check
        %p134 = pneg %p70
      $region14: #{another_disc2d_forward.7} parent=11 // pred_check_branch
        %136 = sbr.rel (%p134) target = $region16
      $region15: #{another_disc2d_forward.7} parent=11 // pred_region
        _
      $region16: #{another_disc2d_forward.7} parent=11 // pred_fallthru
        _
      // Predicated region
      $region17: #{another_disc2d_forward.7} parent=11 // pred_check
        %p137 = pneg %p91
      $region18: #{another_disc2d_forward.7} parent=11 // pred_check_branch
        %139 = sbr.rel (%p137) target = $region20
      $region19: #{another_disc2d_forward.7} parent=11 // pred_region
        _
      $region20: #{another_disc2d_forward.7} parent=11 // pred_fallthru
        _
    $region12: #{another_disc2d_forward.7} parent=5 // pred_fallthru
      _
    %p140 = scmp.lt.s32.totalorder %s9, 6
    // Predicated region
    $region21: #{another_disc2d_forward.7} parent=5 // pred_check
      %p141 = pneg %p140
    $region22: #{another_disc2d_forward.7} parent=5 // pred_check_branch
      %143 = sbr.rel (%p141) target = $region24
    $region23: #{another_disc2d_forward.7} parent=5 // pred_region
      // Predicated region
      $region25: #{another_disc2d_forward.7} parent=23 // pred_check
        %p144 = pneg %p43
      $region26: #{another_disc2d_forward.7} parent=23 // pred_check_branch
        %146 = sbr.rel (%p144) target = $region28
      $region27: #{another_disc2d_forward.7} parent=23 // pred_region
        %s147 = smul.u32 64, %s17
        %p148 = scmp.lt.s32.totalorder %s16, 1
        %s149 = scalar_select %p148, %s16, 1
        %p150 = scmp.lt.s32.totalorder %s147, 191
        %s151 = scalar_select %p150, %s147, 191
        %s152 = smul.addr %s149, 192
        %s153 = sadd.s32 %s151, %s152
        %s154 = smul.addr %s153, 8
        %s155 = scalar_lea.vmem %s0, %s154
        %s156 = smul.u32 64, %s17
      $region28: #{another_disc2d_forward.7} parent=23 // pred_fallthru
        _
    $region24: #{another_disc2d_forward.7} parent=5 // pred_fallthru
      _
    %p157 = scmp.le.s32.totalorder 1, %s9
    %p158 = scmp.lt.s32.totalorder %s9, 7
    %p159 = pnand %p157, %p158
    %p160 = pneg %p159
    // Predicated region
    $region29: #{another_disc2d_forward.7} parent=5 // pred_check
      _
    $region30: #{another_disc2d_forward.7} parent=5 // pred_check_branch
      %162 = sbr.rel (%p159) target = $region32
    $region31: #{another_disc2d_forward.7} parent=5 // pred_region
      %s163 = ssub.s32 %s9, 1
      %s164 = smul.u32 64, %s19
      %p165 = scmp.lt.s32.totalorder %s18, 1
      %s166 = scalar_select %p165, %s18, 1
      %p167 = scmp.lt.s32.totalorder %s164, 191
      %s168 = scalar_select %p167, %s164, 191
      %s169 = smul.addr %s166, 192
      %s170 = sadd.s32 %s168, %s169
      %s171 = smul.addr %s170, 8
      %s172 = scalar_lea.vmem %s0, %s171
      %p173 = pneg %p49
      %p174 = pneg %p46
      %p175 = pneg %p70
      %p176 = pneg %p67
      %p177 = pneg %p91
      %p178 = pneg %p88
      %p179 = pneg %p119
      %p180 = pneg %p116
      %s181 = smul.u32 64, %s19
      %p182 = scmp.lt.s32.totalorder %s18, 1
      %s183 = scalar_select %p182, %s18, 1
      %p184 = scmp.lt.s32.totalorder %s181, 191
      %s185 = scalar_select %p184, %s181, 191
      %s186 = smul.addr %s183, 192
      %s187 = sadd.s32 %s185, %s186
      %s188 = smul.addr %s187, 8
      %s189 = scalar_lea.vmem %s3, %s188
      %s190 = smul.u32 64, %s19
      %p191 = scmp.lt.s32.totalorder %s18, 1
      %s192 = scalar_select %p191, %s18, 1
      %p193 = scmp.lt.s32.totalorder %s190, 191
      %s194 = scalar_select %p193, %s190, 191
      %s195 = smul.addr %s192, 192
      %s196 = sadd.s32 %s194, %s195
      %s197 = smul.addr %s196, 8
      %s198 = scalar_lea.vmem %s0, %s197
      %s199 = smul.u32 64, %s19
      %s200 = smul.u32 64, %s19
      %p201 = scmp.lt.s32.totalorder %s18, 1
      %s202 = scalar_select %p201, %s18, 1
      %p203 = scmp.lt.s32.totalorder %s200, 191
      %s204 = scalar_select %p203, %s200, 191
      %s205 = smul.addr %s202, 192
      %s206 = sadd.s32 %s204, %s205
      %s207 = smul.addr %s206, 8
      %s208 = scalar_lea.vmem %s3, %s207
      %s209 = smul.u32 64, %s19
      %v210 = vld [vmem:[%s198] sm:$0xff]
      %v211 = vld [vmem:[%s198 + $0x8] sm:$0xff]
      %v212 = vld [vmem:[%s198 + $0x10] sm:$0xff]
      %v213 = vld [vmem:[%s198 + $0x18] sm:$0xff]
      %v214 = vld [vmem:[%s198 + $0x20] sm:$0xff]
      %v215 = vld [vmem:[%s198 + $0x28] sm:$0xff]
      %v216 = vld [vmem:[%s198 + $0x30] sm:$0xff]
      %v217 = vld [vmem:[%s198 + $0x38] sm:$0xff]
      %v218 = vld [vmem:[%s198 + $0x40] sm:$0xff]
      %v219 = vld [vmem:[%s198 + $0x48] sm:$0xff]
      %v220 = vld [vmem:[%s198 + $0x50] sm:$0xff]
      %v221 = vld [vmem:[%s198 + $0x58] sm:$0xff]
      %v222 = vld [vmem:[%s198 + $0x60] sm:$0xff]
      %v223 = vld [vmem:[%s198 + $0x68] sm:$0xff]
      %v224 = vld [vmem:[%s198 + $0x70] sm:$0xff]
      %v225 = vld [vmem:[%s198 + $0x78] sm:$0xff]
      %v226 = vld [vmem:[%s198 + $0x80] sm:$0xff]
      %v227 = vld [vmem:[%s198 + $0x88] sm:$0xff]
      %v228 = vld [vmem:[%s198 + $0x90] sm:$0xff]
      %v229 = vld [vmem:[%s198 + $0x98] sm:$0xff]
      %v230 = vld [vmem:[%s198 + $0xa0] sm:$0xff]
      %v231 = vld [vmem:[%s198 + $0xa8] sm:$0xff]
      %v232 = vld [vmem:[%s198 + $0xb0] sm:$0xff]
      %v233 = vld [vmem:[%s198 + $0xb8] sm:$0xff]
      %v234 = vld [vmem:[%s198 + $0xc0] sm:$0xff]
      %v235 = vld [vmem:[%s198 + $0xc8] sm:$0xff]
      %v236 = vld [vmem:[%s198 + $0xd0] sm:$0xff]
      %v237 = vld [vmem:[%s198 + $0xd8] sm:$0xff]
      %v238 = vld [vmem:[%s198 + $0xe0] sm:$0xff]
      %v239 = vld [vmem:[%s198 + $0xe8] sm:$0xff]
      %v240 = vld [vmem:[%s198 + $0xf0] sm:$0xff]
      %v241 = vld [vmem:[%s198 + $0xf8] sm:$0xff]
      %v242 = vld [vmem:[%s198 + $0x100] sm:$0xff]
      %v243 = vld [vmem:[%s198 + $0x108] sm:$0xff]
      %v244 = vld [vmem:[%s198 + $0x110] sm:$0xff]
      %v245 = vld [vmem:[%s198 + $0x118] sm:$0xff]
      %v246 = vld [vmem:[%s198 + $0x120] sm:$0xff]
      %v247 = vld [vmem:[%s198 + $0x128] sm:$0xff]
      %v248 = vld [vmem:[%s198 + $0x130] sm:$0xff]
      %v249 = vld [vmem:[%s198 + $0x138] sm:$0xff]
      %v250 = vld [vmem:[%s198 + $0x140] sm:$0xff]
      %v251 = vld [vmem:[%s198 + $0x148] sm:$0xff]
      %v252 = vld [vmem:[%s198 + $0x150] sm:$0xff]
      %v253 = vld [vmem:[%s198 + $0x158] sm:$0xff]
      %v254 = vld [vmem:[%s198 + $0x160] sm:$0xff]
      %v255 = vld [vmem:[%s198 + $0x168] sm:$0xff]
      %v256 = vld [vmem:[%s198 + $0x170] sm:$0xff]
      %v257 = vld [vmem:[%s198 + $0x178] sm:$0xff]
      %v258 = vld [vmem:[%s198 + $0x180] sm:$0xff]
      %v259 = vld [vmem:[%s198 + $0x188] sm:$0xff]
      %v260 = vld [vmem:[%s198 + $0x190] sm:$0xff]
      %v261 = vld [vmem:[%s198 + $0x198] sm:$0xff]
      %v262 = vld [vmem:[%s198 + $0x1a0] sm:$0xff]
      %v263 = vld [vmem:[%s198 + $0x1a8] sm:$0xff]
      %v264 = vld [vmem:[%s198 + $0x1b0] sm:$0xff]
      %v265 = vld [vmem:[%s198 + $0x1b8] sm:$0xff]
      %v266 = vld [vmem:[%s198 + $0x1c0] sm:$0xff]
      %v267 = vld [vmem:[%s198 + $0x1c8] sm:$0xff]
      %v268 = vld [vmem:[%s198 + $0x1d0] sm:$0xff]
      %v269 = vld [vmem:[%s198 + $0x1d8] sm:$0xff]
      %v270 = vld [vmem:[%s198 + $0x1e0] sm:$0xff]
      %v271 = vld [vmem:[%s198 + $0x1e8] sm:$0xff]
      %v272 = vld [vmem:[%s198 + $0x1f0] sm:$0xff]
      %v273 = vld [vmem:[%s198 + $0x1f8] sm:$0xff]
      %v274 = vld [vmem:[%s1] sm:$0xff]
      %v275 = vld [vmem:[%s1 + $0x8] sm:$0xff]
      %v276 = vld [vmem:[%s1 + $0x10] sm:$0xff]
      %v277 = vld [vmem:[%s1 + $0x18] sm:$0xff]
      %v278 = vld [vmem:[%s1 + $0x20] sm:$0xff]
      %v279 = vld [vmem:[%s1 + $0x28] sm:$0xff]
      %v280 = vld [vmem:[%s1 + $0x30] sm:$0xff]
      %v281 = vld [vmem:[%s1 + $0x38] sm:$0xff]
      %v282 = vld [vmem:[%s1 + $0x40] sm:$0xff]
      %v283 = vld [vmem:[%s1 + $0x48] sm:$0xff]
      %v284 = vld [vmem:[%s1 + $0x50] sm:$0xff]
      %v285 = vld [vmem:[%s1 + $0x58] sm:$0xff]
      %v286 = vld [vmem:[%s1 + $0x60] sm:$0xff]
      %v287 = vld [vmem:[%s1 + $0x68] sm:$0xff]
      %v288 = vld [vmem:[%s1 + $0x70] sm:$0xff]
      %v289 = vld [vmem:[%s1 + $0x78] sm:$0xff]
      %v290 = vld [vmem:[%s2] sm:$0x1]
      %v292 = vlaneseq
      %v293 = vshrl.u32 %v292, 7
      %v294 = vsub.s32 0, %v293
      %v295 = vrot.slane %v290, %v294
      %297 = vmatprep.subr.mxu0 0.0
      %298 = vmatpush1.msra.mxu0 %v274
      %299 = vmatprep.subr.mxu0 0.0
      %300 = vmatpush1.msra.mxu0 %v275
      %301 = vmatprep.subr.mxu0 0.0
      %302 = vmatpush1.msra.mxu0 %v276
      %303 = vmatprep.subr.mxu0 0.0
      %304 = vmatpush1.msra.mxu0 %v277
      %305 = vmatprep.subr.mxu0 0.0
      %306 = vmatpush1.msra.mxu0 %v278
      %307 = vmatprep.subr.mxu0 0.0
      %308 = vmatpush1.msra.mxu0 %v279
      %309 = vmatprep.subr.mxu0 0.0
      %310 = vmatpush1.msra.mxu0 %v280
      %311 = vmatprep.subr.mxu0 0.0
      %312 = vmatpush1.msra.mxu0 %v281
      %313 = vmatprep.subr.mxu0 0.0
      %314 = vmatpush1.msra.mxu0 %v282
      %315 = vmatprep.subr.mxu0 0.0
      %316 = vmatpush1.msra.mxu0 %v283
      %317 = vmatprep.subr.mxu0 0.0
      %318 = vmatpush1.msra.mxu0 %v284
      %319 = vmatprep.subr.mxu0 0.0
      %320 = vmatpush1.msra.mxu0 %v285
      %321 = vmatprep.subr.mxu0 0.0
      %322 = vmatpush1.msra.mxu0 %v286
      %323 = vmatprep.subr.mxu0 0.0
      %324 = vmatpush1.msra.mxu0 %v287
      %325 = vmatprep.subr.mxu0 0.0
      %326 = vmatpush1.msra.mxu0 %v288
      %327 = vmatprep.subr.mxu0 0.0
      %328 = vmatpush1.msra.mxu0 %v289
      %329 = vmatprep.subr.mxu0 0.0
      %330 = vmatpush1.msra.mxu0 0.0
      %331 = vmatprep.subr.mxu0 0.0
      %332 = vmatpush1.msra.mxu0 0.0
      %333 = vmatprep.subr.mxu0 0.0
      %334 = vmatpush1.msra.mxu0 0.0
      %335 = vmatprep.subr.mxu0 0.0
      %336 = vmatpush1.msra.mxu0 0.0
      %337 = vmatprep.subr.mxu0 0.0
      %338 = vmatpush1.msra.mxu0 0.0
      %339 = vmatprep.subr.mxu0 0.0
      %340 = vmatpush1.msra.mxu0 0.0
      %341 = vmatprep.subr.mxu0 0.0
      %342 = vmatpush1.msra.mxu0 0.0
      %343 = vmatprep.subr.mxu0 0.0
      %344 = vmatpush1.msra.mxu0 0.0
      %345 = vmatprep.subr.mxu0 0.0
      %346 = vmatpush1.msra.mxu0 0.0
      %347 = vmatprep.subr.mxu0 0.0
      %348 = vmatpush1.msra.mxu0 0.0
      %349 = vmatprep.subr.mxu0 0.0
      %350 = vmatpush1.msra.mxu0 0.0
      %351 = vmatprep.subr.mxu0 0.0
      %352 = vmatpush1.msra.mxu0 0.0
      %353 = vmatprep.subr.mxu0 0.0
      %354 = vmatpush1.msra.mxu0 0.0
      %355 = vmatprep.subr.mxu0 0.0
      %356 = vmatpush1.msra.mxu0 0.0
      %357 = vmatprep.subr.mxu0 0.0
      %358 = vmatpush1.msra.mxu0 0.0
      %359 = vmatprep.subr.mxu0 0.0
      %360 = vmatpush1.msra.mxu0 0.0
      %361 = vmatprep.mubr.f32.mxu0 0.0
      %362 = vmatmul.mubr.f32.gmra.mrb[0].mxu0 %v210
      %v363 = vpop.f32.mrb[0].mxu0
      %v364 = vadd.f32 %v295, %v363
      %v365 = vpop.f32.mrb[0].mxu0
      %366 = vmatprep.mubr.f32.mxu0 0.0
      %367 = vmatmul.mubr.f32.gmra.mrb[0].mxu0 %v211
      %v368 = vpop.f32.mrb[0].mxu0
      %v369 = vadd.f32 %v295, %v368
      %v370 = vpop.f32.mrb[0].mxu0
      %371 = vmatprep.mubr.f32.mxu0 0.0
      %372 = vmatmul.mubr.f32.gmra.mrb[0].mxu0 %v212
      %v373 = vpop.f32.mrb[0].mxu0
      %v374 = vadd.f32 %v295, %v373
      %v375 = vpop.f32.mrb[0].mxu0
      %376 = vmatprep.mubr.f32.mxu0 0.0
      %377 = vmatmul.mubr.f32.gmra.mrb[0].mxu0 %v213
      %v378 = vpop.f32.mrb[0].mxu0
      %v379 = vadd.f32 %v295, %v378
      %v380 = vpop.f32.mrb[0].mxu0
      %381 = vmatprep.mubr.f32.mxu0 0.0
      %382 = vmatmul.mubr.f32.gmra.mrb[0].mxu0 %v214
      %v383 = vpop.f32.mrb[0].mxu0
      %v384 = vadd.f32 %v295, %v383
      %v385 = vpop.f32.mrb[0].mxu0
      %386 = vmatprep.mubr.f32.mxu0 0.0
      %387 = vmatmul.mubr.f32.gmra.mrb[0].mxu0 %v215
      %v388 = vpop.f32.mrb[0].mxu0
      %v389 = vadd.f32 %v295, %v388
      %v390 = vpop.f32.mrb[0].mxu0
      %391 = vmatprep.mubr.f32.mxu0 0.0
      %392 = vmatmul.mubr.f32.gmra.mrb[0].mxu0 %v216
      %v393 = vpop.f32.mrb[0].mxu0
      %v394 = vadd.f32 %v295, %v393
      %v395 = vpop.f32.mrb[0].mxu0
      %396 = vmatprep.mubr.f32.mxu0 0.0
      %397 = vmatmul.mubr.f32.gmra.mrb[0].mxu0 %v217
      %v398 = vpop.f32.mrb[0].mxu0
      %v399 = vadd.f32 %v295, %v398
      %v400 = vpop.f32.mrb[0].mxu0
      %401 = vmatprep.mubr.f32.mxu0 0.0
      %402 = vmatmul.mubr.f32.gmra.mrb[0].mxu0 %v218
      %v403 = vpop.f32.mrb[0].mxu0
      %v404 = vadd.f32 %v295, %v403
      %v405 = vpop.f32.mrb[0].mxu0
      %406 = vmatprep.mubr.f32.mxu0 0.0
      %407 = vmatmul.mubr.f32.gmra.mrb[0].mxu0 %v219
      %v408 = vpop.f32.mrb[0].mxu0
      %v409 = vadd.f32 %v295, %v408
      %v410 = vpop.f32.mrb[0].mxu0
      %411 = vmatprep.mubr.f32.mxu0 0.0
      %412 = vmatmul.mubr.f32.gmra.mrb[0].mxu0 %v220
      %v413 = vpop.f32.mrb[0].mxu0
      %v414 = vadd.f32 %v295, %v413
      %v415 = vpop.f32.mrb[0].mxu0
      %416 = vmatprep.mubr.f32.mxu0 0.0
      %417 = vmatmul.mubr.f32.gmra.mrb[0].mxu0 %v221
      %v418 = vpop.f32.mrb[0].mxu0
      %v419 = vadd.f32 %v295, %v418
      %v420 = vpop.f32.mrb[0].mxu0
      %421 = vmatprep.mubr.f32.mxu0 0.0
      %422 = vmatmul.mubr.f32.gmra.mrb[0].mxu0 %v222
      %v423 = vpop.f32.mrb[0].mxu0
      %v424 = vadd.f32 %v295, %v423
      %v425 = vpop.f32.mrb[0].mxu0
      %426 = vmatprep.mubr.f32.mxu0 0.0
      %427 = vmatmul.mubr.f32.gmra.mrb[0].mxu0 %v223
      %v428 = vpop.f32.mrb[0].mxu0
      %v429 = vadd.f32 %v295, %v428
      %v430 = vpop.f32.mrb[0].mxu0
      %431 = vmatprep.mubr.f32.mxu0 0.0
      %432 = vmatmul.mubr.f32.gmra.mrb[0].mxu0 %v224
      %v433 = vpop.f32.mrb[0].mxu0
      %v434 = vadd.f32 %v295, %v433
      %v435 = vpop.f32.mrb[0].mxu0
      %436 = vmatprep.mubr.f32.mxu0 0.0
      %437 = vmatmul.mubr.f32.gmra.mrb[0].mxu0 %v225
      %v438 = vpop.f32.mrb[0].mxu0
      %v439 = vadd.f32 %v295, %v438
      %v440 = vpop.f32.mrb[0].mxu0
      %441 = vmatprep.mubr.f32.mxu0 0.0
      %442 = vmatmul.mubr.f32.gmra.mrb[0].mxu0 %v226
      %v443 = vpop.f32.mrb[0].mxu0
      %v444 = vadd.f32 %v295, %v443
      %v445 = vpop.f32.mrb[0].mxu0
      %446 = vmatprep.mubr.f32.mxu0 0.0
      %447 = vmatmul.mubr.f32.gmra.mrb[0].mxu0 %v227
      %v448 = vpop.f32.mrb[0].mxu0
      %v449 = vadd.f32 %v295, %v448
      %v450 = vpop.f32.mrb[0].mxu0
      %451 = vmatprep.mubr.f32.mxu0 0.0
      %452 = vmatmul.mubr.f32.gmra.mrb[0].mxu0 %v228
      %v453 = vpop.f32.mrb[0].mxu0
      %v454 = vadd.f32 %v295, %v453
      %v455 = vpop.f32.mrb[0].mxu0
      %456 = vmatprep.mubr.f32.mxu0 0.0
      %457 = vmatmul.mubr.f32.gmra.mrb[0].mxu0 %v229
      %v458 = vpop.f32.mrb[0].mxu0
      %v459 = vadd.f32 %v295, %v458
      %v460 = vpop.f32.mrb[0].mxu0
      %461 = vmatprep.mubr.f32.mxu0 0.0
      %462 = vmatmul.mubr.f32.gmra.mrb[0].mxu0 %v230
      %v463 = vpop.f32.mrb[0].mxu0
      %v464 = vadd.f32 %v295, %v463
      %v465 = vpop.f32.mrb[0].mxu0
      %466 = vmatprep.mubr.f32.mxu0 0.0
      %467 = vmatmul.mubr.f32.gmra.mrb[0].mxu0 %v231
      %v468 = vpop.f32.mrb[0].mxu0
      %v469 = vadd.f32 %v295, %v468
      %v470 = vpop.f32.mrb[0].mxu0
      %471 = vmatprep.mubr.f32.mxu0 0.0
      %472 = vmatmul.mubr.f32.gmra.mrb[0].mxu0 %v232
      %v473 = vpop.f32.mrb[0].mxu0
      %v474 = vadd.f32 %v295, %v473
      %v475 = vpop.f32.mrb[0].mxu0
      %476 = vmatprep.mubr.f32.mxu0 0.0
      %477 = vmatmul.mubr.f32.gmra.mrb[0].mxu0 %v233
      %v478 = vpop.f32.mrb[0].mxu0
      %v479 = vadd.f32 %v295, %v478
      %v480 = vpop.f32.mrb[0].mxu0
      %481 = vmatprep.mubr.f32.mxu0 0.0
      %482 = vmatmul.mubr.f32.gmra.mrb[0].mxu0 %v234
      %v483 = vpop.f32.mrb[0].mxu0
      %v484 = vadd.f32 %v295, %v483
      %v485 = vpop.f32.mrb[0].mxu0
      %486 = vmatprep.mubr.f32.mxu0 0.0
      %487 = vmatmul.mubr.f32.gmra.mrb[0].mxu0 %v235
      %v488 = vpop.f32.mrb[0].mxu0
      %v489 = vadd.f32 %v295, %v488
      %v490 = vpop.f32.mrb[0].mxu0
      %491 = vmatprep.mubr.f32.mxu0 0.0
      %492 = vmatmul.mubr.f32.gmra.mrb[0].mxu0 %v236
      %v493 = vpop.f32.mrb[0].mxu0
      %v494 = vadd.f32 %v295, %v493
      %v495 = vpop.f32.mrb[0].mxu0
      %496 = vmatprep.mubr.f32.mxu0 0.0
      %497 = vmatmul.mubr.f32.gmra.mrb[0].mxu0 %v237
      %v498 = vpop.f32.mrb[0].mxu0
      %v499 = vadd.f32 %v295, %v498
      %v500 = vpop.f32.mrb[0].mxu0
      %501 = vmatprep.mubr.f32.mxu0 0.0
      %502 = vmatmul.mubr.f32.gmra.mrb[0].mxu0 %v238
      %v503 = vpop.f32.mrb[0].mxu0
      %v504 = vadd.f32 %v295, %v503
      %v505 = vpop.f32.mrb[0].mxu0
      %506 = vmatprep.mubr.f32.mxu0 0.0
      %507 = vmatmul.mubr.f32.gmra.mrb[0].mxu0 %v239
      %v508 = vpop.f32.mrb[0].mxu0
      %v509 = vadd.f32 %v295, %v508
      %v510 = vpop.f32.mrb[0].mxu0
      %511 = vmatprep.mubr.f32.mxu0 0.0
      %512 = vmatmul.mubr.f32.gmra.mrb[0].mxu0 %v240
      %v513 = vpop.f32.mrb[0].mxu0
      %v514 = vadd.f32 %v295, %v513
      %v515 = vpop.f32.mrb[0].mxu0
      %516 = vmatprep.mubr.f32.mxu0 0.0
      %517 = vmatmul.mubr.f32.gmra.mrb[0].mxu0 %v241
      %v518 = vpop.f32.mrb[0].mxu0
      %v519 = vadd.f32 %v295, %v518
      %v520 = vpop.f32.mrb[0].mxu0
      %521 = vmatprep.mubr.f32.mxu0 0.0
      %522 = vmatmul.mubr.f32.gmra.mrb[0].mxu0 %v242
      %v523 = vpop.f32.mrb[0].mxu0
      %v524 = vadd.f32 %v295, %v523
      %v525 = vpop.f32.mrb[0].mxu0
      %526 = vmatprep.mubr.f32.mxu0 0.0
      %527 = vmatmul.mubr.f32.gmra.mrb[0].mxu0 %v243
      %v528 = vpop.f32.mrb[0].mxu0
      %v529 = vadd.f32 %v295, %v528
      %v530 = vpop.f32.mrb[0].mxu0
      %531 = vmatprep.mubr.f32.mxu0 0.0
      %532 = vmatmul.mubr.f32.gmra.mrb[0].mxu0 %v244
      %v533 = vpop.f32.mrb[0].mxu0
      %v534 = vadd.f32 %v295, %v533
      %v535 = vpop.f32.mrb[0].mxu0
      %536 = vmatprep.mubr.f32.mxu0 0.0
      %537 = vmatmul.mubr.f32.gmra.mrb[0].mxu0 %v245
      %v538 = vpop.f32.mrb[0].mxu0
      %v539 = vadd.f32 %v295, %v538
      %v540 = vpop.f32.mrb[0].mxu0
      %541 = vmatprep.mubr.f32.mxu0 0.0
      %542 = vmatmul.mubr.f32.gmra.mrb[0].mxu0 %v246
      %v543 = vpop.f32.mrb[0].mxu0
      %v544 = vadd.f32 %v295, %v543
      %v545 = vpop.f32.mrb[0].mxu0
      %546 = vmatprep.mubr.f32.mxu0 0.0
      %547 = vmatmul.mubr.f32.gmra.mrb[0].mxu0 %v247
      %v548 = vpop.f32.mrb[0].mxu0
      %v549 = vadd.f32 %v295, %v548
      %v550 = vpop.f32.mrb[0].mxu0
      %551 = vmatprep.mubr.f32.mxu0 0.0
      %552 = vmatmul.mubr.f32.gmra.mrb[0].mxu0 %v248
      %v553 = vpop.f32.mrb[0].mxu0
      %v554 = vadd.f32 %v295, %v553
      %v555 = vpop.f32.mrb[0].mxu0
      %556 = vmatprep.mubr.f32.mxu0 0.0
      %557 = vmatmul.mubr.f32.gmra.mrb[0].mxu0 %v249
      %v558 = vpop.f32.mrb[0].mxu0
      %v559 = vadd.f32 %v295, %v558
      %v560 = vpop.f32.mrb[0].mxu0
      %561 = vmatprep.mubr.f32.mxu0 0.0
      %562 = vmatmul.mubr.f32.gmra.mrb[0].mxu0 %v250
      %v563 = vpop.f32.mrb[0].mxu0
      %v564 = vadd.f32 %v295, %v563
      %v565 = vpop.f32.mrb[0].mxu0
      %566 = vmatprep.mubr.f32.mxu0 0.0
      %567 = vmatmul.mubr.f32.gmra.mrb[0].mxu0 %v251
      %v568 = vpop.f32.mrb[0].mxu0
      %v569 = vadd.f32 %v295, %v568
      %v570 = vpop.f32.mrb[0].mxu0
      %571 = vmatprep.mubr.f32.mxu0 0.0
      %572 = vmatmul.mubr.f32.gmra.mrb[0].mxu0 %v252
      %v573 = vpop.f32.mrb[0].mxu0
      %v574 = vadd.f32 %v295, %v573
      %v575 = vpop.f32.mrb[0].mxu0
      %576 = vmatprep.mubr.f32.mxu0 0.0
      %577 = vmatmul.mubr.f32.gmra.mrb[0].mxu0 %v253
      %v578 = vpop.f32.mrb[0].mxu0
      %v579 = vadd.f32 %v295, %v578
      %v580 = vpop.f32.mrb[0].mxu0
      %581 = vmatprep.mubr.f32.mxu0 0.0
      %582 = vmatmul.mubr.f32.gmra.mrb[0].mxu0 %v254
      %v583 = vpop.f32.mrb[0].mxu0
      %v584 = vadd.f32 %v295, %v583
      %v585 = vpop.f32.mrb[0].mxu0
      %586 = vmatprep.mubr.f32.mxu0 0.0
      %587 = vmatmul.mubr.f32.gmra.mrb[0].mxu0 %v255
      %v588 = vpop.f32.mrb[0].mxu0
      %v589 = vadd.f32 %v295, %v588
      %v590 = vpop.f32.mrb[0].mxu0
      %591 = vmatprep.mubr.f32.mxu0 0.0
      %592 = vmatmul.mubr.f32.gmra.mrb[0].mxu0 %v256
      %v593 = vpop.f32.mrb[0].mxu0
      %v594 = vadd.f32 %v295, %v593
      %v595 = vpop.f32.mrb[0].mxu0
      %596 = vmatprep.mubr.f32.mxu0 0.0
      %597 = vmatmul.mubr.f32.gmra.mrb[0].mxu0 %v257
      %v598 = vpop.f32.mrb[0].mxu0
      %v599 = vadd.f32 %v295, %v598
      %v600 = vpop.f32.mrb[0].mxu0
      %601 = vmatprep.mubr.f32.mxu0 0.0
      %602 = vmatmul.mubr.f32.gmra.mrb[0].mxu0 %v258
      %v603 = vpop.f32.mrb[0].mxu0
      %v604 = vadd.f32 %v295, %v603
      %v605 = vpop.f32.mrb[0].mxu0
      %606 = vmatprep.mubr.f32.mxu0 0.0
      %607 = vmatmul.mubr.f32.gmra.mrb[0].mxu0 %v259
      %v608 = vpop.f32.mrb[0].mxu0
      %v609 = vadd.f32 %v295, %v608
      %v610 = vpop.f32.mrb[0].mxu0
      %611 = vmatprep.mubr.f32.mxu0 0.0
      %612 = vmatmul.mubr.f32.gmra.mrb[0].mxu0 %v260
      %v613 = vpop.f32.mrb[0].mxu0
      %v614 = vadd.f32 %v295, %v613
      %v615 = vpop.f32.mrb[0].mxu0
      %616 = vmatprep.mubr.f32.mxu0 0.0
      %617 = vmatmul.mubr.f32.gmra.mrb[0].mxu0 %v261
      %v618 = vpop.f32.mrb[0].mxu0
      %v619 = vadd.f32 %v295, %v618
      %v620 = vpop.f32.mrb[0].mxu0
      %621 = vmatprep.mubr.f32.mxu0 0.0
      %622 = vmatmul.mubr.f32.gmra.mrb[0].mxu0 %v262
      %v623 = vpop.f32.mrb[0].mxu0
      %v624 = vadd.f32 %v295, %v623
      %v625 = vpop.f32.mrb[0].mxu0
      %626 = vmatprep.mubr.f32.mxu0 0.0
      %627 = vmatmul.mubr.f32.gmra.mrb[0].mxu0 %v263
      %v628 = vpop.f32.mrb[0].mxu0
      %v629 = vadd.f32 %v295, %v628
      %v630 = vpop.f32.mrb[0].mxu0
      %631 = vmatprep.mubr.f32.mxu0 0.0
      %632 = vmatmul.mubr.f32.gmra.mrb[0].mxu0 %v264
      %v633 = vpop.f32.mrb[0].mxu0
      %v634 = vadd.f32 %v295, %v633
      %v635 = vpop.f32.mrb[0].mxu0
      %636 = vmatprep.mubr.f32.mxu0 0.0
      %637 = vmatmul.mubr.f32.gmra.mrb[0].mxu0 %v265
      %v638 = vpop.f32.mrb[0].mxu0
      %v639 = vadd.f32 %v295, %v638
      %v640 = vpop.f32.mrb[0].mxu0
      %641 = vmatprep.mubr.f32.mxu0 0.0
      %642 = vmatmul.mubr.f32.gmra.mrb[0].mxu0 %v266
      %v643 = vpop.f32.mrb[0].mxu0
      %v644 = vadd.f32 %v295, %v643
      %v645 = vpop.f32.mrb[0].mxu0
      %646 = vmatprep.mubr.f32.mxu0 0.0
      %647 = vmatmul.mubr.f32.gmra.mrb[0].mxu0 %v267
      %v648 = vpop.f32.mrb[0].mxu0
      %v649 = vadd.f32 %v295, %v648
      %v650 = vpop.f32.mrb[0].mxu0
      %651 = vmatprep.mubr.f32.mxu0 0.0
      %652 = vmatmul.mubr.f32.gmra.mrb[0].mxu0 %v268
      %v653 = vpop.f32.mrb[0].mxu0
      %v654 = vadd.f32 %v295, %v653
      %v655 = vpop.f32.mrb[0].mxu0
      %656 = vmatprep.mubr.f32.mxu0 0.0
      %657 = vmatmul.mubr.f32.gmra.mrb[0].mxu0 %v269
      %v658 = vpop.f32.mrb[0].mxu0
      %v659 = vadd.f32 %v295, %v658
      %v660 = vpop.f32.mrb[0].mxu0
      %661 = vmatprep.mubr.f32.mxu0 0.0
      %662 = vmatmul.mubr.f32.gmra.mrb[0].mxu0 %v270
      %v663 = vpop.f32.mrb[0].mxu0
      %v664 = vadd.f32 %v295, %v663
      %v665 = vpop.f32.mrb[0].mxu0
      %666 = vmatprep.mubr.f32.mxu0 0.0
      %667 = vmatmul.mubr.f32.gmra.mrb[0].mxu0 %v271
      %v668 = vpop.f32.mrb[0].mxu0
      %v669 = vadd.f32 %v295, %v668
      %v670 = vpop.f32.mrb[0].mxu0
      %671 = vmatprep.mubr.f32.mxu0 0.0
      %672 = vmatmul.mubr.f32.gmra.mrb[0].mxu0 %v272
      %v673 = vpop.f32.mrb[0].mxu0
      %v674 = vadd.f32 %v295, %v673
      %v675 = vpop.f32.mrb[0].mxu0
      %676 = vmatprep.mubr.f32.mxu0 0.0
      %677 = vmatmul.mubr.f32.gmra.mrb[0].mxu0 %v273
      %v678 = vpop.f32.mrb[0].mxu0
      %v679 = vadd.f32 %v295, %v678
      %v680 = vpop.f32.mrb[0].mxu0
      %681 = vdwg.mxu0
      %v682 = vmax.f32 %v364, 0.0
      %v683 = vmax.f32 %v369, 0.0
      %v684 = vmax.f32 %v374, 0.0
      %v685 = vmax.f32 %v379, 0.0
      %v686 = vmax.f32 %v384, 0.0
      %v687 = vmax.f32 %v389, 0.0
      %v688 = vmax.f32 %v394, 0.0
      %v689 = vmax.f32 %v399, 0.0
      %v690 = vmax.f32 %v404, 0.0
      %v691 = vmax.f32 %v409, 0.0
      %v692 = vmax.f32 %v414, 0.0
      %v693 = vmax.f32 %v419, 0.0
      %v694 = vmax.f32 %v424, 0.0
      %v695 = vmax.f32 %v429, 0.0
      %v696 = vmax.f32 %v434, 0.0
      %v697 = vmax.f32 %v439, 0.0
      %v698 = vmax.f32 %v444, 0.0
      %v699 = vmax.f32 %v449, 0.0
      %v700 = vmax.f32 %v454, 0.0
      %v701 = vmax.f32 %v459, 0.0
      %v702 = vmax.f32 %v464, 0.0
      %v703 = vmax.f32 %v469, 0.0
      %v704 = vmax.f32 %v474, 0.0
      %v705 = vmax.f32 %v479, 0.0
      %v706 = vmax.f32 %v484, 0.0
      %v707 = vmax.f32 %v489, 0.0
      %v708 = vmax.f32 %v494, 0.0
      %v709 = vmax.f32 %v499, 0.0
      %v710 = vmax.f32 %v504, 0.0
      %v711 = vmax.f32 %v509, 0.0
      %v712 = vmax.f32 %v514, 0.0
      %v713 = vmax.f32 %v519, 0.0
      %v714 = vmax.f32 %v524, 0.0
      %v715 = vmax.f32 %v529, 0.0
      %v716 = vmax.f32 %v534, 0.0
      %v717 = vmax.f32 %v539, 0.0
      %v718 = vmax.f32 %v544, 0.0
      %v719 = vmax.f32 %v549, 0.0
      %v720 = vmax.f32 %v554, 0.0
      %v721 = vmax.f32 %v559, 0.0
      %v722 = vmax.f32 %v564, 0.0
      %v723 = vmax.f32 %v569, 0.0
      %v724 = vmax.f32 %v574, 0.0
      %v725 = vmax.f32 %v579, 0.0
      %v726 = vmax.f32 %v584, 0.0
      %v727 = vmax.f32 %v589, 0.0
      %v728 = vmax.f32 %v594, 0.0
      %v729 = vmax.f32 %v599, 0.0
      %v730 = vmax.f32 %v604, 0.0
      %v731 = vmax.f32 %v609, 0.0
      %v732 = vmax.f32 %v614, 0.0
      %v733 = vmax.f32 %v619, 0.0
      %v734 = vmax.f32 %v624, 0.0
      %v735 = vmax.f32 %v629, 0.0
      %v736 = vmax.f32 %v634, 0.0
      %v737 = vmax.f32 %v639, 0.0
      %v738 = vmax.f32 %v644, 0.0
      %v739 = vmax.f32 %v649, 0.0
      %v740 = vmax.f32 %v654, 0.0
      %v741 = vmax.f32 %v659, 0.0
      %v742 = vmax.f32 %v664, 0.0
      %v743 = vmax.f32 %v669, 0.0
      %v744 = vmax.f32 %v674, 0.0
      %v745 = vmax.f32 %v679, 0.0
      %746 = vst [vmem:[%s208] sm:$0xff] %v682
      %747 = vst [vmem:[%s208 + $0x8] sm:$0xff] %v683
      %748 = vst [vmem:[%s208 + $0x10] sm:$0xff] %v684
      %749 = vst [vmem:[%s208 + $0x18] sm:$0xff] %v685
      %750 = vst [vmem:[%s208 + $0x20] sm:$0xff] %v686
      %751 = vst [vmem:[%s208 + $0x28] sm:$0xff] %v687
      %752 = vst [vmem:[%s208 + $0x30] sm:$0xff] %v688
      %753 = vst [vmem:[%s208 + $0x38] sm:$0xff] %v689
      %754 = vst [vmem:[%s208 + $0x40] sm:$0xff] %v690
      %755 = vst [vmem:[%s208 + $0x48] sm:$0xff] %v691
      %756 = vst [vmem:[%s208 + $0x50] sm:$0xff] %v692
      %757 = vst [vmem:[%s208 + $0x58] sm:$0xff] %v693
      %758 = vst [vmem:[%s208 + $0x60] sm:$0xff] %v694
      %759 = vst [vmem:[%s208 + $0x68] sm:$0xff] %v695
      %760 = vst [vmem:[%s208 + $0x70] sm:$0xff] %v696
      %761 = vst [vmem:[%s208 + $0x78] sm:$0xff] %v697
      %762 = vst [vmem:[%s208 + $0x80] sm:$0xff] %v698
      %763 = vst [vmem:[%s208 + $0x88] sm:$0xff] %v699
      %764 = vst [vmem:[%s208 + $0x90] sm:$0xff] %v700
      %765 = vst [vmem:[%s208 + $0x98] sm:$0xff] %v701
      %766 = vst [vmem:[%s208 + $0xa0] sm:$0xff] %v702
      %767 = vst [vmem:[%s208 + $0xa8] sm:$0xff] %v703
      %768 = vst [vmem:[%s208 + $0xb0] sm:$0xff] %v704
      %769 = vst [vmem:[%s208 + $0xb8] sm:$0xff] %v705
      %770 = vst [vmem:[%s208 + $0xc0] sm:$0xff] %v706
      %771 = vst [vmem:[%s208 + $0xc8] sm:$0xff] %v707
      %772 = vst [vmem:[%s208 + $0xd0] sm:$0xff] %v708
      %773 = vst [vmem:[%s208 + $0xd8] sm:$0xff] %v709
      %774 = vst [vmem:[%s208 + $0xe0] sm:$0xff] %v710
      %775 = vst [vmem:[%s208 + $0xe8] sm:$0xff] %v711
      %776 = vst [vmem:[%s208 + $0xf0] sm:$0xff] %v712
      %777 = vst [vmem:[%s208 + $0xf8] sm:$0xff] %v713
      %778 = vst [vmem:[%s208 + $0x100] sm:$0xff] %v714
      %779 = vst [vmem:[%s208 + $0x108] sm:$0xff] %v715
      %780 = vst [vmem:[%s208 + $0x110] sm:$0xff] %v716
      %781 = vst [vmem:[%s208 + $0x118] sm:$0xff] %v717
      %782 = vst [vmem:[%s208 + $0x120] sm:$0xff] %v718
      %783 = vst [vmem:[%s208 + $0x128] sm:$0xff] %v719
      %784 = vst [vmem:[%s208 + $0x130] sm:$0xff] %v720
      %785 = vst [vmem:[%s208 + $0x138] sm:$0xff] %v721
      %786 = vst [vmem:[%s208 + $0x140] sm:$0xff] %v722
      %787 = vst [vmem:[%s208 + $0x148] sm:$0xff] %v723
      %788 = vst [vmem:[%s208 + $0x150] sm:$0xff] %v724
      %789 = vst [vmem:[%s208 + $0x158] sm:$0xff] %v725
      %790 = vst [vmem:[%s208 + $0x160] sm:$0xff] %v726
      %791 = vst [vmem:[%s208 + $0x168] sm:$0xff] %v727
      %792 = vst [vmem:[%s208 + $0x170] sm:$0xff] %v728
      %793 = vst [vmem:[%s208 + $0x178] sm:$0xff] %v729
      %794 = vst [vmem:[%s208 + $0x180] sm:$0xff] %v730
      %795 = vst [vmem:[%s208 + $0x188] sm:$0xff] %v731
      %796 = vst [vmem:[%s208 + $0x190] sm:$0xff] %v732
      %797 = vst [vmem:[%s208 + $0x198] sm:$0xff] %v733
      %798 = vst [vmem:[%s208 + $0x1a0] sm:$0xff] %v734
      %799 = vst [vmem:[%s208 + $0x1a8] sm:$0xff] %v735
      %800 = vst [vmem:[%s208 + $0x1b0] sm:$0xff] %v736
      %801 = vst [vmem:[%s208 + $0x1b8] sm:$0xff] %v737
      %802 = vst [vmem:[%s208 + $0x1c0] sm:$0xff] %v738
      %803 = vst [vmem:[%s208 + $0x1c8] sm:$0xff] %v739
      %804 = vst [vmem:[%s208 + $0x1d0] sm:$0xff] %v740
      %805 = vst [vmem:[%s208 + $0x1d8] sm:$0xff] %v741
      %806 = vst [vmem:[%s208 + $0x1e0] sm:$0xff] %v742
      %807 = vst [vmem:[%s208 + $0x1e8] sm:$0xff] %v743
      %808 = vst [vmem:[%s208 + $0x1f0] sm:$0xff] %v744
      %809 = vst [vmem:[%s208 + $0x1f8] sm:$0xff] %v745
      %s810 = smul.u32 64, %s19
      %p811 = scmp.lt.s32.totalorder %s18, 1
      %s812 = scalar_select %p811, %s18, 1
      %p813 = scmp.lt.s32.totalorder %s810, 191
      %s814 = scalar_select %p813, %s810, 191
      %s815 = smul.addr %s812, 192
      %s816 = sadd.s32 %s814, %s815
      %s817 = smul.addr %s816, 8
      %s818 = scalar_lea.vmem %s3, %s817
      // Predicated region
      $region33: #{another_disc2d_forward.7} parent=31 // pred_check
        %p819 = pneg %p116
      $region34: #{another_disc2d_forward.7} parent=31 // pred_check_branch
        %821 = sbr.rel (%p819) target = $region36
      $region35: #{another_disc2d_forward.7} parent=31 // pred_region
        %s822 = smul.u32 64, %s19
      $region36: #{another_disc2d_forward.7} parent=31 // pred_fallthru
        _
    $region32: #{another_disc2d_forward.7} parent=5 // pred_fallthru
      _
    %p823 = scmp.le.s32.totalorder 2, %s9
    // Predicated region
    $region37: #{another_disc2d_forward.7} parent=5 // pred_check
      %p824 = pneg %p823
    $region38: #{another_disc2d_forward.7} parent=5 // pred_check_branch
      %826 = sbr.rel (%p824) target = $region40
    $region39: #{another_disc2d_forward.7} parent=5 // pred_region
      %s827 = ssub.s32 %s9, 2
      // Predicated region
      $region41: #{another_disc2d_forward.7} parent=39 // pred_check
        %p828 = pneg %p122
      $region42: #{another_disc2d_forward.7} parent=39 // pred_check_branch
        %830 = sbr.rel (%p828) target = $region44
      $region43: #{another_disc2d_forward.7} parent=39 // pred_region
        %s831 = smul.u32 64, %s21
        %p832 = scmp.lt.s32.totalorder %s20, 1
        %s833 = scalar_select %p832, %s20, 1
        %p834 = scmp.lt.s32.totalorder %s831, 191
        %s835 = scalar_select %p834, %s831, 191
        %s836 = smul.addr %s833, 192
        %s837 = sadd.s32 %s835, %s836
        %s838 = smul.addr %s837, 8
        %s839 = scalar_lea.vmem %s3, %s838
      $region44: #{another_disc2d_forward.7} parent=39 // pred_fallthru
        _
    $region40: #{another_disc2d_forward.7} parent=5 // pred_fallthru
      _
  $region6: #{another_disc2d_forward.7} parent=0 // loop_footer
    %s13 = sadd.s32 1, %s9
  $region7: #{another_disc2d_forward.7} parent=0 // loop_footer_branch
    %8 = sbr.rel target = $region3
  $region8: #{another_disc2d_forward.7} parent=0 // loop_exit
    _

// kernel: another_disc2d_forward.8
$region0: #{another_disc2d_forward.8}
  #allocation0 [shape = 'u32[]', space=smem, size = 0x4, offset = 0x4, fixed_abs, tag = 'smem constant byte address 0x4 - core index']
  #allocation1 [shape = 'u32[144,128]{1,0:T(1,128)}', space=vmem, size = 0x12000, scoped, tag = 'internal scratch']
  %s0 = inlined_call_operand.vmem [shape: f32[2,15,19,128], index: 0, kind: input, shape index: {}]
  %s1 = inlined_call_operand.vmem [shape: f32[2,15,19,128], index: 1, kind: input, shape index: {}]
  %s2 = inlined_call_operand.vmem [shape: f32[2,15,19,128], index: 2, kind: input, shape index: {}]
  %s3 = inlined_call_operand.vmem [shape: f32[2,15,19,128], index: 3, kind: input, shape index: {}]
  %s4 = inlined_call_operand.vmem [shape: f32[2,15,19,128], index: 4, kind: output, shape index: {}]
  %s5 = sld [smem:[#allocation0]]
  $region49: #{another_disc2d_forward.8} parent=0
    _
  %s7 = ssub.s32 1, %s5
  %s8 = scalar_select 0, %s7, %s5
  loop: start=0, step=1, limit=4
  $region2: #{another_disc2d_forward.8} parent=0 // loop_pre_header
    _
  $region3: #{another_disc2d_forward.8} parent=0 // loop_header
    %s10 = sphi 0, %s14
    %p11 = scmp.ge.s32.totalorder %s10, 4
    %s20 = sphi 0, %s22
    %s23 = sphi 0, %s20
    %s24 = sphi 0, %s23
    %s40 = sphi 0, %s24
    %s46 = sphi 0, %s48
    %s49 = sphi 0, %s46
    %s50 = sphi 0, %s49
    %s66 = sphi 0, %s50
    %s72 = sphi 0, %s74
    %s75 = sphi 0, %s72
    %s76 = sphi 0, %s75
    %s92 = sphi 0, %s76
    %s98 = sphi 0, %s100
    %s101 = sphi 0, %s98
    %s102 = sphi 0, %s101
    %s118 = sphi 0, %s102
    %s124 = sphi 0, %s126
    %s127 = sphi 0, %s124
    %s128 = sphi 0, %s127
    %s144 = sphi 0, %s128
  $region4: #{another_disc2d_forward.8} parent=0 // loop_header_branch
    %13 = sbr.rel (%p11) target = $region8
  $region5: #{another_disc2d_forward.8} parent=0 // loop_body
    %s15 = ssub.s32 %s10, 1
    %s16 = ssub.s32 %s10, 2
    %s17 = sadd.s32 %s10, 1
    %s18 = ssub.s32 %s10, %s17
    %p19 = scmp.eq.s32.totalorder %s18, 0
    %s21 = sadd.s32 %s20, 1
    %s22 = scalar_select %p19, %s20, %s21
    %p25 = pneg %p19
    %p26 = scmp.eq.s32.totalorder %s10, 1
    %p27 = por %p25, %p26
    %p28 = scmp.ne.s32.totalorder %s20, %s23
    %p29 = scmp.eq.s32.totalorder %s10, 0
    %p30 = por %p28, %p29
    %p31 = scmp.ne.s32.totalorder %s20, %s23
    %p32 = scmp.eq.s32.totalorder %s15, 1
    %p33 = por %p31, %p32
    %p34 = scmp.ne.s32.totalorder %s23, %s24
    %p35 = scmp.eq.s32.totalorder %s15, 0
    %p36 = por %p34, %p35
    %p37 = scmp.ne.s32.totalorder %s23, %s24
    %p38 = scmp.eq.s32.totalorder %s16, 1
    %p39 = por %p37, %p38
    %p41 = scmp.ne.s32.totalorder %s24, %s40
    %p42 = scmp.eq.s32.totalorder %s16, 0
    %p43 = por %p41, %p42
    %s44 = ssub.s32 %s10, %s17
    %p45 = scmp.eq.s32.totalorder %s44, 0
    %s47 = sadd.s32 %s46, 1
    %s48 = scalar_select %p45, %s46, %s47
    %p51 = pneg %p45
    %p52 = scmp.eq.s32.totalorder %s10, 1
    %p53 = por %p51, %p52
    %p54 = scmp.ne.s32.totalorder %s46, %s49
    %p55 = scmp.eq.s32.totalorder %s10, 0
    %p56 = por %p54, %p55
    %p57 = scmp.ne.s32.totalorder %s46, %s49
    %p58 = scmp.eq.s32.totalorder %s15, 1
    %p59 = por %p57, %p58
    %p60 = scmp.ne.s32.totalorder %s49, %s50
    %p61 = scmp.eq.s32.totalorder %s15, 0
    %p62 = por %p60, %p61
    %p63 = scmp.ne.s32.totalorder %s49, %s50
    %p64 = scmp.eq.s32.totalorder %s16, 1
    %p65 = por %p63, %p64
    %p67 = scmp.ne.s32.totalorder %s50, %s66
    %p68 = scmp.eq.s32.totalorder %s16, 0
    %p69 = por %p67, %p68
    %s70 = ssub.s32 %s10, %s17
    %p71 = scmp.eq.s32.totalorder %s70, 0
    %s73 = sadd.s32 %s72, 1
    %s74 = scalar_select %p71, %s72, %s73
    %p77 = pneg %p71
    %p78 = scmp.eq.s32.totalorder %s10, 1
    %p79 = por %p77, %p78
    %p80 = scmp.ne.s32.totalorder %s72, %s75
    %p81 = scmp.eq.s32.totalorder %s10, 0
    %p82 = por %p80, %p81
    %p83 = scmp.ne.s32.totalorder %s72, %s75
    %p84 = scmp.eq.s32.totalorder %s15, 1
    %p85 = por %p83, %p84
    %p86 = scmp.ne.s32.totalorder %s75, %s76
    %p87 = scmp.eq.s32.totalorder %s15, 0
    %p88 = por %p86, %p87
    %p89 = scmp.ne.s32.totalorder %s75, %s76
    %p90 = scmp.eq.s32.totalorder %s16, 1
    %p91 = por %p89, %p90
    %p93 = scmp.ne.s32.totalorder %s76, %s92
    %p94 = scmp.eq.s32.totalorder %s16, 0
    %p95 = por %p93, %p94
    %s96 = ssub.s32 %s10, %s17
    %p97 = scmp.eq.s32.totalorder %s96, 0
    %s99 = sadd.s32 %s98, 1
    %s100 = scalar_select %p97, %s98, %s99
    %p103 = pneg %p97
    %p104 = scmp.eq.s32.totalorder %s10, 1
    %p105 = por %p103, %p104
    %p106 = scmp.ne.s32.totalorder %s98, %s101
    %p107 = scmp.eq.s32.totalorder %s10, 0
    %p108 = por %p106, %p107
    %p109 = scmp.ne.s32.totalorder %s98, %s101
    %p110 = scmp.eq.s32.totalorder %s15, 1
    %p111 = por %p109, %p110
    %p112 = scmp.ne.s32.totalorder %s101, %s102
    %p113 = scmp.eq.s32.totalorder %s15, 0
    %p114 = por %p112, %p113
    %p115 = scmp.ne.s32.totalorder %s101, %s102
    %p116 = scmp.eq.s32.totalorder %s16, 1
    %p117 = por %p115, %p116
    %p119 = scmp.ne.s32.totalorder %s102, %s118
    %p120 = scmp.eq.s32.totalorder %s16, 0
    %p121 = por %p119, %p120
    %s122 = ssub.s32 %s10, %s17
    %p123 = scmp.eq.s32.totalorder %s122, 0
    %s125 = sadd.s32 %s124, 1
    %s126 = scalar_select %p123, %s124, %s125
    %p129 = pneg %p123
    %p130 = scmp.eq.s32.totalorder %s10, 1
    %p131 = por %p129, %p130
    %p132 = scmp.ne.s32.totalorder %s124, %s127
    %p133 = scmp.eq.s32.totalorder %s10, 0
    %p134 = por %p132, %p133
    %p135 = scmp.ne.s32.totalorder %s124, %s127
    %p136 = scmp.eq.s32.totalorder %s15, 1
    %p137 = por %p135, %p136
    %p138 = scmp.ne.s32.totalorder %s127, %s128
    %p139 = scmp.eq.s32.totalorder %s15, 0
    %p140 = por %p138, %p139
    %p141 = scmp.ne.s32.totalorder %s127, %s128
    %p142 = scmp.eq.s32.totalorder %s16, 1
    %p143 = por %p141, %p142
    %p145 = scmp.ne.s32.totalorder %s128, %s144
    %p146 = scmp.eq.s32.totalorder %s16, 0
    %p147 = por %p145, %p146
    %p148 = scmp.le.s32.totalorder 1, %s10
    %p149 = scmp.lt.s32.totalorder %s10, 3
    %p150 = pnand %p148, %p149
    %p151 = pneg %p150
    // Predicated region
    $region9: #{another_disc2d_forward.8} parent=5 // pred_check
      _
    $region10: #{another_disc2d_forward.8} parent=5 // pred_check_branch
      %153 = sbr.rel (%p150) target = $region12
    $region11: #{another_disc2d_forward.8} parent=5 // pred_region
      %s154 = ssub.s32 %s10, 1
    $region12: #{another_disc2d_forward.8} parent=5 // pred_fallthru
      _
    %p155 = scmp.lt.s32.totalorder %s10, 2
    // Predicated region
    $region13: #{another_disc2d_forward.8} parent=5 // pred_check
      %p156 = pneg %p155
    $region14: #{another_disc2d_forward.8} parent=5 // pred_check_branch
      %158 = sbr.rel (%p156) target = $region16
    $region15: #{another_disc2d_forward.8} parent=5 // pred_region
      // Predicated region
      $region17: #{another_disc2d_forward.8} parent=15 // pred_check
        %p159 = pneg %p30
      $region18: #{another_disc2d_forward.8} parent=15 // pred_check_branch
        %161 = sbr.rel (%p159) target = $region20
      $region19: #{another_disc2d_forward.8} parent=15 // pred_region
        %p162 = scmp.lt.s32.totalorder %s10, 1
        %s163 = scalar_select %p162, %s10, 1
        %s164 = smul.addr %s163, 45
        %s165 = smul.addr %s164, 8
        %s166 = scalar_lea.vmem %s0, %s165
      $region20: #{another_disc2d_forward.8} parent=15 // pred_fallthru
        _
      // Predicated region
      $region21: #{another_disc2d_forward.8} parent=15 // pred_check
        %p167 = pneg %p56
      $region22: #{another_disc2d_forward.8} parent=15 // pred_check_branch
        %169 = sbr.rel (%p167) target = $region24
      $region23: #{another_disc2d_forward.8} parent=15 // pred_region
        %p170 = scmp.lt.s32.totalorder %s10, 1
        %s171 = scalar_select %p170, %s10, 1
        %s172 = smul.addr %s171, 45
        %s173 = smul.addr %s172, 8
        %s174 = scalar_lea.vmem %s1, %s173
      $region24: #{another_disc2d_forward.8} parent=15 // pred_fallthru
        _
      // Predicated region
      $region25: #{another_disc2d_forward.8} parent=15 // pred_check
        %p175 = pneg %p82
      $region26: #{another_disc2d_forward.8} parent=15 // pred_check_branch
        %177 = sbr.rel (%p175) target = $region28
      $region27: #{another_disc2d_forward.8} parent=15 // pred_region
        %p178 = scmp.lt.s32.totalorder %s10, 1
        %s179 = scalar_select %p178, %s10, 1
        %s180 = smul.addr %s179, 45
        %s181 = smul.addr %s180, 8
        %s182 = scalar_lea.vmem %s2, %s181
      $region28: #{another_disc2d_forward.8} parent=15 // pred_fallthru
        _
      // Predicated region
      $region29: #{another_disc2d_forward.8} parent=15 // pred_check
        %p183 = pneg %p108
      $region30: #{another_disc2d_forward.8} parent=15 // pred_check_branch
        %185 = sbr.rel (%p183) target = $region32
      $region31: #{another_disc2d_forward.8} parent=15 // pred_region
        %p186 = scmp.lt.s32.totalorder %s10, 1
        %s187 = scalar_select %p186, %s10, 1
        %s188 = smul.addr %s187, 45
        %s189 = smul.addr %s188, 8
        %s190 = scalar_lea.vmem %s3, %s189
      $region32: #{another_disc2d_forward.8} parent=15 // pred_fallthru
        _
    $region16: #{another_disc2d_forward.8} parent=5 // pred_fallthru
      _
    %p191 = scmp.le.s32.totalorder 1, %s10
    %p192 = scmp.lt.s32.totalorder %s10, 3
    %p193 = pnand %p191, %p192
    %p194 = pneg %p193
    // Predicated region
    $region33: #{another_disc2d_forward.8} parent=5 // pred_check
      _
    $region34: #{another_disc2d_forward.8} parent=5 // pred_check_branch
      %196 = sbr.rel (%p193) target = $region36
    $region35: #{another_disc2d_forward.8} parent=5 // pred_region
      %s197 = ssub.s32 %s10, 1
      %p198 = scmp.lt.s32.totalorder %s15, 1
      %s199 = scalar_select %p198, %s15, 1
      %s200 = smul.addr %s199, 45
      %s201 = smul.addr %s200, 8
      %s202 = scalar_lea.vmem %s0, %s201
      %p203 = pneg %p36
      %p204 = pneg %p33
      %p205 = scmp.lt.s32.totalorder %s15, 1
      %s206 = scalar_select %p205, %s15, 1
      %s207 = smul.addr %s206, 45
      %s208 = smul.addr %s207, 8
      %s209 = scalar_lea.vmem %s1, %s208
      %p210 = pneg %p62
      %p211 = pneg %p59
      %p212 = scmp.lt.s32.totalorder %s15, 1
      %s213 = scalar_select %p212, %s15, 1
      %s214 = smul.addr %s213, 45
      %s215 = smul.addr %s214, 8
      %s216 = scalar_lea.vmem %s2, %s215
      %p217 = pneg %p88
      %p218 = pneg %p85
      %p219 = scmp.lt.s32.totalorder %s15, 1
      %s220 = scalar_select %p219, %s15, 1
      %s221 = smul.addr %s220, 45
      %s222 = smul.addr %s221, 8
      %s223 = scalar_lea.vmem %s3, %s222
      %p224 = pneg %p114
      %p225 = pneg %p111
      %p226 = pneg %p140
      %p227 = pneg %p137
      %p228 = scmp.lt.s32.totalorder %s15, 1
      %s229 = scalar_select %p228, %s15, 1
      %s230 = smul.addr %s229, 45
      %s231 = smul.addr %s230, 8
      %s232 = scalar_lea.vmem %s4, %s231
      %p233 = scmp.lt.s32.totalorder %s15, 1
      %s234 = scalar_select %p233, %s15, 1
      %s235 = smul.addr %s234, 45
      %s236 = smul.addr %s235, 8
      %s237 = scalar_lea.vmem %s0, %s236
      %p238 = scmp.lt.s32.totalorder %s15, 1
      %s239 = scalar_select %p238, %s15, 1
      %s240 = smul.addr %s239, 45
      %s241 = smul.addr %s240, 8
      %s242 = scalar_lea.vmem %s1, %s241
      %p243 = scmp.lt.s32.totalorder %s15, 1
      %s244 = scalar_select %p243, %s15, 1
      %s245 = smul.addr %s244, 45
      %s246 = smul.addr %s245, 8
      %s247 = scalar_lea.vmem %s2, %s246
      %p248 = scmp.lt.s32.totalorder %s15, 1
      %s249 = scalar_select %p248, %s15, 1
      %s250 = smul.addr %s249, 45
      %s251 = smul.addr %s250, 8
      %s252 = scalar_lea.vmem %s3, %s251
      %p253 = scmp.lt.s32.totalorder %s15, 1
      %s254 = scalar_select %p253, %s15, 1
      %s255 = smul.addr %s254, 45
      %s256 = smul.addr %s255, 8
      %s257 = scalar_lea.vmem %s4, %s256
      %v258 = vld [vmem:[%s237] sm:$0xff]
      %v259 = vld [vmem:[%s237 + $0x8] sm:$0xff]
      %v260 = vld [vmem:[%s237 + $0x10] sm:$0x7]
      %v261 = vld [vmem:[%s237 + $0x18] sm:$0xff]
      %v262 = vld [vmem:[%s237 + $0x20] sm:$0xff]
      %v263 = vld [vmem:[%s237 + $0x28] sm:$0x7]
      %v264 = vld [vmem:[%s237 + $0x30] sm:$0xff]
      %v265 = vld [vmem:[%s237 + $0x38] sm:$0xff]
      %v266 = vld [vmem:[%s237 + $0x40] sm:$0x7]
      %v267 = vld [vmem:[%s237 + $0x48] sm:$0xff]
      %v268 = vld [vmem:[%s237 + $0x50] sm:$0xff]
      %v269 = vld [vmem:[%s237 + $0x58] sm:$0x7]
      %v270 = vld [vmem:[%s237 + $0x60] sm:$0xff]
      %v271 = vld [vmem:[%s237 + $0x68] sm:$0xff]
      %v272 = vld [vmem:[%s237 + $0x70] sm:$0x7]
      %v273 = vld [vmem:[%s237 + $0x78] sm:$0xff]
      %v274 = vld [vmem:[%s237 + $0x80] sm:$0xff]
      %v275 = vld [vmem:[%s237 + $0x88] sm:$0x7]
      %v276 = vld [vmem:[%s237 + $0x90] sm:$0xff]
      %v277 = vld [vmem:[%s237 + $0x98] sm:$0xff]
      %v278 = vld [vmem:[%s237 + $0xa0] sm:$0x7]
      %v279 = vld [vmem:[%s237 + $0xa8] sm:$0xff]
      %v280 = vld [vmem:[%s237 + $0xb0] sm:$0xff]
      %v281 = vld [vmem:[%s237 + $0xb8] sm:$0x7]
      %v282 = vld [vmem:[%s237 + $0xc0] sm:$0xff]
      %v283 = vld [vmem:[%s237 + $0xc8] sm:$0xff]
      %v284 = vld [vmem:[%s237 + $0xd0] sm:$0x7]
      %v285 = vld [vmem:[%s237 + $0xd8] sm:$0xff]
      %v286 = vld [vmem:[%s237 + $0xe0] sm:$0xff]
      %v287 = vld [vmem:[%s237 + $0xe8] sm:$0x7]
      %v288 = vld [vmem:[%s237 + $0xf0] sm:$0xff]
      %v289 = vld [vmem:[%s237 + $0xf8] sm:$0xff]
      %v290 = vld [vmem:[%s237 + $0x100] sm:$0x7]
      %v291 = vld [vmem:[%s237 + $0x108] sm:$0xff]
      %v292 = vld [vmem:[%s237 + $0x110] sm:$0xff]
      %v293 = vld [vmem:[%s237 + $0x118] sm:$0x7]
      %v294 = vld [vmem:[%s237 + $0x120] sm:$0xff]
      %v295 = vld [vmem:[%s237 + $0x128] sm:$0xff]
      %v296 = vld [vmem:[%s237 + $0x130] sm:$0x7]
      %v297 = vld [vmem:[%s237 + $0x138] sm:$0xff]
      %v298 = vld [vmem:[%s237 + $0x140] sm:$0xff]
      %v299 = vld [vmem:[%s237 + $0x148] sm:$0x7]
      %v300 = vld [vmem:[%s237 + $0x150] sm:$0xff]
      %v301 = vld [vmem:[%s237 + $0x158] sm:$0xff]
      %v302 = vld [vmem:[%s237 + $0x160] sm:$0x7]
      %v303 = vld [vmem:[%s242] sm:$0xff]
      %v304 = vld [vmem:[%s242 + $0x8] sm:$0xff]
      %v305 = vld [vmem:[%s242 + $0x10] sm:$0x7]
      %v306 = vld [vmem:[%s242 + $0x18] sm:$0xff]
      %v307 = vld [vmem:[%s242 + $0x20] sm:$0xff]
      %v308 = vld [vmem:[%s242 + $0x28] sm:$0x7]
      %v309 = vld [vmem:[%s242 + $0x30] sm:$0xff]
      %v310 = vld [vmem:[%s242 + $0x38] sm:$0xff]
      %v311 = vld [vmem:[%s242 + $0x40] sm:$0x7]
      %v312 = vld [vmem:[%s242 + $0x48] sm:$0xff]
      %v313 = vld [vmem:[%s242 + $0x50] sm:$0xff]
      %v314 = vld [vmem:[%s242 + $0x58] sm:$0x7]
      %v315 = vld [vmem:[%s242 + $0x60] sm:$0xff]
      %v316 = vld [vmem:[%s242 + $0x68] sm:$0xff]
      %v317 = vld [vmem:[%s242 + $0x70] sm:$0x7]
      %v318 = vld [vmem:[%s242 + $0x78] sm:$0xff]
      %v319 = vld [vmem:[%s242 + $0x80] sm:$0xff]
      %v320 = vld [vmem:[%s242 + $0x88] sm:$0x7]
      %v321 = vld [vmem:[%s242 + $0x90] sm:$0xff]
      %v322 = vld [vmem:[%s242 + $0x98] sm:$0xff]
      %v323 = vld [vmem:[%s242 + $0xa0] sm:$0x7]
      %v324 = vld [vmem:[%s242 + $0xa8] sm:$0xff]
      %v325 = vld [vmem:[%s242 + $0xb0] sm:$0xff]
      %v326 = vld [vmem:[%s242 + $0xb8] sm:$0x7]
      %v327 = vld [vmem:[%s242 + $0xc0] sm:$0xff]
      %v328 = vld [vmem:[%s242 + $0xc8] sm:$0xff]
      %v329 = vld [vmem:[%s242 + $0xd0] sm:$0x7]
      %v330 = vld [vmem:[%s242 + $0xd8] sm:$0xff]
      %v331 = vld [vmem:[%s242 + $0xe0] sm:$0xff]
      %v332 = vld [vmem:[%s242 + $0xe8] sm:$0x7]
      %v333 = vld [vmem:[%s242 + $0xf0] sm:$0xff]
      %v334 = vld [vmem:[%s242 + $0xf8] sm:$0xff]
      %v335 = vld [vmem:[%s242 + $0x100] sm:$0x7]
      %v336 = vld [vmem:[%s242 + $0x108] sm:$0xff]
      %v337 = vld [vmem:[%s242 + $0x110] sm:$0xff]
      %v338 = vld [vmem:[%s242 + $0x118] sm:$0x7]
      %v339 = vld [vmem:[%s242 + $0x120] sm:$0xff]
      %v340 = vld [vmem:[%s242 + $0x128] sm:$0xff]
      %v341 = vld [vmem:[%s242 + $0x130] sm:$0x7]
      %v342 = vld [vmem:[%s242 + $0x138] sm:$0xff]
      %v343 = vld [vmem:[%s242 + $0x140] sm:$0xff]
      %v344 = vld [vmem:[%s242 + $0x148] sm:$0x7]
      %v345 = vld [vmem:[%s242 + $0x150] sm:$0xff]
      %v346 = vld [vmem:[%s242 + $0x158] sm:$0xff]
      %v347 = vld [vmem:[%s242 + $0x160] sm:$0x7]
      %v348 = vmax.f32 %v258, %v303
      %v349 = vmax.f32 %v259, %v304
      %v350 = vmax.f32 %v260, %v305
      %v351 = vmax.f32 %v261, %v306
      %v352 = vmax.f32 %v262, %v307
      %v353 = vmax.f32 %v263, %v308
      %v354 = vmax.f32 %v264, %v309
      %v355 = vmax.f32 %v265, %v310
      %v356 = vmax.f32 %v266, %v311
      %v357 = vmax.f32 %v267, %v312
      %v358 = vmax.f32 %v268, %v313
      %v359 = vmax.f32 %v269, %v314
      %v360 = vmax.f32 %v270, %v315
      %v361 = vmax.f32 %v271, %v316
      %v362 = vmax.f32 %v272, %v317
      %v363 = vmax.f32 %v273, %v318
      %v364 = vmax.f32 %v274, %v319
      %v365 = vmax.f32 %v275, %v320
      %v366 = vmax.f32 %v276, %v321
      %v367 = vmax.f32 %v277, %v322
      %v368 = vmax.f32 %v278, %v323
      %v369 = vmax.f32 %v279, %v324
      %v370 = vmax.f32 %v280, %v325
      %v371 = vmax.f32 %v281, %v326
      %v372 = vmax.f32 %v282, %v327
      %v373 = vmax.f32 %v283, %v328
      %v374 = vmax.f32 %v284, %v329
      %v375 = vmax.f32 %v285, %v330
      %v376 = vmax.f32 %v286, %v331
      %v377 = vmax.f32 %v287, %v332
      %v378 = vmax.f32 %v288, %v333
      %v379 = vmax.f32 %v289, %v334
      %v380 = vmax.f32 %v290, %v335
      %v381 = vmax.f32 %v291, %v336
      %v382 = vmax.f32 %v292, %v337
      %v383 = vmax.f32 %v293, %v338
      %v384 = vmax.f32 %v294, %v339
      %v385 = vmax.f32 %v295, %v340
      %v386 = vmax.f32 %v296, %v341
      %v387 = vmax.f32 %v297, %v342
      %v388 = vmax.f32 %v298, %v343
      %v389 = vmax.f32 %v299, %v344
      %v390 = vmax.f32 %v300, %v345
      %v391 = vmax.f32 %v301, %v346
      %v392 = vmax.f32 %v302, %v347
      %v393 = vld [vmem:[%s247] sm:$0xff]
      %v394 = vld [vmem:[%s247 + $0x8] sm:$0xff]
      %v395 = vld [vmem:[%s247 + $0x10] sm:$0x7]
      %v396 = vld [vmem:[%s247 + $0x18] sm:$0xff]
      %v397 = vld [vmem:[%s247 + $0x20] sm:$0xff]
      %v398 = vld [vmem:[%s247 + $0x28] sm:$0x7]
      %v399 = vld [vmem:[%s247 + $0x30] sm:$0xff]
      %v400 = vld [vmem:[%s247 + $0x38] sm:$0xff]
      %v401 = vld [vmem:[%s247 + $0x40] sm:$0x7]
      %v402 = vld [vmem:[%s247 + $0x48] sm:$0xff]
      %v403 = vld [vmem:[%s247 + $0x50] sm:$0xff]
      %v404 = vld [vmem:[%s247 + $0x58] sm:$0x7]
      %v405 = vld [vmem:[%s247 + $0x60] sm:$0xff]
      %v406 = vld [vmem:[%s247 + $0x68] sm:$0xff]
      %v407 = vld [vmem:[%s247 + $0x70] sm:$0x7]
      %v408 = vld [vmem:[%s247 + $0x78] sm:$0xff]
      %v409 = vld [vmem:[%s247 + $0x80] sm:$0xff]
      %v410 = vld [vmem:[%s247 + $0x88] sm:$0x7]
      %v411 = vld [vmem:[%s247 + $0x90] sm:$0xff]
      %v412 = vld [vmem:[%s247 + $0x98] sm:$0xff]
      %v413 = vld [vmem:[%s247 + $0xa0] sm:$0x7]
      %v414 = vld [vmem:[%s247 + $0xa8] sm:$0xff]
      %v415 = vld [vmem:[%s247 + $0xb0] sm:$0xff]
      %v416 = vld [vmem:[%s247 + $0xb8] sm:$0x7]
      %v417 = vld [vmem:[%s247 + $0xc0] sm:$0xff]
      %v418 = vld [vmem:[%s247 + $0xc8] sm:$0xff]
      %v419 = vld [vmem:[%s247 + $0xd0] sm:$0x7]
      %v420 = vld [vmem:[%s247 + $0xd8] sm:$0xff]
      %v421 = vld [vmem:[%s247 + $0xe0] sm:$0xff]
      %v422 = vld [vmem:[%s247 + $0xe8] sm:$0x7]
      %v423 = vld [vmem:[%s247 + $0xf0] sm:$0xff]
      %v424 = vld [vmem:[%s247 + $0xf8] sm:$0xff]
      %v425 = vld [vmem:[%s247 + $0x100] sm:$0x7]
      %v426 = vld [vmem:[%s247 + $0x108] sm:$0xff]
      %v427 = vld [vmem:[%s247 + $0x110] sm:$0xff]
      %v428 = vld [vmem:[%s247 + $0x118] sm:$0x7]
      %v429 = vld [vmem:[%s247 + $0x120] sm:$0xff]
      %v430 = vld [vmem:[%s247 + $0x128] sm:$0xff]
      %v431 = vld [vmem:[%s247 + $0x130] sm:$0x7]
      %v432 = vld [vmem:[%s247 + $0x138] sm:$0xff]
      %v433 = vld [vmem:[%s247 + $0x140] sm:$0xff]
      %v434 = vld [vmem:[%s247 + $0x148] sm:$0x7]
      %v435 = vld [vmem:[%s247 + $0x150] sm:$0xff]
      %v436 = vld [vmem:[%s247 + $0x158] sm:$0xff]
      %v437 = vld [vmem:[%s247 + $0x160] sm:$0x7]
      %v438 = vld [vmem:[%s252] sm:$0xff]
      %v439 = vld [vmem:[%s252 + $0x8] sm:$0xff]
      %v440 = vld [vmem:[%s252 + $0x10] sm:$0x7]
      %v441 = vld [vmem:[%s252 + $0x18] sm:$0xff]
      %v442 = vld [vmem:[%s252 + $0x20] sm:$0xff]
      %v443 = vld [vmem:[%s252 + $0x28] sm:$0x7]
      %v444 = vld [vmem:[%s252 + $0x30] sm:$0xff]
      %v445 = vld [vmem:[%s252 + $0x38] sm:$0xff]
      %v446 = vld [vmem:[%s252 + $0x40] sm:$0x7]
      %v447 = vld [vmem:[%s252 + $0x48] sm:$0xff]
      %v448 = vld [vmem:[%s252 + $0x50] sm:$0xff]
      %v449 = vld [vmem:[%s252 + $0x58] sm:$0x7]
      %v450 = vld [vmem:[%s252 + $0x60] sm:$0xff]
      %v451 = vld [vmem:[%s252 + $0x68] sm:$0xff]
      %v452 = vld [vmem:[%s252 + $0x70] sm:$0x7]
      %v453 = vld [vmem:[%s252 + $0x78] sm:$0xff]
      %v454 = vld [vmem:[%s252 + $0x80] sm:$0xff]
      %v455 = vld [vmem:[%s252 + $0x88] sm:$0x7]
      %v456 = vld [vmem:[%s252 + $0x90] sm:$0xff]
      %v457 = vld [vmem:[%s252 + $0x98] sm:$0xff]
      %v458 = vld [vmem:[%s252 + $0xa0] sm:$0x7]
      %v459 = vld [vmem:[%s252 + $0xa8] sm:$0xff]
      %v460 = vld [vmem:[%s252 + $0xb0] sm:$0xff]
      %v461 = vld [vmem:[%s252 + $0xb8] sm:$0x7]
      %v462 = vld [vmem:[%s252 + $0xc0] sm:$0xff]
      %v463 = vld [vmem:[%s252 + $0xc8] sm:$0xff]
      %v464 = vld [vmem:[%s252 + $0xd0] sm:$0x7]
      %v465 = vld [vmem:[%s252 + $0xd8] sm:$0xff]
      %v466 = vld [vmem:[%s252 + $0xe0] sm:$0xff]
      %v467 = vld [vmem:[%s252 + $0xe8] sm:$0x7]
      %v468 = vld [vmem:[%s252 + $0xf0] sm:$0xff]
      %v469 = vld [vmem:[%s252 + $0xf8] sm:$0xff]
      %v470 = vld [vmem:[%s252 + $0x100] sm:$0x7]
      %v471 = vld [vmem:[%s252 + $0x108] sm:$0xff]
      %v472 = vld [vmem:[%s252 + $0x110] sm:$0xff]
      %v473 = vld [vmem:[%s252 + $0x118] sm:$0x7]
      %v474 = vld [vmem:[%s252 + $0x120] sm:$0xff]
      %v475 = vld [vmem:[%s252 + $0x128] sm:$0xff]
      %v476 = vld [vmem:[%s252 + $0x130] sm:$0x7]
      %v477 = vld [vmem:[%s252 + $0x138] sm:$0xff]
      %v478 = vld [vmem:[%s252 + $0x140] sm:$0xff]
      %v479 = vld [vmem:[%s252 + $0x148] sm:$0x7]
      %v480 = vld [vmem:[%s252 + $0x150] sm:$0xff]
      %v481 = vld [vmem:[%s252 + $0x158] sm:$0xff]
      %v482 = vld [vmem:[%s252 + $0x160] sm:$0x7]
      %v483 = vmax.f32 %v393, %v438
      %v484 = vmax.f32 %v394, %v439
      %v485 = vmax.f32 %v395, %v440
      %v486 = vmax.f32 %v396, %v441
      %v487 = vmax.f32 %v397, %v442
      %v488 = vmax.f32 %v398, %v443
      %v489 = vmax.f32 %v399, %v444
      %v490 = vmax.f32 %v400, %v445
      %v491 = vmax.f32 %v401, %v446
      %v492 = vmax.f32 %v402, %v447
      %v493 = vmax.f32 %v403, %v448
      %v494 = vmax.f32 %v404, %v449
      %v495 = vmax.f32 %v405, %v450
      %v496 = vmax.f32 %v406, %v451
      %v497 = vmax.f32 %v407, %v452
      %v498 = vmax.f32 %v408, %v453
      %v499 = vmax.f32 %v409, %v454
      %v500 = vmax.f32 %v410, %v455
      %v501 = vmax.f32 %v411, %v456
      %v502 = vmax.f32 %v412, %v457
      %v503 = vmax.f32 %v413, %v458
      %v504 = vmax.f32 %v414, %v459
      %v505 = vmax.f32 %v415, %v460
      %v506 = vmax.f32 %v416, %v461
      %v507 = vmax.f32 %v417, %v462
      %v508 = vmax.f32 %v418, %v463
      %v509 = vmax.f32 %v419, %v464
      %v510 = vmax.f32 %v420, %v465
      %v511 = vmax.f32 %v421, %v466
      %v512 = vmax.f32 %v422, %v467
      %v513 = vmax.f32 %v423, %v468
      %v514 = vmax.f32 %v424, %v469
      %v515 = vmax.f32 %v425, %v470
      %v516 = vmax.f32 %v426, %v471
      %v517 = vmax.f32 %v427, %v472
      %v518 = vmax.f32 %v428, %v473
      %v519 = vmax.f32 %v429, %v474
      %v520 = vmax.f32 %v430, %v475
      %v521 = vmax.f32 %v431, %v476
      %v522 = vmax.f32 %v432, %v477
      %v523 = vmax.f32 %v433, %v478
      %v524 = vmax.f32 %v434, %v479
      %v525 = vmax.f32 %v435, %v480
      %v526 = vmax.f32 %v436, %v481
      %v527 = vmax.f32 %v437, %v482
      %v528 = vmax.f32 %v348, %v483
      %v529 = vmax.f32 %v349, %v484
      %v530 = vmax.f32 %v350, %v485
      %v531 = vmax.f32 %v351, %v486
      %v532 = vmax.f32 %v352, %v487
      %v533 = vmax.f32 %v353, %v488
      %v534 = vmax.f32 %v354, %v489
      %v535 = vmax.f32 %v355, %v490
      %v536 = vmax.f32 %v356, %v491
      %v537 = vmax.f32 %v357, %v492
      %v538 = vmax.f32 %v358, %v493
      %v539 = vmax.f32 %v359, %v494
      %v540 = vmax.f32 %v360, %v495
      %v541 = vmax.f32 %v361, %v496
      %v542 = vmax.f32 %v362, %v497
      %v543 = vmax.f32 %v363, %v498
      %v544 = vmax.f32 %v364, %v499
      %v545 = vmax.f32 %v365, %v500
      %v546 = vmax.f32 %v366, %v501
      %v547 = vmax.f32 %v367, %v502
      %v548 = vmax.f32 %v368, %v503
      %v549 = vmax.f32 %v369, %v504
      %v550 = vmax.f32 %v370, %v505
      %v551 = vmax.f32 %v371, %v506
      %v552 = vmax.f32 %v372, %v507
      %v553 = vmax.f32 %v373, %v508
      %v554 = vmax.f32 %v374, %v509
      %v555 = vmax.f32 %v375, %v510
      %v556 = vmax.f32 %v376, %v511
      %v557 = vmax.f32 %v377, %v512
      %v558 = vmax.f32 %v378, %v513
      %v559 = vmax.f32 %v379, %v514
      %v560 = vmax.f32 %v380, %v515
      %v561 = vmax.f32 %v381, %v516
      %v562 = vmax.f32 %v382, %v517
      %v563 = vmax.f32 %v383, %v518
      %v564 = vmax.f32 %v384, %v519
      %v565 = vmax.f32 %v385, %v520
      %v566 = vmax.f32 %v386, %v521
      %v567 = vmax.f32 %v387, %v522
      %v568 = vmax.f32 %v388, %v523
      %v569 = vmax.f32 %v389, %v524
      %v570 = vmax.f32 %v390, %v525
      %v571 = vmax.f32 %v391, %v526
      %v572 = vmax.f32 %v392, %v527
      %573 = vst [vmem:[%s257] sm:$0xff] %v528
      %574 = vst [vmem:[%s257 + $0x8] sm:$0xff] %v529
      %575 = vst [vmem:[%s257 + $0x10] sm:$0x7] %v530
      %576 = vst [vmem:[%s257 + $0x18] sm:$0xff] %v531
      %577 = vst [vmem:[%s257 + $0x20] sm:$0xff] %v532
      %578 = vst [vmem:[%s257 + $0x28] sm:$0x7] %v533
      %579 = vst [vmem:[%s257 + $0x30] sm:$0xff] %v534
      %580 = vst [vmem:[%s257 + $0x38] sm:$0xff] %v535
      %581 = vst [vmem:[%s257 + $0x40] sm:$0x7] %v536
      %582 = vst [vmem:[%s257 + $0x48] sm:$0xff] %v537
      %583 = vst [vmem:[%s257 + $0x50] sm:$0xff] %v538
      %584 = vst [vmem:[%s257 + $0x58] sm:$0x7] %v539
      %585 = vst [vmem:[%s257 + $0x60] sm:$0xff] %v540
      %586 = vst [vmem:[%s257 + $0x68] sm:$0xff] %v541
      %587 = vst [vmem:[%s257 + $0x70] sm:$0x7] %v542
      %588 = vst [vmem:[%s257 + $0x78] sm:$0xff] %v543
      %589 = vst [vmem:[%s257 + $0x80] sm:$0xff] %v544
      %590 = vst [vmem:[%s257 + $0x88] sm:$0x7] %v545
      %591 = vst [vmem:[%s257 + $0x90] sm:$0xff] %v546
      %592 = vst [vmem:[%s257 + $0x98] sm:$0xff] %v547
      %593 = vst [vmem:[%s257 + $0xa0] sm:$0x7] %v548
      %594 = vst [vmem:[%s257 + $0xa8] sm:$0xff] %v549
      %595 = vst [vmem:[%s257 + $0xb0] sm:$0xff] %v550
      %596 = vst [vmem:[%s257 + $0xb8] sm:$0x7] %v551
      %597 = vst [vmem:[%s257 + $0xc0] sm:$0xff] %v552
      %598 = vst [vmem:[%s257 + $0xc8] sm:$0xff] %v553
      %599 = vst [vmem:[%s257 + $0xd0] sm:$0x7] %v554
      %600 = vst [vmem:[%s257 + $0xd8] sm:$0xff] %v555
      %601 = vst [vmem:[%s257 + $0xe0] sm:$0xff] %v556
      %602 = vst [vmem:[%s257 + $0xe8] sm:$0x7] %v557
      %603 = vst [vmem:[%s257 + $0xf0] sm:$0xff] %v558
      %604 = vst [vmem:[%s257 + $0xf8] sm:$0xff] %v559
      %605 = vst [vmem:[%s257 + $0x100] sm:$0x7] %v560
      %606 = vst [vmem:[%s257 + $0x108] sm:$0xff] %v561
      %607 = vst [vmem:[%s257 + $0x110] sm:$0xff] %v562
      %608 = vst [vmem:[%s257 + $0x118] sm:$0x7] %v563
      %609 = vst [vmem:[%s257 + $0x120] sm:$0xff] %v564
      %610 = vst [vmem:[%s257 + $0x128] sm:$0xff] %v565
      %611 = vst [vmem:[%s257 + $0x130] sm:$0x7] %v566
      %612 = vst [vmem:[%s257 + $0x138] sm:$0xff] %v567
      %613 = vst [vmem:[%s257 + $0x140] sm:$0xff] %v568
      %614 = vst [vmem:[%s257 + $0x148] sm:$0x7] %v569
      %615 = vst [vmem:[%s257 + $0x150] sm:$0xff] %v570
      %616 = vst [vmem:[%s257 + $0x158] sm:$0xff] %v571
      %617 = vst [vmem:[%s257 + $0x160] sm:$0x7] %v572
      %p618 = scmp.lt.s32.totalorder %s15, 1
      %s619 = scalar_select %p618, %s15, 1
      %s620 = smul.addr %s619, 45
      %s621 = smul.addr %s620, 8
      %s622 = scalar_lea.vmem %s4, %s621
      // Predicated region
      $region37: #{another_disc2d_forward.8} parent=35 // pred_check
        %p623 = pneg %p137
      $region38: #{another_disc2d_forward.8} parent=35 // pred_check_branch
        %625 = sbr.rel (%p623) target = $region40
      $region39: #{another_disc2d_forward.8} parent=35 // pred_region
        _
      $region40: #{another_disc2d_forward.8} parent=35 // pred_fallthru
        _
    $region36: #{another_disc2d_forward.8} parent=5 // pred_fallthru
      _
    %p626 = scmp.le.s32.totalorder 2, %s10
    // Predicated region
    $region41: #{another_disc2d_forward.8} parent=5 // pred_check
      %p627 = pneg %p626
    $region42: #{another_disc2d_forward.8} parent=5 // pred_check_branch
      %629 = sbr.rel (%p627) target = $region44
    $region43: #{another_disc2d_forward.8} parent=5 // pred_region
      %s630 = ssub.s32 %s10, 2
      // Predicated region
      $region45: #{another_disc2d_forward.8} parent=43 // pred_check
        %p631 = pneg %p143
      $region46: #{another_disc2d_forward.8} parent=43 // pred_check_branch
        %633 = sbr.rel (%p631) target = $region48
      $region47: #{another_disc2d_forward.8} parent=43 // pred_region
        %p634 = scmp.lt.s32.totalorder %s16, 1
        %s635 = scalar_select %p634, %s16, 1
        %s636 = smul.addr %s635, 45
        %s637 = smul.addr %s636, 8
        %s638 = scalar_lea.vmem %s4, %s637
      $region48: #{another_disc2d_forward.8} parent=43 // pred_fallthru
        _
    $region44: #{another_disc2d_forward.8} parent=5 // pred_fallthru
      _
  $region6: #{another_disc2d_forward.8} parent=0 // loop_footer
    %s14 = sadd.s32 1, %s10
  $region7: #{another_disc2d_forward.8} parent=0 // loop_footer_branch
    %9 = sbr.rel target = $region3
  $region8: #{another_disc2d_forward.8} parent=0 // loop_exit
    _

// kernel: another_disc2d_forward.9
$region0: #{another_disc2d_forward.9}
  #allocation0 [shape = 'u32[]', space=smem, size = 0x4, offset = 0x4, fixed_abs, tag = 'smem constant byte address 0x4 - core index']
  #allocation1 [shape = 'u32[144,128]{1,0:T(1,128)}', space=vmem, size = 0x12000, scoped, tag = 'internal scratch']
  %s0 = inlined_call_operand.vmem [shape: f32[2,224,256], index: 0, kind: input, shape index: {}]
  %s1 = inlined_call_operand.vmem [shape: f32[256,128], index: 1, kind: input, shape index: {}]
  %s2 = inlined_call_operand.vmem [shape: f32[1,128], index: 2, kind: input, shape index: {}]
  %s3 = inlined_call_operand.vmem [shape: f32[2,224,128], index: 3, kind: output, shape index: {}]
  %s4 = sld [smem:[#allocation0]]
  $region45: #{another_disc2d_forward.9} parent=0
    _
  %s6 = ssub.s32 1, %s4
  %s7 = scalar_select 0, %s6, %s4
  loop: start=0, step=1, limit=4
  $region2: #{another_disc2d_forward.9} parent=0 // loop_pre_header
    _
  $region3: #{another_disc2d_forward.9} parent=0 // loop_header
    %s9 = sphi 0, %s13
    %p10 = scmp.ge.s32.totalorder %s9, 4
    %s16 = sphi 0, %s28
    %s17 = sphi 0, %s24
    %s18 = sphi 0, %s16
    %s19 = sphi 0, %s17
    %s20 = sphi 0, %s18
    %s21 = sphi 0, %s19
    %s33 = sphi 0, %s35
    %s36 = sphi 0, %s33
    %s37 = sphi 0, %s36
    %s53 = sphi 0, %s37
    %s57 = sphi 0, %s57
    %s59 = sphi 0, %s57
    %s60 = sphi 0, %s59
    %s74 = sphi 0, %s60
    %s78 = sphi 0, %s78
    %s80 = sphi 0, %s78
    %s81 = sphi 0, %s80
    %s95 = sphi 0, %s81
    %s103 = sphi 0, %s105
    %s106 = sphi 0, %s103
    %s107 = sphi 0, %s106
    %s123 = sphi 0, %s107
  $region4: #{another_disc2d_forward.9} parent=0 // loop_header_branch
    %12 = sbr.rel (%p10) target = $region8
  $region5: #{another_disc2d_forward.9} parent=0 // loop_body
    %s14 = ssub.s32 %s9, 1
    %s15 = ssub.s32 %s9, 2
    %s22 = sadd.s32 1, %s17
    %p23 = scmp.ge.s32.totalorder %s22, 1
    %s24 = scalar_select %p23, 0, %s22
    %s25 = sadd.s32 1, %s16
    %s26 = scalar_select %p23, %s25, %s16
    %p27 = scmp.ge.s32.totalorder %s26, 2
    %s28 = scalar_select %p27, 0, %s26
    %s29 = ssub.s32 %s16, %s28
    %s30 = ssub.s32 %s17, %s24
    %s31 = sor.u32 %s29, %s30
    %p32 = scmp.eq.s32.totalorder %s31, 0
    %s34 = sadd.s32 %s33, 1
    %s35 = scalar_select %p32, %s33, %s34
    %p38 = pneg %p32
    %p39 = scmp.eq.s32.totalorder %s9, 1
    %p40 = por %p38, %p39
    %p41 = scmp.ne.s32.totalorder %s33, %s36
    %p42 = scmp.eq.s32.totalorder %s9, 0
    %p43 = por %p41, %p42
    %p44 = scmp.ne.s32.totalorder %s33, %s36
    %p45 = scmp.eq.s32.totalorder %s14, 1
    %p46 = por %p44, %p45
    %p47 = scmp.ne.s32.totalorder %s36, %s37
    %p48 = scmp.eq.s32.totalorder %s14, 0
    %p49 = por %p47, %p48
    %p50 = scmp.ne.s32.totalorder %s36, %s37
    %p51 = scmp.eq.s32.totalorder %s15, 1
    %p52 = por %p50, %p51
    %p54 = scmp.ne.s32.totalorder %s37, %s53
    %p55 = scmp.eq.s32.totalorder %s15, 0
    %p56 = por %p54, %p55
    %s58 = sadd.s32 %s57, 1
    %p61 = scmp.eq.s32.totalorder %s9, 1
    %p62 = scmp.ne.s32.totalorder %s57, %s59
    %p63 = scmp.eq.s32.totalorder %s9, 0
    %p64 = por %p62, %p63
    %p65 = scmp.ne.s32.totalorder %s57, %s59
    %p66 = scmp.eq.s32.totalorder %s14, 1
    %p67 = por %p65, %p66
    %p68 = scmp.ne.s32.totalorder %s59, %s60
    %p69 = scmp.eq.s32.totalorder %s14, 0
    %p70 = por %p68, %p69
    %p71 = scmp.ne.s32.totalorder %s59, %s60
    %p72 = scmp.eq.s32.totalorder %s15, 1
    %p73 = por %p71, %p72
    %p75 = scmp.ne.s32.totalorder %s60, %s74
    %p76 = scmp.eq.s32.totalorder %s15, 0
    %p77 = por %p75, %p76
    %s79 = sadd.s32 %s78, 1
    %p82 = scmp.eq.s32.totalorder %s9, 1
    %p83 = scmp.ne.s32.totalorder %s78, %s80
    %p84 = scmp.eq.s32.totalorder %s9, 0
    %p85 = por %p83, %p84
    %p86 = scmp.ne.s32.totalorder %s78, %s80
    %p87 = scmp.eq.s32.totalorder %s14, 1
    %p88 = por %p86, %p87
    %p89 = scmp.ne.s32.totalorder %s80, %s81
    %p90 = scmp.eq.s32.totalorder %s14, 0
    %p91 = por %p89, %p90
    %p92 = scmp.ne.s32.totalorder %s80, %s81
    %p93 = scmp.eq.s32.totalorder %s15, 1
    %p94 = por %p92, %p93
    %p96 = scmp.ne.s32.totalorder %s81, %s95
    %p97 = scmp.eq.s32.totalorder %s15, 0
    %p98 = por %p96, %p97
    %s99 = ssub.s32 %s16, %s28
    %s100 = ssub.s32 %s17, %s24
    %s101 = sor.u32 %s99, %s100
    %p102 = scmp.eq.s32.totalorder %s101, 0
    %s104 = sadd.s32 %s103, 1
    %s105 = scalar_select %p102, %s103, %s104
    %p108 = pneg %p102
    %p109 = scmp.eq.s32.totalorder %s9, 1
    %p110 = por %p108, %p109
    %p111 = scmp.ne.s32.totalorder %s103, %s106
    %p112 = scmp.eq.s32.totalorder %s9, 0
    %p113 = por %p111, %p112
    %p114 = scmp.ne.s32.totalorder %s103, %s106
    %p115 = scmp.eq.s32.totalorder %s14, 1
    %p116 = por %p114, %p115
    %p117 = scmp.ne.s32.totalorder %s106, %s107
    %p118 = scmp.eq.s32.totalorder %s14, 0
    %p119 = por %p117, %p118
    %p120 = scmp.ne.s32.totalorder %s106, %s107
    %p121 = scmp.eq.s32.totalorder %s15, 1
    %p122 = por %p120, %p121
    %p124 = scmp.ne.s32.totalorder %s107, %s123
    %p125 = scmp.eq.s32.totalorder %s15, 0
    %p126 = por %p124, %p125
    %p127 = scmp.le.s32.totalorder 1, %s9
    %p128 = scmp.lt.s32.totalorder %s9, 3
    %p129 = pnand %p127, %p128
    %p130 = pneg %p129
    // Predicated region
    $region9: #{another_disc2d_forward.9} parent=5 // pred_check
      _
    $region10: #{another_disc2d_forward.9} parent=5 // pred_check_branch
      %132 = sbr.rel (%p129) target = $region12
    $region11: #{another_disc2d_forward.9} parent=5 // pred_region
      %s133 = ssub.s32 %s9, 1
      // Predicated region
      $region13: #{another_disc2d_forward.9} parent=11 // pred_check
        %p134 = pneg %p70
      $region14: #{another_disc2d_forward.9} parent=11 // pred_check_branch
        %136 = sbr.rel (%p134) target = $region16
      $region15: #{another_disc2d_forward.9} parent=11 // pred_region
        _
      $region16: #{another_disc2d_forward.9} parent=11 // pred_fallthru
        _
      // Predicated region
      $region17: #{another_disc2d_forward.9} parent=11 // pred_check
        %p137 = pneg %p91
      $region18: #{another_disc2d_forward.9} parent=11 // pred_check_branch
        %139 = sbr.rel (%p137) target = $region20
      $region19: #{another_disc2d_forward.9} parent=11 // pred_region
        _
      $region20: #{another_disc2d_forward.9} parent=11 // pred_fallthru
        _
    $region12: #{another_disc2d_forward.9} parent=5 // pred_fallthru
      _
    %p140 = scmp.lt.s32.totalorder %s9, 2
    // Predicated region
    $region21: #{another_disc2d_forward.9} parent=5 // pred_check
      %p141 = pneg %p140
    $region22: #{another_disc2d_forward.9} parent=5 // pred_check_branch
      %143 = sbr.rel (%p141) target = $region24
    $region23: #{another_disc2d_forward.9} parent=5 // pred_region
      // Predicated region
      $region25: #{another_disc2d_forward.9} parent=23 // pred_check
        %p144 = pneg %p43
      $region26: #{another_disc2d_forward.9} parent=23 // pred_check_branch
        %146 = sbr.rel (%p144) target = $region28
      $region27: #{another_disc2d_forward.9} parent=23 // pred_region
        %s147 = smul.u32 28, %s17
        %p148 = scmp.lt.s32.totalorder %s16, 1
        %s149 = scalar_select %p148, %s16, 1
        %p150 = scmp.lt.s32.totalorder %s147, 27
        %s151 = scalar_select %p150, %s147, 27
        %s152 = smul.addr %s151, 2
        %s153 = smul.addr %s149, 56
        %s154 = sadd.s32 %s152, %s153
        %s155 = smul.addr %s154, 8
        %s156 = scalar_lea.vmem %s0, %s155
        %s157 = smul.u32 28, %s17
      $region28: #{another_disc2d_forward.9} parent=23 // pred_fallthru
        _
    $region24: #{another_disc2d_forward.9} parent=5 // pred_fallthru
      _
    %p158 = scmp.le.s32.totalorder 1, %s9
    %p159 = scmp.lt.s32.totalorder %s9, 3
    %p160 = pnand %p158, %p159
    %p161 = pneg %p160
    // Predicated region
    $region29: #{another_disc2d_forward.9} parent=5 // pred_check
      _
    $region30: #{another_disc2d_forward.9} parent=5 // pred_check_branch
      %163 = sbr.rel (%p160) target = $region32
    $region31: #{another_disc2d_forward.9} parent=5 // pred_region
      %s164 = ssub.s32 %s9, 1
      %s165 = smul.u32 28, %s19
      %p166 = scmp.lt.s32.totalorder %s18, 1
      %s167 = scalar_select %p166, %s18, 1
      %p168 = scmp.lt.s32.totalorder %s165, 27
      %s169 = scalar_select %p168, %s165, 27
      %s170 = smul.addr %s169, 2
      %s171 = smul.addr %s167, 56
      %s172 = sadd.s32 %s170, %s171
      %s173 = smul.addr %s172, 8
      %s174 = scalar_lea.vmem %s0, %s173
      %p175 = pneg %p49
      %p176 = pneg %p46
      %p177 = pneg %p70
      %p178 = pneg %p67
      %p179 = pneg %p91
      %p180 = pneg %p88
      %p181 = pneg %p119
      %p182 = pneg %p116
      %s183 = smul.u32 28, %s19
      %p184 = scmp.lt.s32.totalorder %s18, 1
      %s185 = scalar_select %p184, %s18, 1
      %p186 = scmp.lt.s32.totalorder %s183, 27
      %s187 = scalar_select %p186, %s183, 27
      %s188 = smul.addr %s185, 28
      %s189 = sadd.s32 %s187, %s188
      %s190 = smul.addr %s189, 8
      %s191 = scalar_lea.vmem %s3, %s190
      %s192 = smul.u32 28, %s19
      %p193 = scmp.lt.s32.totalorder %s18, 1
      %s194 = scalar_select %p193, %s18, 1
      %p195 = scmp.lt.s32.totalorder %s192, 27
      %s196 = scalar_select %p195, %s192, 27
      %s197 = smul.addr %s196, 2
      %s198 = smul.addr %s194, 56
      %s199 = sadd.s32 %s197, %s198
      %s200 = smul.addr %s199, 8
      %s201 = scalar_lea.vmem %s0, %s200
      %s202 = smul.u32 28, %s19
      %s203 = smul.u32 28, %s19
      %p204 = scmp.lt.s32.totalorder %s18, 1
      %s205 = scalar_select %p204, %s18, 1
      %p206 = scmp.lt.s32.totalorder %s203, 27
      %s207 = scalar_select %p206, %s203, 27
      %s208 = smul.addr %s205, 28
      %s209 = sadd.s32 %s207, %s208
      %s210 = smul.addr %s209, 8
      %s211 = scalar_lea.vmem %s3, %s210
      %s212 = smul.u32 28, %s19
      %v213 = vld [vmem:[%s201] sm:$0xff]
      %v214 = vld [vmem:[%s201 + $0x8] sm:$0xff]
      %v215 = vld [vmem:[%s201 + $0x10] sm:$0xff]
      %v216 = vld [vmem:[%s201 + $0x18] sm:$0xff]
      %v217 = vld [vmem:[%s201 + $0x20] sm:$0xff]
      %v218 = vld [vmem:[%s201 + $0x28] sm:$0xff]
      %v219 = vld [vmem:[%s201 + $0x30] sm:$0xff]
      %v220 = vld [vmem:[%s201 + $0x38] sm:$0xff]
      %v221 = vld [vmem:[%s201 + $0x40] sm:$0xff]
      %v222 = vld [vmem:[%s201 + $0x48] sm:$0xff]
      %v223 = vld [vmem:[%s201 + $0x50] sm:$0xff]
      %v224 = vld [vmem:[%s201 + $0x58] sm:$0xff]
      %v225 = vld [vmem:[%s201 + $0x60] sm:$0xff]
      %v226 = vld [vmem:[%s201 + $0x68] sm:$0xff]
      %v227 = vld [vmem:[%s201 + $0x70] sm:$0xff]
      %v228 = vld [vmem:[%s201 + $0x78] sm:$0xff]
      %v229 = vld [vmem:[%s201 + $0x80] sm:$0xff]
      %v230 = vld [vmem:[%s201 + $0x88] sm:$0xff]
      %v231 = vld [vmem:[%s201 + $0x90] sm:$0xff]
      %v232 = vld [vmem:[%s201 + $0x98] sm:$0xff]
      %v233 = vld [vmem:[%s201 + $0xa0] sm:$0xff]
      %v234 = vld [vmem:[%s201 + $0xa8] sm:$0xff]
      %v235 = vld [vmem:[%s201 + $0xb0] sm:$0xff]
      %v236 = vld [vmem:[%s201 + $0xb8] sm:$0xff]
      %v237 = vld [vmem:[%s201 + $0xc0] sm:$0xff]
      %v238 = vld [vmem:[%s201 + $0xc8] sm:$0xff]
      %v239 = vld [vmem:[%s201 + $0xd0] sm:$0xff]
      %v240 = vld [vmem:[%s201 + $0xd8] sm:$0xff]
      %v241 = vld [vmem:[%s201 + $0xe0] sm:$0xff]
      %v242 = vld [vmem:[%s201 + $0xe8] sm:$0xff]
      %v243 = vld [vmem:[%s201 + $0xf0] sm:$0xff]
      %v244 = vld [vmem:[%s201 + $0xf8] sm:$0xff]
      %v245 = vld [vmem:[%s201 + $0x100] sm:$0xff]
      %v246 = vld [vmem:[%s201 + $0x108] sm:$0xff]
      %v247 = vld [vmem:[%s201 + $0x110] sm:$0xff]
      %v248 = vld [vmem:[%s201 + $0x118] sm:$0xff]
      %v249 = vld [vmem:[%s201 + $0x120] sm:$0xff]
      %v250 = vld [vmem:[%s201 + $0x128] sm:$0xff]
      %v251 = vld [vmem:[%s201 + $0x130] sm:$0xff]
      %v252 = vld [vmem:[%s201 + $0x138] sm:$0xff]
      %v253 = vld [vmem:[%s201 + $0x140] sm:$0xff]
      %v254 = vld [vmem:[%s201 + $0x148] sm:$0xff]
      %v255 = vld [vmem:[%s201 + $0x150] sm:$0xff]
      %v256 = vld [vmem:[%s201 + $0x158] sm:$0xff]
      %v257 = vld [vmem:[%s201 + $0x160] sm:$0xff]
      %v258 = vld [vmem:[%s201 + $0x168] sm:$0xff]
      %v259 = vld [vmem:[%s201 + $0x170] sm:$0xff]
      %v260 = vld [vmem:[%s201 + $0x178] sm:$0xff]
      %v261 = vld [vmem:[%s201 + $0x180] sm:$0xff]
      %v262 = vld [vmem:[%s201 + $0x188] sm:$0xff]
      %v263 = vld [vmem:[%s201 + $0x190] sm:$0xff]
      %v264 = vld [vmem:[%s201 + $0x198] sm:$0xff]
      %v265 = vld [vmem:[%s201 + $0x1a0] sm:$0xff]
      %v266 = vld [vmem:[%s201 + $0x1a8] sm:$0xff]
      %v267 = vld [vmem:[%s201 + $0x1b0] sm:$0xff]
      %v268 = vld [vmem:[%s201 + $0x1b8] sm:$0xff]
      %v269 = vld [vmem:[%s1] sm:$0xff]
      %v270 = vld [vmem:[%s1 + $0x8] sm:$0xff]
      %v271 = vld [vmem:[%s1 + $0x10] sm:$0xff]
      %v272 = vld [vmem:[%s1 + $0x18] sm:$0xff]
      %v273 = vld [vmem:[%s1 + $0x20] sm:$0xff]
      %v274 = vld [vmem:[%s1 + $0x28] sm:$0xff]
      %v275 = vld [vmem:[%s1 + $0x30] sm:$0xff]
      %v276 = vld [vmem:[%s1 + $0x38] sm:$0xff]
      %v277 = vld [vmem:[%s1 + $0x40] sm:$0xff]
      %v278 = vld [vmem:[%s1 + $0x48] sm:$0xff]
      %v279 = vld [vmem:[%s1 + $0x50] sm:$0xff]
      %v280 = vld [vmem:[%s1 + $0x58] sm:$0xff]
      %v281 = vld [vmem:[%s1 + $0x60] sm:$0xff]
      %v282 = vld [vmem:[%s1 + $0x68] sm:$0xff]
      %v283 = vld [vmem:[%s1 + $0x70] sm:$0xff]
      %v284 = vld [vmem:[%s1 + $0x78] sm:$0xff]
      %v285 = vld [vmem:[%s1 + $0x80] sm:$0xff]
      %v286 = vld [vmem:[%s1 + $0x88] sm:$0xff]
      %v287 = vld [vmem:[%s1 + $0x90] sm:$0xff]
      %v288 = vld [vmem:[%s1 + $0x98] sm:$0xff]
      %v289 = vld [vmem:[%s1 + $0xa0] sm:$0xff]
      %v290 = vld [vmem:[%s1 + $0xa8] sm:$0xff]
      %v291 = vld [vmem:[%s1 + $0xb0] sm:$0xff]
      %v292 = vld [vmem:[%s1 + $0xb8] sm:$0xff]
      %v293 = vld [vmem:[%s1 + $0xc0] sm:$0xff]
      %v294 = vld [vmem:[%s1 + $0xc8] sm:$0xff]
      %v295 = vld [vmem:[%s1 + $0xd0] sm:$0xff]
      %v296 = vld [vmem:[%s1 + $0xd8] sm:$0xff]
      %v297 = vld [vmem:[%s1 + $0xe0] sm:$0xff]
      %v298 = vld [vmem:[%s1 + $0xe8] sm:$0xff]
      %v299 = vld [vmem:[%s1 + $0xf0] sm:$0xff]
      %v300 = vld [vmem:[%s1 + $0xf8] sm:$0xff]
      %v301 = vld [vmem:[%s2] sm:$0x1]
      %v303 = vlaneseq
      %v304 = vshrl.u32 %v303, 7
      %v305 = vsub.s32 0, %v304
      %v306 = vrot.slane %v301, %v305
      %308 = vmatprep.subr.mxu0 0.0
      %309 = vmatpush1.msra.mxu0 %v269
      %310 = vmatprep.subr.mxu0 0.0
      %311 = vmatpush1.msra.mxu0 %v270
      %312 = vmatprep.subr.mxu0 0.0
      %313 = vmatpush1.msra.mxu0 %v271
      %314 = vmatprep.subr.mxu0 0.0
      %315 = vmatpush1.msra.mxu0 %v272
      %316 = vmatprep.subr.mxu0 0.0
      %317 = vmatpush1.msra.mxu0 %v273
      %318 = vmatprep.subr.mxu0 0.0
      %319 = vmatpush1.msra.mxu0 %v274
      %320 = vmatprep.subr.mxu0 0.0
      %321 = vmatpush1.msra.mxu0 %v275
      %322 = vmatprep.subr.mxu0 0.0
      %323 = vmatpush1.msra.mxu0 %v276
      %324 = vmatprep.subr.mxu0 0.0
      %325 = vmatpush1.msra.mxu0 %v277
      %326 = vmatprep.subr.mxu0 0.0
      %327 = vmatpush1.msra.mxu0 %v278
      %328 = vmatprep.subr.mxu0 0.0
      %329 = vmatpush1.msra.mxu0 %v279
      %330 = vmatprep.subr.mxu0 0.0
      %331 = vmatpush1.msra.mxu0 %v280
      %332 = vmatprep.subr.mxu0 0.0
      %333 = vmatpush1.msra.mxu0 %v281
      %334 = vmatprep.subr.mxu0 0.0
      %335 = vmatpush1.msra.mxu0 %v282
      %336 = vmatprep.subr.mxu0 0.0
      %337 = vmatpush1.msra.mxu0 %v283
      %338 = vmatprep.subr.mxu0 0.0
      %339 = vmatpush1.msra.mxu0 %v284
      %340 = vmatprep.subr.mxu0 0.0
      %341 = vmatpush1.msra.mxu0 %v285
      %342 = vmatprep.subr.mxu0 0.0
      %343 = vmatpush1.msra.mxu0 %v286
      %344 = vmatprep.subr.mxu0 0.0
      %345 = vmatpush1.msra.mxu0 %v287
      %346 = vmatprep.subr.mxu0 0.0
      %347 = vmatpush1.msra.mxu0 %v288
      %348 = vmatprep.subr.mxu0 0.0
      %349 = vmatpush1.msra.mxu0 %v289
      %350 = vmatprep.subr.mxu0 0.0
      %351 = vmatpush1.msra.mxu0 %v290
      %352 = vmatprep.subr.mxu0 0.0
      %353 = vmatpush1.msra.mxu0 %v291
      %354 = vmatprep.subr.mxu0 0.0
      %355 = vmatpush1.msra.mxu0 %v292
      %356 = vmatprep.subr.mxu0 0.0
      %357 = vmatpush1.msra.mxu0 %v293
      %358 = vmatprep.subr.mxu0 0.0
      %359 = vmatpush1.msra.mxu0 %v294
      %360 = vmatprep.subr.mxu0 0.0
      %361 = vmatpush1.msra.mxu0 %v295
      %362 = vmatprep.subr.mxu0 0.0
      %363 = vmatpush1.msra.mxu0 %v296
      %364 = vmatprep.subr.mxu0 0.0
      %365 = vmatpush1.msra.mxu0 %v297
      %366 = vmatprep.subr.mxu0 0.0
      %367 = vmatpush1.msra.mxu0 %v298
      %368 = vmatprep.subr.mxu0 0.0
      %369 = vmatpush1.msra.mxu0 %v299
      %370 = vmatprep.subr.mxu0 0.0
      %371 = vmatpush1.msra.mxu0 %v300
      %372 = vmatprep.mubr.f32.mxu0 %v214
      %373 = vmatmul.mubr.f32.gmra.mrb[0].mxu0 %v213
      %v374 = vpop.f32.mrb[0].mxu0
      %v375 = vadd.f32 %v306, %v374
      %v376 = vpop.f32.mrb[0].mxu0
      %377 = vmatprep.mubr.f32.mxu0 %v216
      %378 = vmatmul.mubr.f32.gmra.mrb[0].mxu0 %v215
      %v379 = vpop.f32.mrb[0].mxu0
      %v380 = vadd.f32 %v306, %v379
      %v381 = vpop.f32.mrb[0].mxu0
      %382 = vmatprep.mubr.f32.mxu0 %v218
      %383 = vmatmul.mubr.f32.gmra.mrb[0].mxu0 %v217
      %v384 = vpop.f32.mrb[0].mxu0
      %v385 = vadd.f32 %v306, %v384
      %v386 = vpop.f32.mrb[0].mxu0
      %387 = vmatprep.mubr.f32.mxu0 %v220
      %388 = vmatmul.mubr.f32.gmra.mrb[0].mxu0 %v219
      %v389 = vpop.f32.mrb[0].mxu0
      %v390 = vadd.f32 %v306, %v389
      %v391 = vpop.f32.mrb[0].mxu0
      %392 = vmatprep.mubr.f32.mxu0 %v222
      %393 = vmatmul.mubr.f32.gmra.mrb[0].mxu0 %v221
      %v394 = vpop.f32.mrb[0].mxu0
      %v395 = vadd.f32 %v306, %v394
      %v396 = vpop.f32.mrb[0].mxu0
      %397 = vmatprep.mubr.f32.mxu0 %v224
      %398 = vmatmul.mubr.f32.gmra.mrb[0].mxu0 %v223
      %v399 = vpop.f32.mrb[0].mxu0
      %v400 = vadd.f32 %v306, %v399
      %v401 = vpop.f32.mrb[0].mxu0
      %402 = vmatprep.mubr.f32.mxu0 %v226
      %403 = vmatmul.mubr.f32.gmra.mrb[0].mxu0 %v225
      %v404 = vpop.f32.mrb[0].mxu0
      %v405 = vadd.f32 %v306, %v404
      %v406 = vpop.f32.mrb[0].mxu0
      %407 = vmatprep.mubr.f32.mxu0 %v228
      %408 = vmatmul.mubr.f32.gmra.mrb[0].mxu0 %v227
      %v409 = vpop.f32.mrb[0].mxu0
      %v410 = vadd.f32 %v306, %v409
      %v411 = vpop.f32.mrb[0].mxu0
      %412 = vmatprep.mubr.f32.mxu0 %v230
      %413 = vmatmul.mubr.f32.gmra.mrb[0].mxu0 %v229
      %v414 = vpop.f32.mrb[0].mxu0
      %v415 = vadd.f32 %v306, %v414
      %v416 = vpop.f32.mrb[0].mxu0
      %417 = vmatprep.mubr.f32.mxu0 %v232
      %418 = vmatmul.mubr.f32.gmra.mrb[0].mxu0 %v231
      %v419 = vpop.f32.mrb[0].mxu0
      %v420 = vadd.f32 %v306, %v419
      %v421 = vpop.f32.mrb[0].mxu0
      %422 = vmatprep.mubr.f32.mxu0 %v234
      %423 = vmatmul.mubr.f32.gmra.mrb[0].mxu0 %v233
      %v424 = vpop.f32.mrb[0].mxu0
      %v425 = vadd.f32 %v306, %v424
      %v426 = vpop.f32.mrb[0].mxu0
      %427 = vmatprep.mubr.f32.mxu0 %v236
      %428 = vmatmul.mubr.f32.gmra.mrb[0].mxu0 %v235
      %v429 = vpop.f32.mrb[0].mxu0
      %v430 = vadd.f32 %v306, %v429
      %v431 = vpop.f32.mrb[0].mxu0
      %432 = vmatprep.mubr.f32.mxu0 %v238
      %433 = vmatmul.mubr.f32.gmra.mrb[0].mxu0 %v237
      %v434 = vpop.f32.mrb[0].mxu0
      %v435 = vadd.f32 %v306, %v434
      %v436 = vpop.f32.mrb[0].mxu0
      %437 = vmatprep.mubr.f32.mxu0 %v240
      %438 = vmatmul.mubr.f32.gmra.mrb[0].mxu0 %v239
      %v439 = vpop.f32.mrb[0].mxu0
      %v440 = vadd.f32 %v306, %v439
      %v441 = vpop.f32.mrb[0].mxu0
      %442 = vmatprep.mubr.f32.mxu0 %v242
      %443 = vmatmul.mubr.f32.gmra.mrb[0].mxu0 %v241
      %v444 = vpop.f32.mrb[0].mxu0
      %v445 = vadd.f32 %v306, %v444
      %v446 = vpop.f32.mrb[0].mxu0
      %447 = vmatprep.mubr.f32.mxu0 %v244
      %448 = vmatmul.mubr.f32.gmra.mrb[0].mxu0 %v243
      %v449 = vpop.f32.mrb[0].mxu0
      %v450 = vadd.f32 %v306, %v449
      %v451 = vpop.f32.mrb[0].mxu0
      %452 = vmatprep.mubr.f32.mxu0 %v246
      %453 = vmatmul.mubr.f32.gmra.mrb[0].mxu0 %v245
      %v454 = vpop.f32.mrb[0].mxu0
      %v455 = vadd.f32 %v306, %v454
      %v456 = vpop.f32.mrb[0].mxu0
      %457 = vmatprep.mubr.f32.mxu0 %v248
      %458 = vmatmul.mubr.f32.gmra.mrb[0].mxu0 %v247
      %v459 = vpop.f32.mrb[0].mxu0
      %v460 = vadd.f32 %v306, %v459
      %v461 = vpop.f32.mrb[0].mxu0
      %462 = vmatprep.mubr.f32.mxu0 %v250
      %463 = vmatmul.mubr.f32.gmra.mrb[0].mxu0 %v249
      %v464 = vpop.f32.mrb[0].mxu0
      %v465 = vadd.f32 %v306, %v464
      %v466 = vpop.f32.mrb[0].mxu0
      %467 = vmatprep.mubr.f32.mxu0 %v252
      %468 = vmatmul.mubr.f32.gmra.mrb[0].mxu0 %v251
      %v469 = vpop.f32.mrb[0].mxu0
      %v470 = vadd.f32 %v306, %v469
      %v471 = vpop.f32.mrb[0].mxu0
      %472 = vmatprep.mubr.f32.mxu0 %v254
      %473 = vmatmul.mubr.f32.gmra.mrb[0].mxu0 %v253
      %v474 = vpop.f32.mrb[0].mxu0
      %v475 = vadd.f32 %v306, %v474
      %v476 = vpop.f32.mrb[0].mxu0
      %477 = vmatprep.mubr.f32.mxu0 %v256
      %478 = vmatmul.mubr.f32.gmra.mrb[0].mxu0 %v255
      %v479 = vpop.f32.mrb[0].mxu0
      %v480 = vadd.f32 %v306, %v479
      %v481 = vpop.f32.mrb[0].mxu0
      %482 = vmatprep.mubr.f32.mxu0 %v258
      %483 = vmatmul.mubr.f32.gmra.mrb[0].mxu0 %v257
      %v484 = vpop.f32.mrb[0].mxu0
      %v485 = vadd.f32 %v306, %v484
      %v486 = vpop.f32.mrb[0].mxu0
      %487 = vmatprep.mubr.f32.mxu0 %v260
      %488 = vmatmul.mubr.f32.gmra.mrb[0].mxu0 %v259
      %v489 = vpop.f32.mrb[0].mxu0
      %v490 = vadd.f32 %v306, %v489
      %v491 = vpop.f32.mrb[0].mxu0
      %492 = vmatprep.mubr.f32.mxu0 %v262
      %493 = vmatmul.mubr.f32.gmra.mrb[0].mxu0 %v261
      %v494 = vpop.f32.mrb[0].mxu0
      %v495 = vadd.f32 %v306, %v494
      %v496 = vpop.f32.mrb[0].mxu0
      %497 = vmatprep.mubr.f32.mxu0 %v264
      %498 = vmatmul.mubr.f32.gmra.mrb[0].mxu0 %v263
      %v499 = vpop.f32.mrb[0].mxu0
      %v500 = vadd.f32 %v306, %v499
      %v501 = vpop.f32.mrb[0].mxu0
      %502 = vmatprep.mubr.f32.mxu0 %v266
      %503 = vmatmul.mubr.f32.gmra.mrb[0].mxu0 %v265
      %v504 = vpop.f32.mrb[0].mxu0
      %v505 = vadd.f32 %v306, %v504
      %v506 = vpop.f32.mrb[0].mxu0
      %507 = vmatprep.mubr.f32.mxu0 %v268
      %508 = vmatmul.mubr.f32.gmra.mrb[0].mxu0 %v267
      %v509 = vpop.f32.mrb[0].mxu0
      %v510 = vadd.f32 %v306, %v509
      %v511 = vpop.f32.mrb[0].mxu0
      %512 = vdwg.mxu0
      %v513 = vmax.f32 %v375, 0.0
      %v514 = vmax.f32 %v380, 0.0
      %v515 = vmax.f32 %v385, 0.0
      %v516 = vmax.f32 %v390, 0.0
      %v517 = vmax.f32 %v395, 0.0
      %v518 = vmax.f32 %v400, 0.0
      %v519 = vmax.f32 %v405, 0.0
      %v520 = vmax.f32 %v410, 0.0
      %v521 = vmax.f32 %v415, 0.0
      %v522 = vmax.f32 %v420, 0.0
      %v523 = vmax.f32 %v425, 0.0
      %v524 = vmax.f32 %v430, 0.0
      %v525 = vmax.f32 %v435, 0.0
      %v526 = vmax.f32 %v440, 0.0
      %v527 = vmax.f32 %v445, 0.0
      %v528 = vmax.f32 %v450, 0.0
      %v529 = vmax.f32 %v455, 0.0
      %v530 = vmax.f32 %v460, 0.0
      %v531 = vmax.f32 %v465, 0.0
      %v532 = vmax.f32 %v470, 0.0
      %v533 = vmax.f32 %v475, 0.0
      %v534 = vmax.f32 %v480, 0.0
      %v535 = vmax.f32 %v485, 0.0
      %v536 = vmax.f32 %v490, 0.0
      %v537 = vmax.f32 %v495, 0.0
      %v538 = vmax.f32 %v500, 0.0
      %v539 = vmax.f32 %v505, 0.0
      %v540 = vmax.f32 %v510, 0.0
      %541 = vst [vmem:[%s211] sm:$0xff] %v513
      %542 = vst [vmem:[%s211 + $0x8] sm:$0xff] %v514
      %543 = vst [vmem:[%s211 + $0x10] sm:$0xff] %v515
      %544 = vst [vmem:[%s211 + $0x18] sm:$0xff] %v516
      %545 = vst [vmem:[%s211 + $0x20] sm:$0xff] %v517
      %546 = vst [vmem:[%s211 + $0x28] sm:$0xff] %v518
      %547 = vst [vmem:[%s211 + $0x30] sm:$0xff] %v519
      %548 = vst [vmem:[%s211 + $0x38] sm:$0xff] %v520
      %549 = vst [vmem:[%s211 + $0x40] sm:$0xff] %v521
      %550 = vst [vmem:[%s211 + $0x48] sm:$0xff] %v522
      %551 = vst [vmem:[%s211 + $0x50] sm:$0xff] %v523
      %552 = vst [vmem:[%s211 + $0x58] sm:$0xff] %v524
      %553 = vst [vmem:[%s211 + $0x60] sm:$0xff] %v525
      %554 = vst [vmem:[%s211 + $0x68] sm:$0xff] %v526
      %555 = vst [vmem:[%s211 + $0x70] sm:$0xff] %v527
      %556 = vst [vmem:[%s211 + $0x78] sm:$0xff] %v528
      %557 = vst [vmem:[%s211 + $0x80] sm:$0xff] %v529
      %558 = vst [vmem:[%s211 + $0x88] sm:$0xff] %v530
      %559 = vst [vmem:[%s211 + $0x90] sm:$0xff] %v531
      %560 = vst [vmem:[%s211 + $0x98] sm:$0xff] %v532
      %561 = vst [vmem:[%s211 + $0xa0] sm:$0xff] %v533
      %562 = vst [vmem:[%s211 + $0xa8] sm:$0xff] %v534
      %563 = vst [vmem:[%s211 + $0xb0] sm:$0xff] %v535
      %564 = vst [vmem:[%s211 + $0xb8] sm:$0xff] %v536
      %565 = vst [vmem:[%s211 + $0xc0] sm:$0xff] %v537
      %566 = vst [vmem:[%s211 + $0xc8] sm:$0xff] %v538
      %567 = vst [vmem:[%s211 + $0xd0] sm:$0xff] %v539
      %568 = vst [vmem:[%s211 + $0xd8] sm:$0xff] %v540
      %s569 = smul.u32 28, %s19
      %p570 = scmp.lt.s32.totalorder %s18, 1
      %s571 = scalar_select %p570, %s18, 1
      %p572 = scmp.lt.s32.totalorder %s569, 27
      %s573 = scalar_select %p572, %s569, 27
      %s574 = smul.addr %s571, 28
      %s575 = sadd.s32 %s573, %s574
      %s576 = smul.addr %s575, 8
      %s577 = scalar_lea.vmem %s3, %s576
      // Predicated region
      $region33: #{another_disc2d_forward.9} parent=31 // pred_check
        %p578 = pneg %p116
      $region34: #{another_disc2d_forward.9} parent=31 // pred_check_branch
        %580 = sbr.rel (%p578) target = $region36
      $region35: #{another_disc2d_forward.9} parent=31 // pred_region
        %s581 = smul.u32 28, %s19
      $region36: #{another_disc2d_forward.9} parent=31 // pred_fallthru
        _
    $region32: #{another_disc2d_forward.9} parent=5 // pred_fallthru
      _
    %p582 = scmp.le.s32.totalorder 2, %s9
    // Predicated region
    $region37: #{another_disc2d_forward.9} parent=5 // pred_check
      %p583 = pneg %p582
    $region38: #{another_disc2d_forward.9} parent=5 // pred_check_branch
      %585 = sbr.rel (%p583) target = $region40
    $region39: #{another_disc2d_forward.9} parent=5 // pred_region
      %s586 = ssub.s32 %s9, 2
      // Predicated region
      $region41: #{another_disc2d_forward.9} parent=39 // pred_check
        %p587 = pneg %p122
      $region42: #{another_disc2d_forward.9} parent=39 // pred_check_branch
        %589 = sbr.rel (%p587) target = $region44
      $region43: #{another_disc2d_forward.9} parent=39 // pred_region
        %s590 = smul.u32 28, %s21
        %p591 = scmp.lt.s32.totalorder %s20, 1
        %s592 = scalar_select %p591, %s20, 1
        %p593 = scmp.lt.s32.totalorder %s590, 27
        %s594 = scalar_select %p593, %s590, 27
        %s595 = smul.addr %s592, 28
        %s596 = sadd.s32 %s594, %s595
        %s597 = smul.addr %s596, 8
        %s598 = scalar_lea.vmem %s3, %s597
      $region44: #{another_disc2d_forward.9} parent=39 // pred_fallthru
        _
    $region40: #{another_disc2d_forward.9} parent=5 // pred_fallthru
      _
  $region6: #{another_disc2d_forward.9} parent=0 // loop_footer
    %s13 = sadd.s32 1, %s9
  $region7: #{another_disc2d_forward.9} parent=0 // loop_footer_branch
    %8 = sbr.rel target = $region3
  $region8: #{another_disc2d_forward.9} parent=0 // loop_exit
    _

// kernel: another_disc2d_forward.10
$region0: #{another_disc2d_forward.10}
  #allocation0 [shape = 'u32[]', space=smem, size = 0x4, offset = 0x4, fixed_abs, tag = 'smem constant byte address 0x4 - core index']
  #allocation1 [shape = 'u32[144,128]{1,0:T(1,128)}', space=vmem, size = 0x12000, scoped, tag = 'internal scratch']
  %s0 = inlined_call_operand.vmem [shape: f32[2,6,8,128], index: 0, kind: input, shape index: {}]
  %s1 = inlined_call_operand.vmem [shape: f32[2,6,8,128], index: 1, kind: input, shape index: {}]
  %s2 = inlined_call_operand.vmem [shape: f32[2,6,8,128], index: 2, kind: input, shape index: {}]
  %s3 = inlined_call_operand.vmem [shape: f32[2,6,8,128], index: 3, kind: input, shape index: {}]
  %s4 = inlined_call_operand.vmem [shape: f32[2,6,8,128], index: 4, kind: output, shape index: {}]
  %s5 = sld [smem:[#allocation0]]
  $region49: #{another_disc2d_forward.10} parent=0
    _
  %s7 = ssub.s32 1, %s5
  %s8 = scalar_select 0, %s7, %s5
  loop: start=0, step=1, limit=4
  $region2: #{another_disc2d_forward.10} parent=0 // loop_pre_header
    _
  $region3: #{another_disc2d_forward.10} parent=0 // loop_header
    %s10 = sphi 0, %s14
    %p11 = scmp.ge.s32.totalorder %s10, 4
    %s20 = sphi 0, %s22
    %s23 = sphi 0, %s20
    %s24 = sphi 0, %s23
    %s40 = sphi 0, %s24
    %s46 = sphi 0, %s48
    %s49 = sphi 0, %s46
    %s50 = sphi 0, %s49
    %s66 = sphi 0, %s50
    %s72 = sphi 0, %s74
    %s75 = sphi 0, %s72
    %s76 = sphi 0, %s75
    %s92 = sphi 0, %s76
    %s98 = sphi 0, %s100
    %s101 = sphi 0, %s98
    %s102 = sphi 0, %s101
    %s118 = sphi 0, %s102
    %s124 = sphi 0, %s126
    %s127 = sphi 0, %s124
    %s128 = sphi 0, %s127
    %s144 = sphi 0, %s128
  $region4: #{another_disc2d_forward.10} parent=0 // loop_header_branch
    %13 = sbr.rel (%p11) target = $region8
  $region5: #{another_disc2d_forward.10} parent=0 // loop_body
    %s15 = ssub.s32 %s10, 1
    %s16 = ssub.s32 %s10, 2
    %s17 = sadd.s32 %s10, 1
    %s18 = ssub.s32 %s10, %s17
    %p19 = scmp.eq.s32.totalorder %s18, 0
    %s21 = sadd.s32 %s20, 1
    %s22 = scalar_select %p19, %s20, %s21
    %p25 = pneg %p19
    %p26 = scmp.eq.s32.totalorder %s10, 1
    %p27 = por %p25, %p26
    %p28 = scmp.ne.s32.totalorder %s20, %s23
    %p29 = scmp.eq.s32.totalorder %s10, 0
    %p30 = por %p28, %p29
    %p31 = scmp.ne.s32.totalorder %s20, %s23
    %p32 = scmp.eq.s32.totalorder %s15, 1
    %p33 = por %p31, %p32
    %p34 = scmp.ne.s32.totalorder %s23, %s24
    %p35 = scmp.eq.s32.totalorder %s15, 0
    %p36 = por %p34, %p35
    %p37 = scmp.ne.s32.totalorder %s23, %s24
    %p38 = scmp.eq.s32.totalorder %s16, 1
    %p39 = por %p37, %p38
    %p41 = scmp.ne.s32.totalorder %s24, %s40
    %p42 = scmp.eq.s32.totalorder %s16, 0
    %p43 = por %p41, %p42
    %s44 = ssub.s32 %s10, %s17
    %p45 = scmp.eq.s32.totalorder %s44, 0
    %s47 = sadd.s32 %s46, 1
    %s48 = scalar_select %p45, %s46, %s47
    %p51 = pneg %p45
    %p52 = scmp.eq.s32.totalorder %s10, 1
    %p53 = por %p51, %p52
    %p54 = scmp.ne.s32.totalorder %s46, %s49
    %p55 = scmp.eq.s32.totalorder %s10, 0
    %p56 = por %p54, %p55
    %p57 = scmp.ne.s32.totalorder %s46, %s49
    %p58 = scmp.eq.s32.totalorder %s15, 1
    %p59 = por %p57, %p58
    %p60 = scmp.ne.s32.totalorder %s49, %s50
    %p61 = scmp.eq.s32.totalorder %s15, 0
    %p62 = por %p60, %p61
    %p63 = scmp.ne.s32.totalorder %s49, %s50
    %p64 = scmp.eq.s32.totalorder %s16, 1
    %p65 = por %p63, %p64
    %p67 = scmp.ne.s32.totalorder %s50, %s66
    %p68 = scmp.eq.s32.totalorder %s16, 0
    %p69 = por %p67, %p68
    %s70 = ssub.s32 %s10, %s17
    %p71 = scmp.eq.s32.totalorder %s70, 0
    %s73 = sadd.s32 %s72, 1
    %s74 = scalar_select %p71, %s72, %s73
    %p77 = pneg %p71
    %p78 = scmp.eq.s32.totalorder %s10, 1
    %p79 = por %p77, %p78
    %p80 = scmp.ne.s32.totalorder %s72, %s75
    %p81 = scmp.eq.s32.totalorder %s10, 0
    %p82 = por %p80, %p81
    %p83 = scmp.ne.s32.totalorder %s72, %s75
    %p84 = scmp.eq.s32.totalorder %s15, 1
    %p85 = por %p83, %p84
    %p86 = scmp.ne.s32.totalorder %s75, %s76
    %p87 = scmp.eq.s32.totalorder %s15, 0
    %p88 = por %p86, %p87
    %p89 = scmp.ne.s32.totalorder %s75, %s76
    %p90 = scmp.eq.s32.totalorder %s16, 1
    %p91 = por %p89, %p90
    %p93 = scmp.ne.s32.totalorder %s76, %s92
    %p94 = scmp.eq.s32.totalorder %s16, 0
    %p95 = por %p93, %p94
    %s96 = ssub.s32 %s10, %s17
    %p97 = scmp.eq.s32.totalorder %s96, 0
    %s99 = sadd.s32 %s98, 1
    %s100 = scalar_select %p97, %s98, %s99
    %p103 = pneg %p97
    %p104 = scmp.eq.s32.totalorder %s10, 1
    %p105 = por %p103, %p104
    %p106 = scmp.ne.s32.totalorder %s98, %s101
    %p107 = scmp.eq.s32.totalorder %s10, 0
    %p108 = por %p106, %p107
    %p109 = scmp.ne.s32.totalorder %s98, %s101
    %p110 = scmp.eq.s32.totalorder %s15, 1
    %p111 = por %p109, %p110
    %p112 = scmp.ne.s32.totalorder %s101, %s102
    %p113 = scmp.eq.s32.totalorder %s15, 0
    %p114 = por %p112, %p113
    %p115 = scmp.ne.s32.totalorder %s101, %s102
    %p116 = scmp.eq.s32.totalorder %s16, 1
    %p117 = por %p115, %p116
    %p119 = scmp.ne.s32.totalorder %s102, %s118
    %p120 = scmp.eq.s32.totalorder %s16, 0
    %p121 = por %p119, %p120
    %s122 = ssub.s32 %s10, %s17
    %p123 = scmp.eq.s32.totalorder %s122, 0
    %s125 = sadd.s32 %s124, 1
    %s126 = scalar_select %p123, %s124, %s125
    %p129 = pneg %p123
    %p130 = scmp.eq.s32.totalorder %s10, 1
    %p131 = por %p129, %p130
    %p132 = scmp.ne.s32.totalorder %s124, %s127
    %p133 = scmp.eq.s32.totalorder %s10, 0
    %p134 = por %p132, %p133
    %p135 = scmp.ne.s32.totalorder %s124, %s127
    %p136 = scmp.eq.s32.totalorder %s15, 1
    %p137 = por %p135, %p136
    %p138 = scmp.ne.s32.totalorder %s127, %s128
    %p139 = scmp.eq.s32.totalorder %s15, 0
    %p140 = por %p138, %p139
    %p141 = scmp.ne.s32.totalorder %s127, %s128
    %p142 = scmp.eq.s32.totalorder %s16, 1
    %p143 = por %p141, %p142
    %p145 = scmp.ne.s32.totalorder %s128, %s144
    %p146 = scmp.eq.s32.totalorder %s16, 0
    %p147 = por %p145, %p146
    %p148 = scmp.le.s32.totalorder 1, %s10
    %p149 = scmp.lt.s32.totalorder %s10, 3
    %p150 = pnand %p148, %p149
    %p151 = pneg %p150
    // Predicated region
    $region9: #{another_disc2d_forward.10} parent=5 // pred_check
      _
    $region10: #{another_disc2d_forward.10} parent=5 // pred_check_branch
      %153 = sbr.rel (%p150) target = $region12
    $region11: #{another_disc2d_forward.10} parent=5 // pred_region
      %s154 = ssub.s32 %s10, 1
    $region12: #{another_disc2d_forward.10} parent=5 // pred_fallthru
      _
    %p155 = scmp.lt.s32.totalorder %s10, 2
    // Predicated region
    $region13: #{another_disc2d_forward.10} parent=5 // pred_check
      %p156 = pneg %p155
    $region14: #{another_disc2d_forward.10} parent=5 // pred_check_branch
      %158 = sbr.rel (%p156) target = $region16
    $region15: #{another_disc2d_forward.10} parent=5 // pred_region
      // Predicated region
      $region17: #{another_disc2d_forward.10} parent=15 // pred_check
        %p159 = pneg %p30
      $region18: #{another_disc2d_forward.10} parent=15 // pred_check_branch
        %161 = sbr.rel (%p159) target = $region20
      $region19: #{another_disc2d_forward.10} parent=15 // pred_region
        %p162 = scmp.lt.s32.totalorder %s10, 1
        %s163 = scalar_select %p162, %s10, 1
        %s164 = smul.addr %s163, 6
        %s165 = smul.addr %s164, 8
        %s166 = scalar_lea.vmem %s0, %s165
      $region20: #{another_disc2d_forward.10} parent=15 // pred_fallthru
        _
      // Predicated region
      $region21: #{another_disc2d_forward.10} parent=15 // pred_check
        %p167 = pneg %p56
      $region22: #{another_disc2d_forward.10} parent=15 // pred_check_branch
        %169 = sbr.rel (%p167) target = $region24
      $region23: #{another_disc2d_forward.10} parent=15 // pred_region
        %p170 = scmp.lt.s32.totalorder %s10, 1
        %s171 = scalar_select %p170, %s10, 1
        %s172 = smul.addr %s171, 6
        %s173 = smul.addr %s172, 8
        %s174 = scalar_lea.vmem %s1, %s173
      $region24: #{another_disc2d_forward.10} parent=15 // pred_fallthru
        _
      // Predicated region
      $region25: #{another_disc2d_forward.10} parent=15 // pred_check
        %p175 = pneg %p82
      $region26: #{another_disc2d_forward.10} parent=15 // pred_check_branch
        %177 = sbr.rel (%p175) target = $region28
      $region27: #{another_disc2d_forward.10} parent=15 // pred_region
        %p178 = scmp.lt.s32.totalorder %s10, 1
        %s179 = scalar_select %p178, %s10, 1
        %s180 = smul.addr %s179, 6
        %s181 = smul.addr %s180, 8
        %s182 = scalar_lea.vmem %s2, %s181
      $region28: #{another_disc2d_forward.10} parent=15 // pred_fallthru
        _
      // Predicated region
      $region29: #{another_disc2d_forward.10} parent=15 // pred_check
        %p183 = pneg %p108
      $region30: #{another_disc2d_forward.10} parent=15 // pred_check_branch
        %185 = sbr.rel (%p183) target = $region32
      $region31: #{another_disc2d_forward.10} parent=15 // pred_region
        %p186 = scmp.lt.s32.totalorder %s10, 1
        %s187 = scalar_select %p186, %s10, 1
        %s188 = smul.addr %s187, 6
        %s189 = smul.addr %s188, 8
        %s190 = scalar_lea.vmem %s3, %s189
      $region32: #{another_disc2d_forward.10} parent=15 // pred_fallthru
        _
    $region16: #{another_disc2d_forward.10} parent=5 // pred_fallthru
      _
    %p191 = scmp.le.s32.totalorder 1, %s10
    %p192 = scmp.lt.s32.totalorder %s10, 3
    %p193 = pnand %p191, %p192
    %p194 = pneg %p193
    // Predicated region
    $region33: #{another_disc2d_forward.10} parent=5 // pred_check
      _
    $region34: #{another_disc2d_forward.10} parent=5 // pred_check_branch
      %196 = sbr.rel (%p193) target = $region36
    $region35: #{another_disc2d_forward.10} parent=5 // pred_region
      %s197 = ssub.s32 %s10, 1
      %p198 = scmp.lt.s32.totalorder %s15, 1
      %s199 = scalar_select %p198, %s15, 1
      %s200 = smul.addr %s199, 6
      %s201 = smul.addr %s200, 8
      %s202 = scalar_lea.vmem %s0, %s201
      %p203 = pneg %p36
      %p204 = pneg %p33
      %p205 = scmp.lt.s32.totalorder %s15, 1
      %s206 = scalar_select %p205, %s15, 1
      %s207 = smul.addr %s206, 6
      %s208 = smul.addr %s207, 8
      %s209 = scalar_lea.vmem %s1, %s208
      %p210 = pneg %p62
      %p211 = pneg %p59
      %p212 = scmp.lt.s32.totalorder %s15, 1
      %s213 = scalar_select %p212, %s15, 1
      %s214 = smul.addr %s213, 6
      %s215 = smul.addr %s214, 8
      %s216 = scalar_lea.vmem %s2, %s215
      %p217 = pneg %p88
      %p218 = pneg %p85
      %p219 = scmp.lt.s32.totalorder %s15, 1
      %s220 = scalar_select %p219, %s15, 1
      %s221 = smul.addr %s220, 6
      %s222 = smul.addr %s221, 8
      %s223 = scalar_lea.vmem %s3, %s222
      %p224 = pneg %p114
      %p225 = pneg %p111
      %p226 = pneg %p140
      %p227 = pneg %p137
      %p228 = scmp.lt.s32.totalorder %s15, 1
      %s229 = scalar_select %p228, %s15, 1
      %s230 = smul.addr %s229, 6
      %s231 = smul.addr %s230, 8
      %s232 = scalar_lea.vmem %s4, %s231
      %p233 = scmp.lt.s32.totalorder %s15, 1
      %s234 = scalar_select %p233, %s15, 1
      %s235 = smul.addr %s234, 6
      %s236 = smul.addr %s235, 8
      %s237 = scalar_lea.vmem %s0, %s236
      %p238 = scmp.lt.s32.totalorder %s15, 1
      %s239 = scalar_select %p238, %s15, 1
      %s240 = smul.addr %s239, 6
      %s241 = smul.addr %s240, 8
      %s242 = scalar_lea.vmem %s1, %s241
      %p243 = scmp.lt.s32.totalorder %s15, 1
      %s244 = scalar_select %p243, %s15, 1
      %s245 = smul.addr %s244, 6
      %s246 = smul.addr %s245, 8
      %s247 = scalar_lea.vmem %s2, %s246
      %p248 = scmp.lt.s32.totalorder %s15, 1
      %s249 = scalar_select %p248, %s15, 1
      %s250 = smul.addr %s249, 6
      %s251 = smul.addr %s250, 8
      %s252 = scalar_lea.vmem %s3, %s251
      %p253 = scmp.lt.s32.totalorder %s15, 1
      %s254 = scalar_select %p253, %s15, 1
      %s255 = smul.addr %s254, 6
      %s256 = smul.addr %s255, 8
      %s257 = scalar_lea.vmem %s4, %s256
      %v258 = vld [vmem:[%s237] sm:$0xff]
      %v259 = vld [vmem:[%s237 + $0x8] sm:$0xff]
      %v260 = vld [vmem:[%s237 + $0x10] sm:$0xff]
      %v261 = vld [vmem:[%s237 + $0x18] sm:$0xff]
      %v262 = vld [vmem:[%s237 + $0x20] sm:$0xff]
      %v263 = vld [vmem:[%s237 + $0x28] sm:$0xff]
      %v264 = vld [vmem:[%s242] sm:$0xff]
      %v265 = vld [vmem:[%s242 + $0x8] sm:$0xff]
      %v266 = vld [vmem:[%s242 + $0x10] sm:$0xff]
      %v267 = vld [vmem:[%s242 + $0x18] sm:$0xff]
      %v268 = vld [vmem:[%s242 + $0x20] sm:$0xff]
      %v269 = vld [vmem:[%s242 + $0x28] sm:$0xff]
      %v270 = vmax.f32 %v258, %v264
      %v271 = vmax.f32 %v259, %v265
      %v272 = vmax.f32 %v260, %v266
      %v273 = vmax.f32 %v261, %v267
      %v274 = vmax.f32 %v262, %v268
      %v275 = vmax.f32 %v263, %v269
      %v276 = vld [vmem:[%s247] sm:$0xff]
      %v277 = vld [vmem:[%s247 + $0x8] sm:$0xff]
      %v278 = vld [vmem:[%s247 + $0x10] sm:$0xff]
      %v279 = vld [vmem:[%s247 + $0x18] sm:$0xff]
      %v280 = vld [vmem:[%s247 + $0x20] sm:$0xff]
      %v281 = vld [vmem:[%s247 + $0x28] sm:$0xff]
      %v282 = vld [vmem:[%s252] sm:$0xff]
      %v283 = vld [vmem:[%s252 + $0x8] sm:$0xff]
      %v284 = vld [vmem:[%s252 + $0x10] sm:$0xff]
      %v285 = vld [vmem:[%s252 + $0x18] sm:$0xff]
      %v286 = vld [vmem:[%s252 + $0x20] sm:$0xff]
      %v287 = vld [vmem:[%s252 + $0x28] sm:$0xff]
      %v288 = vmax.f32 %v276, %v282
      %v289 = vmax.f32 %v277, %v283
      %v290 = vmax.f32 %v278, %v284
      %v291 = vmax.f32 %v279, %v285
      %v292 = vmax.f32 %v280, %v286
      %v293 = vmax.f32 %v281, %v287
      %v294 = vmax.f32 %v270, %v288
      %v295 = vmax.f32 %v271, %v289
      %v296 = vmax.f32 %v272, %v290
      %v297 = vmax.f32 %v273, %v291
      %v298 = vmax.f32 %v274, %v292
      %v299 = vmax.f32 %v275, %v293
      %300 = vst [vmem:[%s257] sm:$0xff] %v294
      %301 = vst [vmem:[%s257 + $0x8] sm:$0xff] %v295
      %302 = vst [vmem:[%s257 + $0x10] sm:$0xff] %v296
      %303 = vst [vmem:[%s257 + $0x18] sm:$0xff] %v297
      %304 = vst [vmem:[%s257 + $0x20] sm:$0xff] %v298
      %305 = vst [vmem:[%s257 + $0x28] sm:$0xff] %v299
      %p306 = scmp.lt.s32.totalorder %s15, 1
      %s307 = scalar_select %p306, %s15, 1
      %s308 = smul.addr %s307, 6
      %s309 = smul.addr %s308, 8
      %s310 = scalar_lea.vmem %s4, %s309
      // Predicated region
      $region37: #{another_disc2d_forward.10} parent=35 // pred_check
        %p311 = pneg %p137
      $region38: #{another_disc2d_forward.10} parent=35 // pred_check_branch
        %313 = sbr.rel (%p311) target = $region40
      $region39: #{another_disc2d_forward.10} parent=35 // pred_region
        _
      $region40: #{another_disc2d_forward.10} parent=35 // pred_fallthru
        _
    $region36: #{another_disc2d_forward.10} parent=5 // pred_fallthru
      _
    %p314 = scmp.le.s32.totalorder 2, %s10
    // Predicated region
    $region41: #{another_disc2d_forward.10} parent=5 // pred_check
      %p315 = pneg %p314
    $region42: #{another_disc2d_forward.10} parent=5 // pred_check_branch
      %317 = sbr.rel (%p315) target = $region44
    $region43: #{another_disc2d_forward.10} parent=5 // pred_region
      %s318 = ssub.s32 %s10, 2
      // Predicated region
      $region45: #{another_disc2d_forward.10} parent=43 // pred_check
        %p319 = pneg %p143
      $region46: #{another_disc2d_forward.10} parent=43 // pred_check_branch
        %321 = sbr.rel (%p319) target = $region48
      $region47: #{another_disc2d_forward.10} parent=43 // pred_region
        %p322 = scmp.lt.s32.totalorder %s16, 1
        %s323 = scalar_select %p322, %s16, 1
        %s324 = smul.addr %s323, 6
        %s325 = smul.addr %s324, 8
        %s326 = scalar_lea.vmem %s4, %s325
      $region48: #{another_disc2d_forward.10} parent=43 // pred_fallthru
        _
    $region44: #{another_disc2d_forward.10} parent=5 // pred_fallthru
      _
  $region6: #{another_disc2d_forward.10} parent=0 // loop_footer
    %s14 = sadd.s32 1, %s10
  $region7: #{another_disc2d_forward.10} parent=0 // loop_footer_branch
    %9 = sbr.rel target = $region3
  $region8: #{another_disc2d_forward.10} parent=0 // loop_exit
    _

// kernel: another_disc2d_forward.11
$region0: #{another_disc2d_forward.11}
  #allocation0 [shape = 'u32[]', space=smem, size = 0x4, offset = 0x4, fixed_abs, tag = 'smem constant byte address 0x4 - core index']
  #allocation1 [shape = 'u32[144,128]{1,0:T(1,128)}', space=vmem, size = 0x12000, scoped, tag = 'internal scratch']
  %s0 = inlined_call_operand.vmem [shape: f32[2,24,384], index: 0, kind: input, shape index: {}]
  %s1 = inlined_call_operand.vmem [shape: f32[384,128], index: 1, kind: input, shape index: {}]
  %s2 = inlined_call_operand.vmem [shape: f32[1,128], index: 2, kind: input, shape index: {}]
  %s3 = inlined_call_operand.vmem [shape: f32[2,24,128], index: 3, kind: output, shape index: {}]
  %s4 = sld [smem:[#allocation0]]
  $region45: #{another_disc2d_forward.11} parent=0
    _
  %s6 = ssub.s32 1, %s4
  %s7 = scalar_select 0, %s6, %s4
  loop: start=0, step=1, limit=4
  $region2: #{another_disc2d_forward.11} parent=0 // loop_pre_header
    _
  $region3: #{another_disc2d_forward.11} parent=0 // loop_header
    %s9 = sphi 0, %s13
    %p10 = scmp.ge.s32.totalorder %s9, 4
    %s16 = sphi 0, %s28
    %s17 = sphi 0, %s24
    %s18 = sphi 0, %s16
    %s19 = sphi 0, %s17
    %s20 = sphi 0, %s18
    %s21 = sphi 0, %s19
    %s33 = sphi 0, %s35
    %s36 = sphi 0, %s33
    %s37 = sphi 0, %s36
    %s53 = sphi 0, %s37
    %s57 = sphi 0, %s57
    %s59 = sphi 0, %s57
    %s60 = sphi 0, %s59
    %s74 = sphi 0, %s60
    %s78 = sphi 0, %s78
    %s80 = sphi 0, %s78
    %s81 = sphi 0, %s80
    %s95 = sphi 0, %s81
    %s103 = sphi 0, %s105
    %s106 = sphi 0, %s103
    %s107 = sphi 0, %s106
    %s123 = sphi 0, %s107
  $region4: #{another_disc2d_forward.11} parent=0 // loop_header_branch
    %12 = sbr.rel (%p10) target = $region8
  $region5: #{another_disc2d_forward.11} parent=0 // loop_body
    %s14 = ssub.s32 %s9, 1
    %s15 = ssub.s32 %s9, 2
    %s22 = sadd.s32 1, %s17
    %p23 = scmp.ge.s32.totalorder %s22, 1
    %s24 = scalar_select %p23, 0, %s22
    %s25 = sadd.s32 1, %s16
    %s26 = scalar_select %p23, %s25, %s16
    %p27 = scmp.ge.s32.totalorder %s26, 2
    %s28 = scalar_select %p27, 0, %s26
    %s29 = ssub.s32 %s16, %s28
    %s30 = ssub.s32 %s17, %s24
    %s31 = sor.u32 %s29, %s30
    %p32 = scmp.eq.s32.totalorder %s31, 0
    %s34 = sadd.s32 %s33, 1
    %s35 = scalar_select %p32, %s33, %s34
    %p38 = pneg %p32
    %p39 = scmp.eq.s32.totalorder %s9, 1
    %p40 = por %p38, %p39
    %p41 = scmp.ne.s32.totalorder %s33, %s36
    %p42 = scmp.eq.s32.totalorder %s9, 0
    %p43 = por %p41, %p42
    %p44 = scmp.ne.s32.totalorder %s33, %s36
    %p45 = scmp.eq.s32.totalorder %s14, 1
    %p46 = por %p44, %p45
    %p47 = scmp.ne.s32.totalorder %s36, %s37
    %p48 = scmp.eq.s32.totalorder %s14, 0
    %p49 = por %p47, %p48
    %p50 = scmp.ne.s32.totalorder %s36, %s37
    %p51 = scmp.eq.s32.totalorder %s15, 1
    %p52 = por %p50, %p51
    %p54 = scmp.ne.s32.totalorder %s37, %s53
    %p55 = scmp.eq.s32.totalorder %s15, 0
    %p56 = por %p54, %p55
    %s58 = sadd.s32 %s57, 1
    %p61 = scmp.eq.s32.totalorder %s9, 1
    %p62 = scmp.ne.s32.totalorder %s57, %s59
    %p63 = scmp.eq.s32.totalorder %s9, 0
    %p64 = por %p62, %p63
    %p65 = scmp.ne.s32.totalorder %s57, %s59
    %p66 = scmp.eq.s32.totalorder %s14, 1
    %p67 = por %p65, %p66
    %p68 = scmp.ne.s32.totalorder %s59, %s60
    %p69 = scmp.eq.s32.totalorder %s14, 0
    %p70 = por %p68, %p69
    %p71 = scmp.ne.s32.totalorder %s59, %s60
    %p72 = scmp.eq.s32.totalorder %s15, 1
    %p73 = por %p71, %p72
    %p75 = scmp.ne.s32.totalorder %s60, %s74
    %p76 = scmp.eq.s32.totalorder %s15, 0
    %p77 = por %p75, %p76
    %s79 = sadd.s32 %s78, 1
    %p82 = scmp.eq.s32.totalorder %s9, 1
    %p83 = scmp.ne.s32.totalorder %s78, %s80
    %p84 = scmp.eq.s32.totalorder %s9, 0
    %p85 = por %p83, %p84
    %p86 = scmp.ne.s32.totalorder %s78, %s80
    %p87 = scmp.eq.s32.totalorder %s14, 1
    %p88 = por %p86, %p87
    %p89 = scmp.ne.s32.totalorder %s80, %s81
    %p90 = scmp.eq.s32.totalorder %s14, 0
    %p91 = por %p89, %p90
    %p92 = scmp.ne.s32.totalorder %s80, %s81
    %p93 = scmp.eq.s32.totalorder %s15, 1
    %p94 = por %p92, %p93
    %p96 = scmp.ne.s32.totalorder %s81, %s95
    %p97 = scmp.eq.s32.totalorder %s15, 0
    %p98 = por %p96, %p97
    %s99 = ssub.s32 %s16, %s28
    %s100 = ssub.s32 %s17, %s24
    %s101 = sor.u32 %s99, %s100
    %p102 = scmp.eq.s32.totalorder %s101, 0
    %s104 = sadd.s32 %s103, 1
    %s105 = scalar_select %p102, %s103, %s104
    %p108 = pneg %p102
    %p109 = scmp.eq.s32.totalorder %s9, 1
    %p110 = por %p108, %p109
    %p111 = scmp.ne.s32.totalorder %s103, %s106
    %p112 = scmp.eq.s32.totalorder %s9, 0
    %p113 = por %p111, %p112
    %p114 = scmp.ne.s32.totalorder %s103, %s106
    %p115 = scmp.eq.s32.totalorder %s14, 1
    %p116 = por %p114, %p115
    %p117 = scmp.ne.s32.totalorder %s106, %s107
    %p118 = scmp.eq.s32.totalorder %s14, 0
    %p119 = por %p117, %p118
    %p120 = scmp.ne.s32.totalorder %s106, %s107
    %p121 = scmp.eq.s32.totalorder %s15, 1
    %p122 = por %p120, %p121
    %p124 = scmp.ne.s32.totalorder %s107, %s123
    %p125 = scmp.eq.s32.totalorder %s15, 0
    %p126 = por %p124, %p125
    %p127 = scmp.le.s32.totalorder 1, %s9
    %p128 = scmp.lt.s32.totalorder %s9, 3
    %p129 = pnand %p127, %p128
    %p130 = pneg %p129
    // Predicated region
    $region9: #{another_disc2d_forward.11} parent=5 // pred_check
      _
    $region10: #{another_disc2d_forward.11} parent=5 // pred_check_branch
      %132 = sbr.rel (%p129) target = $region12
    $region11: #{another_disc2d_forward.11} parent=5 // pred_region
      %s133 = ssub.s32 %s9, 1
      // Predicated region
      $region13: #{another_disc2d_forward.11} parent=11 // pred_check
        %p134 = pneg %p70
      $region14: #{another_disc2d_forward.11} parent=11 // pred_check_branch
        %136 = sbr.rel (%p134) target = $region16
      $region15: #{another_disc2d_forward.11} parent=11 // pred_region
        _
      $region16: #{another_disc2d_forward.11} parent=11 // pred_fallthru
        _
      // Predicated region
      $region17: #{another_disc2d_forward.11} parent=11 // pred_check
        %p137 = pneg %p91
      $region18: #{another_disc2d_forward.11} parent=11 // pred_check_branch
        %139 = sbr.rel (%p137) target = $region20
      $region19: #{another_disc2d_forward.11} parent=11 // pred_region
        _
      $region20: #{another_disc2d_forward.11} parent=11 // pred_fallthru
        _
    $region12: #{another_disc2d_forward.11} parent=5 // pred_fallthru
      _
    %p140 = scmp.lt.s32.totalorder %s9, 2
    // Predicated region
    $region21: #{another_disc2d_forward.11} parent=5 // pred_check
      %p141 = pneg %p140
    $region22: #{another_disc2d_forward.11} parent=5 // pred_check_branch
      %143 = sbr.rel (%p141) target = $region24
    $region23: #{another_disc2d_forward.11} parent=5 // pred_region
      // Predicated region
      $region25: #{another_disc2d_forward.11} parent=23 // pred_check
        %p144 = pneg %p43
      $region26: #{another_disc2d_forward.11} parent=23 // pred_check_branch
        %146 = sbr.rel (%p144) target = $region28
      $region27: #{another_disc2d_forward.11} parent=23 // pred_region
        %s147 = smul.u32 3, %s17
        %p148 = scmp.lt.s32.totalorder %s16, 1
        %s149 = scalar_select %p148, %s16, 1
        %p150 = scmp.lt.s32.totalorder %s147, 2
        %s151 = scalar_select %p150, %s147, 2
        %s152 = smul.addr %s151, 3
        %s153 = smul.addr %s149, 9
        %s154 = sadd.s32 %s152, %s153
        %s155 = smul.addr %s154, 8
        %s156 = scalar_lea.vmem %s0, %s155
        %s157 = smul.u32 3, %s17
      $region28: #{another_disc2d_forward.11} parent=23 // pred_fallthru
        _
    $region24: #{another_disc2d_forward.11} parent=5 // pred_fallthru
      _
    %p158 = scmp.le.s32.totalorder 1, %s9
    %p159 = scmp.lt.s32.totalorder %s9, 3
    %p160 = pnand %p158, %p159
    %p161 = pneg %p160
    // Predicated region
    $region29: #{another_disc2d_forward.11} parent=5 // pred_check
      _
    $region30: #{another_disc2d_forward.11} parent=5 // pred_check_branch
      %163 = sbr.rel (%p160) target = $region32
    $region31: #{another_disc2d_forward.11} parent=5 // pred_region
      %s164 = ssub.s32 %s9, 1
      %s165 = smul.u32 3, %s19
      %p166 = scmp.lt.s32.totalorder %s18, 1
      %s167 = scalar_select %p166, %s18, 1
      %p168 = scmp.lt.s32.totalorder %s165, 2
      %s169 = scalar_select %p168, %s165, 2
      %s170 = smul.addr %s169, 3
      %s171 = smul.addr %s167, 9
      %s172 = sadd.s32 %s170, %s171
      %s173 = smul.addr %s172, 8
      %s174 = scalar_lea.vmem %s0, %s173
      %p175 = pneg %p49
      %p176 = pneg %p46
      %p177 = pneg %p70
      %p178 = pneg %p67
      %p179 = pneg %p91
      %p180 = pneg %p88
      %p181 = pneg %p119
      %p182 = pneg %p116
      %s183 = smul.u32 3, %s19
      %p184 = scmp.lt.s32.totalorder %s18, 1
      %s185 = scalar_select %p184, %s18, 1
      %p186 = scmp.lt.s32.totalorder %s183, 2
      %s187 = scalar_select %p186, %s183, 2
      %s188 = smul.addr %s185, 3
      %s189 = sadd.s32 %s187, %s188
      %s190 = smul.addr %s189, 8
      %s191 = scalar_lea.vmem %s3, %s190
      %s192 = smul.u32 3, %s19
      %p193 = scmp.lt.s32.totalorder %s18, 1
      %s194 = scalar_select %p193, %s18, 1
      %p195 = scmp.lt.s32.totalorder %s192, 2
      %s196 = scalar_select %p195, %s192, 2
      %s197 = smul.addr %s196, 3
      %s198 = smul.addr %s194, 9
      %s199 = sadd.s32 %s197, %s198
      %s200 = smul.addr %s199, 8
      %s201 = scalar_lea.vmem %s0, %s200
      %s202 = smul.u32 3, %s19
      %s203 = smul.u32 3, %s19
      %p204 = scmp.lt.s32.totalorder %s18, 1
      %s205 = scalar_select %p204, %s18, 1
      %p206 = scmp.lt.s32.totalorder %s203, 2
      %s207 = scalar_select %p206, %s203, 2
      %s208 = smul.addr %s205, 3
      %s209 = sadd.s32 %s207, %s208
      %s210 = smul.addr %s209, 8
      %s211 = scalar_lea.vmem %s3, %s210
      %s212 = smul.u32 3, %s19
      %v213 = vld [vmem:[%s201] sm:$0xff]
      %v214 = vld [vmem:[%s201 + $0x8] sm:$0xff]
      %v215 = vld [vmem:[%s201 + $0x10] sm:$0xff]
      %v216 = vld [vmem:[%s201 + $0x18] sm:$0xff]
      %v217 = vld [vmem:[%s201 + $0x20] sm:$0xff]
      %v218 = vld [vmem:[%s201 + $0x28] sm:$0xff]
      %v219 = vld [vmem:[%s201 + $0x30] sm:$0xff]
      %v220 = vld [vmem:[%s201 + $0x38] sm:$0xff]
      %v221 = vld [vmem:[%s201 + $0x40] sm:$0xff]
      %v222 = vld [vmem:[%s1] sm:$0xff]
      %v223 = vld [vmem:[%s1 + $0x8] sm:$0xff]
      %v224 = vld [vmem:[%s1 + $0x10] sm:$0xff]
      %v225 = vld [vmem:[%s1 + $0x18] sm:$0xff]
      %v226 = vld [vmem:[%s1 + $0x20] sm:$0xff]
      %v227 = vld [vmem:[%s1 + $0x28] sm:$0xff]
      %v228 = vld [vmem:[%s1 + $0x30] sm:$0xff]
      %v229 = vld [vmem:[%s1 + $0x38] sm:$0xff]
      %v230 = vld [vmem:[%s1 + $0x40] sm:$0xff]
      %v231 = vld [vmem:[%s1 + $0x48] sm:$0xff]
      %v232 = vld [vmem:[%s1 + $0x50] sm:$0xff]
      %v233 = vld [vmem:[%s1 + $0x58] sm:$0xff]
      %v234 = vld [vmem:[%s1 + $0x60] sm:$0xff]
      %v235 = vld [vmem:[%s1 + $0x68] sm:$0xff]
      %v236 = vld [vmem:[%s1 + $0x70] sm:$0xff]
      %v237 = vld [vmem:[%s1 + $0x78] sm:$0xff]
      %v238 = vld [vmem:[%s1 + $0x80] sm:$0xff]
      %v239 = vld [vmem:[%s1 + $0x88] sm:$0xff]
      %v240 = vld [vmem:[%s1 + $0x90] sm:$0xff]
      %v241 = vld [vmem:[%s1 + $0x98] sm:$0xff]
      %v242 = vld [vmem:[%s1 + $0xa0] sm:$0xff]
      %v243 = vld [vmem:[%s1 + $0xa8] sm:$0xff]
      %v244 = vld [vmem:[%s1 + $0xb0] sm:$0xff]
      %v245 = vld [vmem:[%s1 + $0xb8] sm:$0xff]
      %v246 = vld [vmem:[%s1 + $0xc0] sm:$0xff]
      %v247 = vld [vmem:[%s1 + $0xc8] sm:$0xff]
      %v248 = vld [vmem:[%s1 + $0xd0] sm:$0xff]
      %v249 = vld [vmem:[%s1 + $0xd8] sm:$0xff]
      %v250 = vld [vmem:[%s1 + $0xe0] sm:$0xff]
      %v251 = vld [vmem:[%s1 + $0xe8] sm:$0xff]
      %v252 = vld [vmem:[%s1 + $0xf0] sm:$0xff]
      %v253 = vld [vmem:[%s1 + $0xf8] sm:$0xff]
      %v254 = vld [vmem:[%s1 + $0x100] sm:$0xff]
      %v255 = vld [vmem:[%s1 + $0x108] sm:$0xff]
      %v256 = vld [vmem:[%s1 + $0x110] sm:$0xff]
      %v257 = vld [vmem:[%s1 + $0x118] sm:$0xff]
      %v258 = vld [vmem:[%s1 + $0x120] sm:$0xff]
      %v259 = vld [vmem:[%s1 + $0x128] sm:$0xff]
      %v260 = vld [vmem:[%s1 + $0x130] sm:$0xff]
      %v261 = vld [vmem:[%s1 + $0x138] sm:$0xff]
      %v262 = vld [vmem:[%s1 + $0x140] sm:$0xff]
      %v263 = vld [vmem:[%s1 + $0x148] sm:$0xff]
      %v264 = vld [vmem:[%s1 + $0x150] sm:$0xff]
      %v265 = vld [vmem:[%s1 + $0x158] sm:$0xff]
      %v266 = vld [vmem:[%s1 + $0x160] sm:$0xff]
      %v267 = vld [vmem:[%s1 + $0x168] sm:$0xff]
      %v268 = vld [vmem:[%s1 + $0x170] sm:$0xff]
      %v269 = vld [vmem:[%s1 + $0x178] sm:$0xff]
      %v270 = vld [vmem:[%s2] sm:$0x1]
      %v272 = vlaneseq
      %v273 = vshrl.u32 %v272, 7
      %v274 = vsub.s32 0, %v273
      %v275 = vrot.slane %v270, %v274
      %277 = vmatprep.subr.mxu0 0.0
      %278 = vmatpush1.msra.mxu0 %v222
      %279 = vmatprep.subr.mxu0 0.0
      %280 = vmatpush1.msra.mxu0 %v223
      %281 = vmatprep.subr.mxu0 0.0
      %282 = vmatpush1.msra.mxu0 %v224
      %283 = vmatprep.subr.mxu0 0.0
      %284 = vmatpush1.msra.mxu0 %v225
      %285 = vmatprep.subr.mxu0 0.0
      %286 = vmatpush1.msra.mxu0 %v226
      %287 = vmatprep.subr.mxu0 0.0
      %288 = vmatpush1.msra.mxu0 %v227
      %289 = vmatprep.subr.mxu0 0.0
      %290 = vmatpush1.msra.mxu0 %v228
      %291 = vmatprep.subr.mxu0 0.0
      %292 = vmatpush1.msra.mxu0 %v229
      %293 = vmatprep.subr.mxu0 0.0
      %294 = vmatpush1.msra.mxu0 %v230
      %295 = vmatprep.subr.mxu0 0.0
      %296 = vmatpush1.msra.mxu0 %v231
      %297 = vmatprep.subr.mxu0 0.0
      %298 = vmatpush1.msra.mxu0 %v232
      %299 = vmatprep.subr.mxu0 0.0
      %300 = vmatpush1.msra.mxu0 %v233
      %301 = vmatprep.subr.mxu0 0.0
      %302 = vmatpush1.msra.mxu0 %v234
      %303 = vmatprep.subr.mxu0 0.0
      %304 = vmatpush1.msra.mxu0 %v235
      %305 = vmatprep.subr.mxu0 0.0
      %306 = vmatpush1.msra.mxu0 %v236
      %307 = vmatprep.subr.mxu0 0.0
      %308 = vmatpush1.msra.mxu0 %v237
      %309 = vmatprep.subr.mxu0 0.0
      %310 = vmatpush1.msra.mxu0 %v238
      %311 = vmatprep.subr.mxu0 0.0
      %312 = vmatpush1.msra.mxu0 %v239
      %313 = vmatprep.subr.mxu0 0.0
      %314 = vmatpush1.msra.mxu0 %v240
      %315 = vmatprep.subr.mxu0 0.0
      %316 = vmatpush1.msra.mxu0 %v241
      %317 = vmatprep.subr.mxu0 0.0
      %318 = vmatpush1.msra.mxu0 %v242
      %319 = vmatprep.subr.mxu0 0.0
      %320 = vmatpush1.msra.mxu0 %v243
      %321 = vmatprep.subr.mxu0 0.0
      %322 = vmatpush1.msra.mxu0 %v244
      %323 = vmatprep.subr.mxu0 0.0
      %324 = vmatpush1.msra.mxu0 %v245
      %325 = vmatprep.subr.mxu0 0.0
      %326 = vmatpush1.msra.mxu0 %v246
      %327 = vmatprep.subr.mxu0 0.0
      %328 = vmatpush1.msra.mxu0 %v247
      %329 = vmatprep.subr.mxu0 0.0
      %330 = vmatpush1.msra.mxu0 %v248
      %331 = vmatprep.subr.mxu0 0.0
      %332 = vmatpush1.msra.mxu0 %v249
      %333 = vmatprep.subr.mxu0 0.0
      %334 = vmatpush1.msra.mxu0 %v250
      %335 = vmatprep.subr.mxu0 0.0
      %336 = vmatpush1.msra.mxu0 %v251
      %337 = vmatprep.subr.mxu0 0.0
      %338 = vmatpush1.msra.mxu0 %v252
      %339 = vmatprep.subr.mxu0 0.0
      %340 = vmatpush1.msra.mxu0 %v253
      %341 = vmatprep.mubr.f32.mxu0 %v214
      %342 = vmatmul.mubr.f32.gmra.mrb[0].mxu0 %v213
      %v343 = vpop.f32.mrb[0].mxu0
      %v344 = vadd.f32 %v275, %v343
      %v345 = vpop.f32.mrb[0].mxu0
      %346 = vmatprep.mubr.f32.mxu0 %v217
      %347 = vmatmul.mubr.f32.gmra.mrb[0].mxu0 %v216
      %v348 = vpop.f32.mrb[0].mxu0
      %v349 = vadd.f32 %v275, %v348
      %v350 = vpop.f32.mrb[0].mxu0
      %351 = vmatprep.mubr.f32.mxu0 %v220
      %352 = vmatmul.mubr.f32.gmra.mrb[0].mxu0 %v219
      %v353 = vpop.f32.mrb[0].mxu0
      %v354 = vadd.f32 %v275, %v353
      %v355 = vpop.f32.mrb[0].mxu0
      %356 = vdwg.mxu0
      %357 = vmatprep.subr.mxu0 0.0
      %358 = vmatpush1.msra.mxu0 %v254
      %359 = vmatprep.subr.mxu0 0.0
      %360 = vmatpush1.msra.mxu0 %v255
      %361 = vmatprep.subr.mxu0 0.0
      %362 = vmatpush1.msra.mxu0 %v256
      %363 = vmatprep.subr.mxu0 0.0
      %364 = vmatpush1.msra.mxu0 %v257
      %365 = vmatprep.subr.mxu0 0.0
      %366 = vmatpush1.msra.mxu0 %v258
      %367 = vmatprep.subr.mxu0 0.0
      %368 = vmatpush1.msra.mxu0 %v259
      %369 = vmatprep.subr.mxu0 0.0
      %370 = vmatpush1.msra.mxu0 %v260
      %371 = vmatprep.subr.mxu0 0.0
      %372 = vmatpush1.msra.mxu0 %v261
      %373 = vmatprep.subr.mxu0 0.0
      %374 = vmatpush1.msra.mxu0 %v262
      %375 = vmatprep.subr.mxu0 0.0
      %376 = vmatpush1.msra.mxu0 %v263
      %377 = vmatprep.subr.mxu0 0.0
      %378 = vmatpush1.msra.mxu0 %v264
      %379 = vmatprep.subr.mxu0 0.0
      %380 = vmatpush1.msra.mxu0 %v265
      %381 = vmatprep.subr.mxu0 0.0
      %382 = vmatpush1.msra.mxu0 %v266
      %383 = vmatprep.subr.mxu0 0.0
      %384 = vmatpush1.msra.mxu0 %v267
      %385 = vmatprep.subr.mxu0 0.0
      %386 = vmatpush1.msra.mxu0 %v268
      %387 = vmatprep.subr.mxu0 0.0
      %388 = vmatpush1.msra.mxu0 %v269
      %389 = vmatprep.subr.mxu0 0.0
      %390 = vmatpush1.msra.mxu0 0.0
      %391 = vmatprep.subr.mxu0 0.0
      %392 = vmatpush1.msra.mxu0 0.0
      %393 = vmatprep.subr.mxu0 0.0
      %394 = vmatpush1.msra.mxu0 0.0
      %395 = vmatprep.subr.mxu0 0.0
      %396 = vmatpush1.msra.mxu0 0.0
      %397 = vmatprep.subr.mxu0 0.0
      %398 = vmatpush1.msra.mxu0 0.0
      %399 = vmatprep.subr.mxu0 0.0
      %400 = vmatpush1.msra.mxu0 0.0
      %401 = vmatprep.subr.mxu0 0.0
      %402 = vmatpush1.msra.mxu0 0.0
      %403 = vmatprep.subr.mxu0 0.0
      %404 = vmatpush1.msra.mxu0 0.0
      %405 = vmatprep.subr.mxu0 0.0
      %406 = vmatpush1.msra.mxu0 0.0
      %407 = vmatprep.subr.mxu0 0.0
      %408 = vmatpush1.msra.mxu0 0.0
      %409 = vmatprep.subr.mxu0 0.0
      %410 = vmatpush1.msra.mxu0 0.0
      %411 = vmatprep.subr.mxu0 0.0
      %412 = vmatpush1.msra.mxu0 0.0
      %413 = vmatprep.subr.mxu0 0.0
      %414 = vmatpush1.msra.mxu0 0.0
      %415 = vmatprep.subr.mxu0 0.0
      %416 = vmatpush1.msra.mxu0 0.0
      %417 = vmatprep.subr.mxu0 0.0
      %418 = vmatpush1.msra.mxu0 0.0
      %419 = vmatprep.subr.mxu0 0.0
      %420 = vmatpush1.msra.mxu0 0.0
      %421 = vmatprep.mubr.f32.mxu0 0.0
      %422 = vmatmul.mubr.f32.gmra.mrb[0].mxu0 %v215
      %v423 = vpop.f32.mrb[0].mxu0
      %v424 = vadd.f32 %v344, %v423
      %v425 = vpop.f32.mrb[0].mxu0
      %426 = vmatprep.mubr.f32.mxu0 0.0
      %427 = vmatmul.mubr.f32.gmra.mrb[0].mxu0 %v218
      %v428 = vpop.f32.mrb[0].mxu0
      %v429 = vadd.f32 %v349, %v428
      %v430 = vpop.f32.mrb[0].mxu0
      %431 = vmatprep.mubr.f32.mxu0 0.0
      %432 = vmatmul.mubr.f32.gmra.mrb[0].mxu0 %v221
      %v433 = vpop.f32.mrb[0].mxu0
      %v434 = vadd.f32 %v354, %v433
      %v435 = vpop.f32.mrb[0].mxu0
      %436 = vdwg.mxu0
      %v437 = vmax.f32 %v424, 0.0
      %v438 = vmax.f32 %v429, 0.0
      %v439 = vmax.f32 %v434, 0.0
      %440 = vst [vmem:[%s211] sm:$0xff] %v437
      %441 = vst [vmem:[%s211 + $0x8] sm:$0xff] %v438
      %442 = vst [vmem:[%s211 + $0x10] sm:$0xff] %v439
      %s443 = smul.u32 3, %s19
      %p444 = scmp.lt.s32.totalorder %s18, 1
      %s445 = scalar_select %p444, %s18, 1
      %p446 = scmp.lt.s32.totalorder %s443, 2
      %s447 = scalar_select %p446, %s443, 2
      %s448 = smul.addr %s445, 3
      %s449 = sadd.s32 %s447, %s448
      %s450 = smul.addr %s449, 8
      %s451 = scalar_lea.vmem %s3, %s450
      // Predicated region
      $region33: #{another_disc2d_forward.11} parent=31 // pred_check
        %p452 = pneg %p116
      $region34: #{another_disc2d_forward.11} parent=31 // pred_check_branch
        %454 = sbr.rel (%p452) target = $region36
      $region35: #{another_disc2d_forward.11} parent=31 // pred_region
        %s455 = smul.u32 3, %s19
      $region36: #{another_disc2d_forward.11} parent=31 // pred_fallthru
        _
    $region32: #{another_disc2d_forward.11} parent=5 // pred_fallthru
      _
    %p456 = scmp.le.s32.totalorder 2, %s9
    // Predicated region
    $region37: #{another_disc2d_forward.11} parent=5 // pred_check
      %p457 = pneg %p456
    $region38: #{another_disc2d_forward.11} parent=5 // pred_check_branch
      %459 = sbr.rel (%p457) target = $region40
    $region39: #{another_disc2d_forward.11} parent=5 // pred_region
      %s460 = ssub.s32 %s9, 2
      // Predicated region
      $region41: #{another_disc2d_forward.11} parent=39 // pred_check
        %p461 = pneg %p122
      $region42: #{another_disc2d_forward.11} parent=39 // pred_check_branch
        %463 = sbr.rel (%p461) target = $region44
      $region43: #{another_disc2d_forward.11} parent=39 // pred_region
        %s464 = smul.u32 3, %s21
        %p465 = scmp.lt.s32.totalorder %s20, 1
        %s466 = scalar_select %p465, %s20, 1
        %p467 = scmp.lt.s32.totalorder %s464, 2
        %s468 = scalar_select %p467, %s464, 2
        %s469 = smul.addr %s466, 3
        %s470 = sadd.s32 %s468, %s469
        %s471 = smul.addr %s470, 8
        %s472 = scalar_lea.vmem %s3, %s471
      $region44: #{another_disc2d_forward.11} parent=39 // pred_fallthru
        _
    $region40: #{another_disc2d_forward.11} parent=5 // pred_fallthru
      _
  $region6: #{another_disc2d_forward.11} parent=0 // loop_footer
    %s13 = sadd.s32 1, %s9
  $region7: #{another_disc2d_forward.11} parent=0 // loop_footer_branch
    %8 = sbr.rel target = $region3
  $region8: #{another_disc2d_forward.11} parent=0 // loop_exit
    _

// kernel: another_disc2d_forward.12
$region0: #{another_disc2d_forward.12}
  #allocation0 [shape = 'u32[]', space=smem, size = 0x4, offset = 0x4, fixed_abs, tag = 'smem constant byte address 0x4 - core index']
  #allocation1 [shape = 'u32[144,128]{1,0:T(1,128)}', space=vmem, size = 0x12000, scoped, tag = 'internal scratch']
  %s0 = inlined_call_operand.vmem [shape: f32[2,8,768], index: 0, kind: input, shape index: {}]
  %s1 = inlined_call_operand.vmem [shape: f32[768,128], index: 1, kind: input, shape index: {}]
  %s2 = inlined_call_operand.vmem [shape: f32[1,128], index: 2, kind: input, shape index: {}]
  %s3 = inlined_call_operand.vmem [shape: f32[2,8,128], index: 3, kind: output, shape index: {}]
  %s4 = sld [smem:[#allocation0]]
  $region45: #{another_disc2d_forward.12} parent=0
    _
  %s6 = ssub.s32 1, %s4
  %s7 = scalar_select 0, %s6, %s4
  loop: start=0, step=1, limit=4
  $region2: #{another_disc2d_forward.12} parent=0 // loop_pre_header
    _
  $region3: #{another_disc2d_forward.12} parent=0 // loop_header
    %s9 = sphi 0, %s13
    %p10 = scmp.ge.s32.totalorder %s9, 4
    %s16 = sphi 0, %s28
    %s17 = sphi 0, %s24
    %s18 = sphi 0, %s16
    %s19 = sphi 0, %s17
    %s20 = sphi 0, %s18
    %s21 = sphi 0, %s19
    %s33 = sphi 0, %s35
    %s36 = sphi 0, %s33
    %s37 = sphi 0, %s36
    %s53 = sphi 0, %s37
    %s57 = sphi 0, %s57
    %s59 = sphi 0, %s57
    %s60 = sphi 0, %s59
    %s74 = sphi 0, %s60
    %s78 = sphi 0, %s78
    %s80 = sphi 0, %s78
    %s81 = sphi 0, %s80
    %s95 = sphi 0, %s81
    %s103 = sphi 0, %s105
    %s106 = sphi 0, %s103
    %s107 = sphi 0, %s106
    %s123 = sphi 0, %s107
  $region4: #{another_disc2d_forward.12} parent=0 // loop_header_branch
    %12 = sbr.rel (%p10) target = $region8
  $region5: #{another_disc2d_forward.12} parent=0 // loop_body
    %s14 = ssub.s32 %s9, 1
    %s15 = ssub.s32 %s9, 2
    %s22 = sadd.s32 1, %s17
    %p23 = scmp.ge.s32.totalorder %s22, 1
    %s24 = scalar_select %p23, 0, %s22
    %s25 = sadd.s32 1, %s16
    %s26 = scalar_select %p23, %s25, %s16
    %p27 = scmp.ge.s32.totalorder %s26, 2
    %s28 = scalar_select %p27, 0, %s26
    %s29 = ssub.s32 %s16, %s28
    %s30 = ssub.s32 %s17, %s24
    %s31 = sor.u32 %s29, %s30
    %p32 = scmp.eq.s32.totalorder %s31, 0
    %s34 = sadd.s32 %s33, 1
    %s35 = scalar_select %p32, %s33, %s34
    %p38 = pneg %p32
    %p39 = scmp.eq.s32.totalorder %s9, 1
    %p40 = por %p38, %p39
    %p41 = scmp.ne.s32.totalorder %s33, %s36
    %p42 = scmp.eq.s32.totalorder %s9, 0
    %p43 = por %p41, %p42
    %p44 = scmp.ne.s32.totalorder %s33, %s36
    %p45 = scmp.eq.s32.totalorder %s14, 1
    %p46 = por %p44, %p45
    %p47 = scmp.ne.s32.totalorder %s36, %s37
    %p48 = scmp.eq.s32.totalorder %s14, 0
    %p49 = por %p47, %p48
    %p50 = scmp.ne.s32.totalorder %s36, %s37
    %p51 = scmp.eq.s32.totalorder %s15, 1
    %p52 = por %p50, %p51
    %p54 = scmp.ne.s32.totalorder %s37, %s53
    %p55 = scmp.eq.s32.totalorder %s15, 0
    %p56 = por %p54, %p55
    %s58 = sadd.s32 %s57, 1
    %p61 = scmp.eq.s32.totalorder %s9, 1
    %p62 = scmp.ne.s32.totalorder %s57, %s59
    %p63 = scmp.eq.s32.totalorder %s9, 0
    %p64 = por %p62, %p63
    %p65 = scmp.ne.s32.totalorder %s57, %s59
    %p66 = scmp.eq.s32.totalorder %s14, 1
    %p67 = por %p65, %p66
    %p68 = scmp.ne.s32.totalorder %s59, %s60
    %p69 = scmp.eq.s32.totalorder %s14, 0
    %p70 = por %p68, %p69
    %p71 = scmp.ne.s32.totalorder %s59, %s60
    %p72 = scmp.eq.s32.totalorder %s15, 1
    %p73 = por %p71, %p72
    %p75 = scmp.ne.s32.totalorder %s60, %s74
    %p76 = scmp.eq.s32.totalorder %s15, 0
    %p77 = por %p75, %p76
    %s79 = sadd.s32 %s78, 1
    %p82 = scmp.eq.s32.totalorder %s9, 1
    %p83 = scmp.ne.s32.totalorder %s78, %s80
    %p84 = scmp.eq.s32.totalorder %s9, 0
    %p85 = por %p83, %p84
    %p86 = scmp.ne.s32.totalorder %s78, %s80
    %p87 = scmp.eq.s32.totalorder %s14, 1
    %p88 = por %p86, %p87
    %p89 = scmp.ne.s32.totalorder %s80, %s81
    %p90 = scmp.eq.s32.totalorder %s14, 0
    %p91 = por %p89, %p90
    %p92 = scmp.ne.s32.totalorder %s80, %s81
    %p93 = scmp.eq.s32.totalorder %s15, 1
    %p94 = por %p92, %p93
    %p96 = scmp.ne.s32.totalorder %s81, %s95
    %p97 = scmp.eq.s32.totalorder %s15, 0
    %p98 = por %p96, %p97
    %s99 = ssub.s32 %s16, %s28
    %s100 = ssub.s32 %s17, %s24
    %s101 = sor.u32 %s99, %s100
    %p102 = scmp.eq.s32.totalorder %s101, 0
    %s104 = sadd.s32 %s103, 1
    %s105 = scalar_select %p102, %s103, %s104
    %p108 = pneg %p102
    %p109 = scmp.eq.s32.totalorder %s9, 1
    %p110 = por %p108, %p109
    %p111 = scmp.ne.s32.totalorder %s103, %s106
    %p112 = scmp.eq.s32.totalorder %s9, 0
    %p113 = por %p111, %p112
    %p114 = scmp.ne.s32.totalorder %s103, %s106
    %p115 = scmp.eq.s32.totalorder %s14, 1
    %p116 = por %p114, %p115
    %p117 = scmp.ne.s32.totalorder %s106, %s107
    %p118 = scmp.eq.s32.totalorder %s14, 0
    %p119 = por %p117, %p118
    %p120 = scmp.ne.s32.totalorder %s106, %s107
    %p121 = scmp.eq.s32.totalorder %s15, 1
    %p122 = por %p120, %p121
    %p124 = scmp.ne.s32.totalorder %s107, %s123
    %p125 = scmp.eq.s32.totalorder %s15, 0
    %p126 = por %p124, %p125
    %p127 = scmp.le.s32.totalorder 1, %s9
    %p128 = scmp.lt.s32.totalorder %s9, 3
    %p129 = pnand %p127, %p128
    %p130 = pneg %p129
    // Predicated region
    $region9: #{another_disc2d_forward.12} parent=5 // pred_check
      _
    $region10: #{another_disc2d_forward.12} parent=5 // pred_check_branch
      %132 = sbr.rel (%p129) target = $region12
    $region11: #{another_disc2d_forward.12} parent=5 // pred_region
      %s133 = ssub.s32 %s9, 1
      // Predicated region
      $region13: #{another_disc2d_forward.12} parent=11 // pred_check
        %p134 = pneg %p70
      $region14: #{another_disc2d_forward.12} parent=11 // pred_check_branch
        %136 = sbr.rel (%p134) target = $region16
      $region15: #{another_disc2d_forward.12} parent=11 // pred_region
        _
      $region16: #{another_disc2d_forward.12} parent=11 // pred_fallthru
        _
      // Predicated region
      $region17: #{another_disc2d_forward.12} parent=11 // pred_check
        %p137 = pneg %p91
      $region18: #{another_disc2d_forward.12} parent=11 // pred_check_branch
        %139 = sbr.rel (%p137) target = $region20
      $region19: #{another_disc2d_forward.12} parent=11 // pred_region
        _
      $region20: #{another_disc2d_forward.12} parent=11 // pred_fallthru
        _
    $region12: #{another_disc2d_forward.12} parent=5 // pred_fallthru
      _
    %p140 = scmp.lt.s32.totalorder %s9, 2
    // Predicated region
    $region21: #{another_disc2d_forward.12} parent=5 // pred_check
      %p141 = pneg %p140
    $region22: #{another_disc2d_forward.12} parent=5 // pred_check_branch
      %143 = sbr.rel (%p141) target = $region24
    $region23: #{another_disc2d_forward.12} parent=5 // pred_region
      // Predicated region
      $region25: #{another_disc2d_forward.12} parent=23 // pred_check
        %p144 = pneg %p43
      $region26: #{another_disc2d_forward.12} parent=23 // pred_check_branch
        %146 = sbr.rel (%p144) target = $region28
      $region27: #{another_disc2d_forward.12} parent=23 // pred_region
        %p147 = scmp.lt.s32.totalorder %s16, 1
        %s148 = scalar_select %p147, %s16, 1
        %p149 = scmp.lt.s32.totalorder %s17, 0
        %s150 = scalar_select %p149, %s17, 0
        %s151 = smul.addr %s150, 6
        %s152 = smul.addr %s148, 6
        %s153 = sadd.s32 %s151, %s152
        %s154 = smul.addr %s153, 8
        %s155 = scalar_lea.vmem %s0, %s154
      $region28: #{another_disc2d_forward.12} parent=23 // pred_fallthru
        _
    $region24: #{another_disc2d_forward.12} parent=5 // pred_fallthru
      _
    %p156 = scmp.le.s32.totalorder 1, %s9
    %p157 = scmp.lt.s32.totalorder %s9, 3
    %p158 = pnand %p156, %p157
    %p159 = pneg %p158
    // Predicated region
    $region29: #{another_disc2d_forward.12} parent=5 // pred_check
      _
    $region30: #{another_disc2d_forward.12} parent=5 // pred_check_branch
      %161 = sbr.rel (%p158) target = $region32
    $region31: #{another_disc2d_forward.12} parent=5 // pred_region
      %s162 = ssub.s32 %s9, 1
      %p163 = scmp.lt.s32.totalorder %s18, 1
      %s164 = scalar_select %p163, %s18, 1
      %p165 = scmp.lt.s32.totalorder %s19, 0
      %s166 = scalar_select %p165, %s19, 0
      %s167 = smul.addr %s166, 6
      %s168 = smul.addr %s164, 6
      %s169 = sadd.s32 %s167, %s168
      %s170 = smul.addr %s169, 8
      %s171 = scalar_lea.vmem %s0, %s170
      %p172 = pneg %p49
      %p173 = pneg %p46
      %p174 = pneg %p70
      %p175 = pneg %p67
      %p176 = pneg %p91
      %p177 = pneg %p88
      %p178 = pneg %p119
      %p179 = pneg %p116
      %p180 = scmp.lt.s32.totalorder %s18, 1
      %s181 = scalar_select %p180, %s18, 1
      %p182 = scmp.lt.s32.totalorder %s19, 0
      %s183 = scalar_select %p182, %s19, 0
      %s184 = sadd.s32 %s183, %s181
      %s185 = smul.addr %s184, 8
      %s186 = scalar_lea.vmem %s3, %s185
      %p187 = scmp.lt.s32.totalorder %s18, 1
      %s188 = scalar_select %p187, %s18, 1
      %p189 = scmp.lt.s32.totalorder %s19, 0
      %s190 = scalar_select %p189, %s19, 0
      %s191 = smul.addr %s190, 6
      %s192 = smul.addr %s188, 6
      %s193 = sadd.s32 %s191, %s192
      %s194 = smul.addr %s193, 8
      %s195 = scalar_lea.vmem %s0, %s194
      %p196 = scmp.lt.s32.totalorder %s18, 1
      %s197 = scalar_select %p196, %s18, 1
      %p198 = scmp.lt.s32.totalorder %s19, 0
      %s199 = scalar_select %p198, %s19, 0
      %s200 = sadd.s32 %s199, %s197
      %s201 = smul.addr %s200, 8
      %s202 = scalar_lea.vmem %s3, %s201
      %v203 = vld [vmem:[%s195] sm:$0xff]
      %v204 = vld [vmem:[%s195 + $0x8] sm:$0xff]
      %v205 = vld [vmem:[%s195 + $0x10] sm:$0xff]
      %v206 = vld [vmem:[%s195 + $0x18] sm:$0xff]
      %v207 = vld [vmem:[%s195 + $0x20] sm:$0xff]
      %v208 = vld [vmem:[%s195 + $0x28] sm:$0xff]
      %v209 = vld [vmem:[%s1] sm:$0xff]
      %v210 = vld [vmem:[%s1 + $0x8] sm:$0xff]
      %v211 = vld [vmem:[%s1 + $0x10] sm:$0xff]
      %v212 = vld [vmem:[%s1 + $0x18] sm:$0xff]
      %v213 = vld [vmem:[%s1 + $0x20] sm:$0xff]
      %v214 = vld [vmem:[%s1 + $0x28] sm:$0xff]
      %v215 = vld [vmem:[%s1 + $0x30] sm:$0xff]
      %v216 = vld [vmem:[%s1 + $0x38] sm:$0xff]
      %v217 = vld [vmem:[%s1 + $0x40] sm:$0xff]
      %v218 = vld [vmem:[%s1 + $0x48] sm:$0xff]
      %v219 = vld [vmem:[%s1 + $0x50] sm:$0xff]
      %v220 = vld [vmem:[%s1 + $0x58] sm:$0xff]
      %v221 = vld [vmem:[%s1 + $0x60] sm:$0xff]
      %v222 = vld [vmem:[%s1 + $0x68] sm:$0xff]
      %v223 = vld [vmem:[%s1 + $0x70] sm:$0xff]
      %v224 = vld [vmem:[%s1 + $0x78] sm:$0xff]
      %v225 = vld [vmem:[%s1 + $0x80] sm:$0xff]
      %v226 = vld [vmem:[%s1 + $0x88] sm:$0xff]
      %v227 = vld [vmem:[%s1 + $0x90] sm:$0xff]
      %v228 = vld [vmem:[%s1 + $0x98] sm:$0xff]
      %v229 = vld [vmem:[%s1 + $0xa0] sm:$0xff]
      %v230 = vld [vmem:[%s1 + $0xa8] sm:$0xff]
      %v231 = vld [vmem:[%s1 + $0xb0] sm:$0xff]
      %v232 = vld [vmem:[%s1 + $0xb8] sm:$0xff]
      %v233 = vld [vmem:[%s1 + $0xc0] sm:$0xff]
      %v234 = vld [vmem:[%s1 + $0xc8] sm:$0xff]
      %v235 = vld [vmem:[%s1 + $0xd0] sm:$0xff]
      %v236 = vld [vmem:[%s1 + $0xd8] sm:$0xff]
      %v237 = vld [vmem:[%s1 + $0xe0] sm:$0xff]
      %v238 = vld [vmem:[%s1 + $0xe8] sm:$0xff]
      %v239 = vld [vmem:[%s1 + $0xf0] sm:$0xff]
      %v240 = vld [vmem:[%s1 + $0xf8] sm:$0xff]
      %v241 = vld [vmem:[%s1 + $0x100] sm:$0xff]
      %v242 = vld [vmem:[%s1 + $0x108] sm:$0xff]
      %v243 = vld [vmem:[%s1 + $0x110] sm:$0xff]
      %v244 = vld [vmem:[%s1 + $0x118] sm:$0xff]
      %v245 = vld [vmem:[%s1 + $0x120] sm:$0xff]
      %v246 = vld [vmem:[%s1 + $0x128] sm:$0xff]
      %v247 = vld [vmem:[%s1 + $0x130] sm:$0xff]
      %v248 = vld [vmem:[%s1 + $0x138] sm:$0xff]
      %v249 = vld [vmem:[%s1 + $0x140] sm:$0xff]
      %v250 = vld [vmem:[%s1 + $0x148] sm:$0xff]
      %v251 = vld [vmem:[%s1 + $0x150] sm:$0xff]
      %v252 = vld [vmem:[%s1 + $0x158] sm:$0xff]
      %v253 = vld [vmem:[%s1 + $0x160] sm:$0xff]
      %v254 = vld [vmem:[%s1 + $0x168] sm:$0xff]
      %v255 = vld [vmem:[%s1 + $0x170] sm:$0xff]
      %v256 = vld [vmem:[%s1 + $0x178] sm:$0xff]
      %v257 = vld [vmem:[%s1 + $0x180] sm:$0xff]
      %v258 = vld [vmem:[%s1 + $0x188] sm:$0xff]
      %v259 = vld [vmem:[%s1 + $0x190] sm:$0xff]
      %v260 = vld [vmem:[%s1 + $0x198] sm:$0xff]
      %v261 = vld [vmem:[%s1 + $0x1a0] sm:$0xff]
      %v262 = vld [vmem:[%s1 + $0x1a8] sm:$0xff]
      %v263 = vld [vmem:[%s1 + $0x1b0] sm:$0xff]
      %v264 = vld [vmem:[%s1 + $0x1b8] sm:$0xff]
      %v265 = vld [vmem:[%s1 + $0x1c0] sm:$0xff]
      %v266 = vld [vmem:[%s1 + $0x1c8] sm:$0xff]
      %v267 = vld [vmem:[%s1 + $0x1d0] sm:$0xff]
      %v268 = vld [vmem:[%s1 + $0x1d8] sm:$0xff]
      %v269 = vld [vmem:[%s1 + $0x1e0] sm:$0xff]
      %v270 = vld [vmem:[%s1 + $0x1e8] sm:$0xff]
      %v271 = vld [vmem:[%s1 + $0x1f0] sm:$0xff]
      %v272 = vld [vmem:[%s1 + $0x1f8] sm:$0xff]
      %v273 = vld [vmem:[%s1 + $0x200] sm:$0xff]
      %v274 = vld [vmem:[%s1 + $0x208] sm:$0xff]
      %v275 = vld [vmem:[%s1 + $0x210] sm:$0xff]
      %v276 = vld [vmem:[%s1 + $0x218] sm:$0xff]
      %v277 = vld [vmem:[%s1 + $0x220] sm:$0xff]
      %v278 = vld [vmem:[%s1 + $0x228] sm:$0xff]
      %v279 = vld [vmem:[%s1 + $0x230] sm:$0xff]
      %v280 = vld [vmem:[%s1 + $0x238] sm:$0xff]
      %v281 = vld [vmem:[%s1 + $0x240] sm:$0xff]
      %v282 = vld [vmem:[%s1 + $0x248] sm:$0xff]
      %v283 = vld [vmem:[%s1 + $0x250] sm:$0xff]
      %v284 = vld [vmem:[%s1 + $0x258] sm:$0xff]
      %v285 = vld [vmem:[%s1 + $0x260] sm:$0xff]
      %v286 = vld [vmem:[%s1 + $0x268] sm:$0xff]
      %v287 = vld [vmem:[%s1 + $0x270] sm:$0xff]
      %v288 = vld [vmem:[%s1 + $0x278] sm:$0xff]
      %v289 = vld [vmem:[%s1 + $0x280] sm:$0xff]
      %v290 = vld [vmem:[%s1 + $0x288] sm:$0xff]
      %v291 = vld [vmem:[%s1 + $0x290] sm:$0xff]
      %v292 = vld [vmem:[%s1 + $0x298] sm:$0xff]
      %v293 = vld [vmem:[%s1 + $0x2a0] sm:$0xff]
      %v294 = vld [vmem:[%s1 + $0x2a8] sm:$0xff]
      %v295 = vld [vmem:[%s1 + $0x2b0] sm:$0xff]
      %v296 = vld [vmem:[%s1 + $0x2b8] sm:$0xff]
      %v297 = vld [vmem:[%s1 + $0x2c0] sm:$0xff]
      %v298 = vld [vmem:[%s1 + $0x2c8] sm:$0xff]
      %v299 = vld [vmem:[%s1 + $0x2d0] sm:$0xff]
      %v300 = vld [vmem:[%s1 + $0x2d8] sm:$0xff]
      %v301 = vld [vmem:[%s1 + $0x2e0] sm:$0xff]
      %v302 = vld [vmem:[%s1 + $0x2e8] sm:$0xff]
      %v303 = vld [vmem:[%s1 + $0x2f0] sm:$0xff]
      %v304 = vld [vmem:[%s1 + $0x2f8] sm:$0xff]
      %v305 = vld [vmem:[%s2] sm:$0x1]
      %v307 = vlaneseq
      %v308 = vshrl.u32 %v307, 7
      %v309 = vsub.s32 0, %v308
      %v310 = vrot.slane %v305, %v309
      %312 = vmatprep.subr.mxu0 0.0
      %313 = vmatpush1.msra.mxu0 %v209
      %314 = vmatprep.subr.mxu0 0.0
      %315 = vmatpush1.msra.mxu0 %v210
      %316 = vmatprep.subr.mxu0 0.0
      %317 = vmatpush1.msra.mxu0 %v211
      %318 = vmatprep.subr.mxu0 0.0
      %319 = vmatpush1.msra.mxu0 %v212
      %320 = vmatprep.subr.mxu0 0.0
      %321 = vmatpush1.msra.mxu0 %v213
      %322 = vmatprep.subr.mxu0 0.0
      %323 = vmatpush1.msra.mxu0 %v214
      %324 = vmatprep.subr.mxu0 0.0
      %325 = vmatpush1.msra.mxu0 %v215
      %326 = vmatprep.subr.mxu0 0.0
      %327 = vmatpush1.msra.mxu0 %v216
      %328 = vmatprep.subr.mxu0 0.0
      %329 = vmatpush1.msra.mxu0 %v217
      %330 = vmatprep.subr.mxu0 0.0
      %331 = vmatpush1.msra.mxu0 %v218
      %332 = vmatprep.subr.mxu0 0.0
      %333 = vmatpush1.msra.mxu0 %v219
      %334 = vmatprep.subr.mxu0 0.0
      %335 = vmatpush1.msra.mxu0 %v220
      %336 = vmatprep.subr.mxu0 0.0
      %337 = vmatpush1.msra.mxu0 %v221
      %338 = vmatprep.subr.mxu0 0.0
      %339 = vmatpush1.msra.mxu0 %v222
      %340 = vmatprep.subr.mxu0 0.0
      %341 = vmatpush1.msra.mxu0 %v223
      %342 = vmatprep.subr.mxu0 0.0
      %343 = vmatpush1.msra.mxu0 %v224
      %344 = vmatprep.subr.mxu0 0.0
      %345 = vmatpush1.msra.mxu0 %v225
      %346 = vmatprep.subr.mxu0 0.0
      %347 = vmatpush1.msra.mxu0 %v226
      %348 = vmatprep.subr.mxu0 0.0
      %349 = vmatpush1.msra.mxu0 %v227
      %350 = vmatprep.subr.mxu0 0.0
      %351 = vmatpush1.msra.mxu0 %v228
      %352 = vmatprep.subr.mxu0 0.0
      %353 = vmatpush1.msra.mxu0 %v229
      %354 = vmatprep.subr.mxu0 0.0
      %355 = vmatpush1.msra.mxu0 %v230
      %356 = vmatprep.subr.mxu0 0.0
      %357 = vmatpush1.msra.mxu0 %v231
      %358 = vmatprep.subr.mxu0 0.0
      %359 = vmatpush1.msra.mxu0 %v232
      %360 = vmatprep.subr.mxu0 0.0
      %361 = vmatpush1.msra.mxu0 %v233
      %362 = vmatprep.subr.mxu0 0.0
      %363 = vmatpush1.msra.mxu0 %v234
      %364 = vmatprep.subr.mxu0 0.0
      %365 = vmatpush1.msra.mxu0 %v235
      %366 = vmatprep.subr.mxu0 0.0
      %367 = vmatpush1.msra.mxu0 %v236
      %368 = vmatprep.subr.mxu0 0.0
      %369 = vmatpush1.msra.mxu0 %v237
      %370 = vmatprep.subr.mxu0 0.0
      %371 = vmatpush1.msra.mxu0 %v238
      %372 = vmatprep.subr.mxu0 0.0
      %373 = vmatpush1.msra.mxu0 %v239
      %374 = vmatprep.subr.mxu0 0.0
      %375 = vmatpush1.msra.mxu0 %v240
      %376 = vmatprep.mubr.f32.mxu0 %v204
      %377 = vmatmul.mubr.f32.gmra.mrb[0].mxu0 %v203
      %v378 = vpop.f32.mrb[0].mxu0
      %v379 = vadd.f32 %v310, %v378
      %v380 = vpop.f32.mrb[0].mxu0
      %381 = vdwg.mxu0
      %382 = vmatprep.subr.mxu0 0.0
      %383 = vmatpush1.msra.mxu0 %v241
      %384 = vmatprep.subr.mxu0 0.0
      %385 = vmatpush1.msra.mxu0 %v242
      %386 = vmatprep.subr.mxu0 0.0
      %387 = vmatpush1.msra.mxu0 %v243
      %388 = vmatprep.subr.mxu0 0.0
      %389 = vmatpush1.msra.mxu0 %v244
      %390 = vmatprep.subr.mxu0 0.0
      %391 = vmatpush1.msra.mxu0 %v245
      %392 = vmatprep.subr.mxu0 0.0
      %393 = vmatpush1.msra.mxu0 %v246
      %394 = vmatprep.subr.mxu0 0.0
      %395 = vmatpush1.msra.mxu0 %v247
      %396 = vmatprep.subr.mxu0 0.0
      %397 = vmatpush1.msra.mxu0 %v248
      %398 = vmatprep.subr.mxu0 0.0
      %399 = vmatpush1.msra.mxu0 %v249
      %400 = vmatprep.subr.mxu0 0.0
      %401 = vmatpush1.msra.mxu0 %v250
      %402 = vmatprep.subr.mxu0 0.0
      %403 = vmatpush1.msra.mxu0 %v251
      %404 = vmatprep.subr.mxu0 0.0
      %405 = vmatpush1.msra.mxu0 %v252
      %406 = vmatprep.subr.mxu0 0.0
      %407 = vmatpush1.msra.mxu0 %v253
      %408 = vmatprep.subr.mxu0 0.0
      %409 = vmatpush1.msra.mxu0 %v254
      %410 = vmatprep.subr.mxu0 0.0
      %411 = vmatpush1.msra.mxu0 %v255
      %412 = vmatprep.subr.mxu0 0.0
      %413 = vmatpush1.msra.mxu0 %v256
      %414 = vmatprep.subr.mxu0 0.0
      %415 = vmatpush1.msra.mxu0 %v257
      %416 = vmatprep.subr.mxu0 0.0
      %417 = vmatpush1.msra.mxu0 %v258
      %418 = vmatprep.subr.mxu0 0.0
      %419 = vmatpush1.msra.mxu0 %v259
      %420 = vmatprep.subr.mxu0 0.0
      %421 = vmatpush1.msra.mxu0 %v260
      %422 = vmatprep.subr.mxu0 0.0
      %423 = vmatpush1.msra.mxu0 %v261
      %424 = vmatprep.subr.mxu0 0.0
      %425 = vmatpush1.msra.mxu0 %v262
      %426 = vmatprep.subr.mxu0 0.0
      %427 = vmatpush1.msra.mxu0 %v263
      %428 = vmatprep.subr.mxu0 0.0
      %429 = vmatpush1.msra.mxu0 %v264
      %430 = vmatprep.subr.mxu0 0.0
      %431 = vmatpush1.msra.mxu0 %v265
      %432 = vmatprep.subr.mxu0 0.0
      %433 = vmatpush1.msra.mxu0 %v266
      %434 = vmatprep.subr.mxu0 0.0
      %435 = vmatpush1.msra.mxu0 %v267
      %436 = vmatprep.subr.mxu0 0.0
      %437 = vmatpush1.msra.mxu0 %v268
      %438 = vmatprep.subr.mxu0 0.0
      %439 = vmatpush1.msra.mxu0 %v269
      %440 = vmatprep.subr.mxu0 0.0
      %441 = vmatpush1.msra.mxu0 %v270
      %442 = vmatprep.subr.mxu0 0.0
      %443 = vmatpush1.msra.mxu0 %v271
      %444 = vmatprep.subr.mxu0 0.0
      %445 = vmatpush1.msra.mxu0 %v272
      %446 = vmatprep.mubr.f32.mxu0 %v206
      %447 = vmatmul.mubr.f32.gmra.mrb[0].mxu0 %v205
      %v448 = vpop.f32.mrb[0].mxu0
      %v449 = vadd.f32 %v379, %v448
      %v450 = vpop.f32.mrb[0].mxu0
      %451 = vdwg.mxu0
      %452 = vmatprep.subr.mxu0 0.0
      %453 = vmatpush1.msra.mxu0 %v273
      %454 = vmatprep.subr.mxu0 0.0
      %455 = vmatpush1.msra.mxu0 %v274
      %456 = vmatprep.subr.mxu0 0.0
      %457 = vmatpush1.msra.mxu0 %v275
      %458 = vmatprep.subr.mxu0 0.0
      %459 = vmatpush1.msra.mxu0 %v276
      %460 = vmatprep.subr.mxu0 0.0
      %461 = vmatpush1.msra.mxu0 %v277
      %462 = vmatprep.subr.mxu0 0.0
      %463 = vmatpush1.msra.mxu0 %v278
      %464 = vmatprep.subr.mxu0 0.0
      %465 = vmatpush1.msra.mxu0 %v279
      %466 = vmatprep.subr.mxu0 0.0
      %467 = vmatpush1.msra.mxu0 %v280
      %468 = vmatprep.subr.mxu0 0.0
      %469 = vmatpush1.msra.mxu0 %v281
      %470 = vmatprep.subr.mxu0 0.0
      %471 = vmatpush1.msra.mxu0 %v282
      %472 = vmatprep.subr.mxu0 0.0
      %473 = vmatpush1.msra.mxu0 %v283
      %474 = vmatprep.subr.mxu0 0.0
      %475 = vmatpush1.msra.mxu0 %v284
      %476 = vmatprep.subr.mxu0 0.0
      %477 = vmatpush1.msra.mxu0 %v285
      %478 = vmatprep.subr.mxu0 0.0
      %479 = vmatpush1.msra.mxu0 %v286
      %480 = vmatprep.subr.mxu0 0.0
      %481 = vmatpush1.msra.mxu0 %v287
      %482 = vmatprep.subr.mxu0 0.0
      %483 = vmatpush1.msra.mxu0 %v288
      %484 = vmatprep.subr.mxu0 0.0
      %485 = vmatpush1.msra.mxu0 %v289
      %486 = vmatprep.subr.mxu0 0.0
      %487 = vmatpush1.msra.mxu0 %v290
      %488 = vmatprep.subr.mxu0 0.0
      %489 = vmatpush1.msra.mxu0 %v291
      %490 = vmatprep.subr.mxu0 0.0
      %491 = vmatpush1.msra.mxu0 %v292
      %492 = vmatprep.subr.mxu0 0.0
      %493 = vmatpush1.msra.mxu0 %v293
      %494 = vmatprep.subr.mxu0 0.0
      %495 = vmatpush1.msra.mxu0 %v294
      %496 = vmatprep.subr.mxu0 0.0
      %497 = vmatpush1.msra.mxu0 %v295
      %498 = vmatprep.subr.mxu0 0.0
      %499 = vmatpush1.msra.mxu0 %v296
      %500 = vmatprep.subr.mxu0 0.0
      %501 = vmatpush1.msra.mxu0 %v297
      %502 = vmatprep.subr.mxu0 0.0
      %503 = vmatpush1.msra.mxu0 %v298
      %504 = vmatprep.subr.mxu0 0.0
      %505 = vmatpush1.msra.mxu0 %v299
      %506 = vmatprep.subr.mxu0 0.0
      %507 = vmatpush1.msra.mxu0 %v300
      %508 = vmatprep.subr.mxu0 0.0
      %509 = vmatpush1.msra.mxu0 %v301
      %510 = vmatprep.subr.mxu0 0.0
      %511 = vmatpush1.msra.mxu0 %v302
      %512 = vmatprep.subr.mxu0 0.0
      %513 = vmatpush1.msra.mxu0 %v303
      %514 = vmatprep.subr.mxu0 0.0
      %515 = vmatpush1.msra.mxu0 %v304
      %516 = vmatprep.mubr.f32.mxu0 %v208
      %517 = vmatmul.mubr.f32.gmra.mrb[0].mxu0 %v207
      %v518 = vpop.f32.mrb[0].mxu0
      %v519 = vadd.f32 %v449, %v518
      %v520 = vpop.f32.mrb[0].mxu0
      %521 = vdwg.mxu0
      %v522 = vmax.f32 %v519, 0.0
      %523 = vst [vmem:[%s202] sm:$0xff] %v522
      %p524 = scmp.lt.s32.totalorder %s18, 1
      %s525 = scalar_select %p524, %s18, 1
      %p526 = scmp.lt.s32.totalorder %s19, 0
      %s527 = scalar_select %p526, %s19, 0
      %s528 = sadd.s32 %s527, %s525
      %s529 = smul.addr %s528, 8
      %s530 = scalar_lea.vmem %s3, %s529
      // Predicated region
      $region33: #{another_disc2d_forward.12} parent=31 // pred_check
        %p531 = pneg %p116
      $region34: #{another_disc2d_forward.12} parent=31 // pred_check_branch
        %533 = sbr.rel (%p531) target = $region36
      $region35: #{another_disc2d_forward.12} parent=31 // pred_region
        _
      $region36: #{another_disc2d_forward.12} parent=31 // pred_fallthru
        _
    $region32: #{another_disc2d_forward.12} parent=5 // pred_fallthru
      _
    %p534 = scmp.le.s32.totalorder 2, %s9
    // Predicated region
    $region37: #{another_disc2d_forward.12} parent=5 // pred_check
      %p535 = pneg %p534
    $region38: #{another_disc2d_forward.12} parent=5 // pred_check_branch
      %537 = sbr.rel (%p535) target = $region40
    $region39: #{another_disc2d_forward.12} parent=5 // pred_region
      %s538 = ssub.s32 %s9, 2
      // Predicated region
      $region41: #{another_disc2d_forward.12} parent=39 // pred_check
        %p539 = pneg %p122
      $region42: #{another_disc2d_forward.12} parent=39 // pred_check_branch
        %541 = sbr.rel (%p539) target = $region44
      $region43: #{another_disc2d_forward.12} parent=39 // pred_region
        %p542 = scmp.lt.s32.totalorder %s20, 1
        %s543 = scalar_select %p542, %s20, 1
        %p544 = scmp.lt.s32.totalorder %s21, 0
        %s545 = scalar_select %p544, %s21, 0
        %s546 = sadd.s32 %s545, %s543
        %s547 = smul.addr %s546, 8
        %s548 = scalar_lea.vmem %s3, %s547
      $region44: #{another_disc2d_forward.12} parent=39 // pred_fallthru
        _
    $region40: #{another_disc2d_forward.12} parent=5 // pred_fallthru
      _
  $region6: #{another_disc2d_forward.12} parent=0 // loop_footer
    %s13 = sadd.s32 1, %s9
  $region7: #{another_disc2d_forward.12} parent=0 // loop_footer_branch
    %8 = sbr.rel target = $region3
  $region8: #{another_disc2d_forward.12} parent=0 // loop_exit
    _

// kernel: another_disc2d_forward.13
$region0: #{another_disc2d_forward.13}
  #allocation0 [shape = 'u32[]', space=smem, size = 0x4, offset = 0x4, fixed_abs, tag = 'smem constant byte address 0x4 - core index']
  #allocation1 [shape = 'u32[144,128]{1,0:T(1,128)}', space=vmem, size = 0x12000, scoped, tag = 'internal scratch']
  %s0 = inlined_call_operand.vmem [shape: f32[2,640], index: 0, kind: input, shape index: {}]
  %s1 = inlined_call_operand.vmem [shape: f32[640,256], index: 1, kind: input, shape index: {}]
  %s2 = inlined_call_operand.vmem [shape: f32[1,256], index: 2, kind: input, shape index: {}]
  %s3 = inlined_call_operand.vmem [shape: f32[256,128], index: 3, kind: input, shape index: {}]
  %s4 = inlined_call_operand.vmem [shape: f32[1,128], index: 4, kind: input, shape index: {}]
  %s5 = inlined_call_operand.hbm [shape: f32[2,128], index: 5, kind: output, shape index: {}]
  %s6 = sld [smem:[#allocation0]]
  $region30: #{another_disc2d_forward.13} parent=0
    _
  %s8 = ssub.s32 1, %s6
  %s9 = scalar_select 0, %s8, %s6
  $region1: #{another_disc2d_forward.13} parent=0
    #allocation2 [shape = 'u8[1024]{0}', space=vmem, size = 0x400, scoped, tag = 'output window, operand 0, single buffered']
    #allocation3 [shape = 's32[1]{0}', space=sflag, size = 0x4, scoped, tag = 'scoped memory for another_disc2d_forward.13']
    %10 = vsyncpa [#allocation3], 0
    // Predicated region
    $region2: #{another_disc2d_forward.13} parent=1 // pred_check
      _
    $region3: #{another_disc2d_forward.13} parent=1 // pred_check_branch
      %12 = sbr.rel (0) target = $region5
    $region4: #{another_disc2d_forward.13} parent=1 // pred_region
      _
    $region5: #{another_disc2d_forward.13} parent=1 // pred_fallthru
      _
    // Predicated region
    $region6: #{another_disc2d_forward.13} parent=1 // pred_check
      _
    $region7: #{another_disc2d_forward.13} parent=1 // pred_check_branch
      %14 = sbr.rel (0) target = $region9
    $region8: #{another_disc2d_forward.13} parent=1 // pred_region
      _
    $region9: #{another_disc2d_forward.13} parent=1 // pred_fallthru
      _
    // Predicated region
    $region10: #{another_disc2d_forward.13} parent=1 // pred_check
      _
    $region11: #{another_disc2d_forward.13} parent=1 // pred_check_branch
      %16 = sbr.rel (0) target = $region13
    $region12: #{another_disc2d_forward.13} parent=1 // pred_region
      _
    $region13: #{another_disc2d_forward.13} parent=1 // pred_fallthru
      _
    // Predicated region
    $region14: #{another_disc2d_forward.13} parent=1 // pred_check
      _
    $region15: #{another_disc2d_forward.13} parent=1 // pred_check_branch
      %18 = sbr.rel (0) target = $region17
    $region16: #{another_disc2d_forward.13} parent=1 // pred_region
      _
    $region17: #{another_disc2d_forward.13} parent=1 // pred_fallthru
      _
    // Predicated region
    $region18: #{another_disc2d_forward.13} parent=1 // pred_check
      _
    $region19: #{another_disc2d_forward.13} parent=1 // pred_check_branch
      %20 = sbr.rel (0) target = $region21
    $region20: #{another_disc2d_forward.13} parent=1 // pred_region
      _
    $region21: #{another_disc2d_forward.13} parent=1 // pred_fallthru
      _
    %v21 = vld [vmem:[%s0] sm:$0xff]
    %v22 = vld [vmem:[%s0 + $0x8] sm:$0x3]
    %v23 = vld [vmem:[%s1] sm:$0xff]
    %v24 = vld [vmem:[%s1 + $0x8] sm:$0xff]
    %v25 = vld [vmem:[%s1 + $0x10] sm:$0xff]
    %v26 = vld [vmem:[%s1 + $0x18] sm:$0xff]
    %v27 = vld [vmem:[%s1 + $0x20] sm:$0xff]
    %v28 = vld [vmem:[%s1 + $0x28] sm:$0xff]
    %v29 = vld [vmem:[%s1 + $0x30] sm:$0xff]
    %v30 = vld [vmem:[%s1 + $0x38] sm:$0xff]
    %v31 = vld [vmem:[%s1 + $0x40] sm:$0xff]
    %v32 = vld [vmem:[%s1 + $0x48] sm:$0xff]
    %v33 = vld [vmem:[%s1 + $0x50] sm:$0xff]
    %v34 = vld [vmem:[%s1 + $0x58] sm:$0xff]
    %v35 = vld [vmem:[%s1 + $0x60] sm:$0xff]
    %v36 = vld [vmem:[%s1 + $0x68] sm:$0xff]
    %v37 = vld [vmem:[%s1 + $0x70] sm:$0xff]
    %v38 = vld [vmem:[%s1 + $0x78] sm:$0xff]
    %v39 = vld [vmem:[%s1 + $0x80] sm:$0xff]
    %v40 = vld [vmem:[%s1 + $0x88] sm:$0xff]
    %v41 = vld [vmem:[%s1 + $0x90] sm:$0xff]
    %v42 = vld [vmem:[%s1 + $0x98] sm:$0xff]
    %v43 = vld [vmem:[%s1 + $0xa0] sm:$0xff]
    %v44 = vld [vmem:[%s1 + $0xa8] sm:$0xff]
    %v45 = vld [vmem:[%s1 + $0xb0] sm:$0xff]
    %v46 = vld [vmem:[%s1 + $0xb8] sm:$0xff]
    %v47 = vld [vmem:[%s1 + $0xc0] sm:$0xff]
    %v48 = vld [vmem:[%s1 + $0xc8] sm:$0xff]
    %v49 = vld [vmem:[%s1 + $0xd0] sm:$0xff]
    %v50 = vld [vmem:[%s1 + $0xd8] sm:$0xff]
    %v51 = vld [vmem:[%s1 + $0xe0] sm:$0xff]
    %v52 = vld [vmem:[%s1 + $0xe8] sm:$0xff]
    %v53 = vld [vmem:[%s1 + $0xf0] sm:$0xff]
    %v54 = vld [vmem:[%s1 + $0xf8] sm:$0xff]
    %v55 = vld [vmem:[%s1 + $0x100] sm:$0xff]
    %v56 = vld [vmem:[%s1 + $0x108] sm:$0xff]
    %v57 = vld [vmem:[%s1 + $0x110] sm:$0xff]
    %v58 = vld [vmem:[%s1 + $0x118] sm:$0xff]
    %v59 = vld [vmem:[%s1 + $0x120] sm:$0xff]
    %v60 = vld [vmem:[%s1 + $0x128] sm:$0xff]
    %v61 = vld [vmem:[%s1 + $0x130] sm:$0xff]
    %v62 = vld [vmem:[%s1 + $0x138] sm:$0xff]
    %v63 = vld [vmem:[%s1 + $0x140] sm:$0xff]
    %v64 = vld [vmem:[%s1 + $0x148] sm:$0xff]
    %v65 = vld [vmem:[%s1 + $0x150] sm:$0xff]
    %v66 = vld [vmem:[%s1 + $0x158] sm:$0xff]
    %v67 = vld [vmem:[%s1 + $0x160] sm:$0xff]
    %v68 = vld [vmem:[%s1 + $0x168] sm:$0xff]
    %v69 = vld [vmem:[%s1 + $0x170] sm:$0xff]
    %v70 = vld [vmem:[%s1 + $0x178] sm:$0xff]
    %v71 = vld [vmem:[%s1 + $0x180] sm:$0xff]
    %v72 = vld [vmem:[%s1 + $0x188] sm:$0xff]
    %v73 = vld [vmem:[%s1 + $0x190] sm:$0xff]
    %v74 = vld [vmem:[%s1 + $0x198] sm:$0xff]
    %v75 = vld [vmem:[%s1 + $0x1a0] sm:$0xff]
    %v76 = vld [vmem:[%s1 + $0x1a8] sm:$0xff]
    %v77 = vld [vmem:[%s1 + $0x1b0] sm:$0xff]
    %v78 = vld [vmem:[%s1 + $0x1b8] sm:$0xff]
    %v79 = vld [vmem:[%s1 + $0x1c0] sm:$0xff]
    %v80 = vld [vmem:[%s1 + $0x1c8] sm:$0xff]
    %v81 = vld [vmem:[%s1 + $0x1d0] sm:$0xff]
    %v82 = vld [vmem:[%s1 + $0x1d8] sm:$0xff]
    %v83 = vld [vmem:[%s1 + $0x1e0] sm:$0xff]
    %v84 = vld [vmem:[%s1 + $0x1e8] sm:$0xff]
    %v85 = vld [vmem:[%s1 + $0x1f0] sm:$0xff]
    %v86 = vld [vmem:[%s1 + $0x1f8] sm:$0xff]
    %v87 = vld [vmem:[%s1 + $0x200] sm:$0xff]
    %v88 = vld [vmem:[%s1 + $0x208] sm:$0xff]
    %v89 = vld [vmem:[%s1 + $0x210] sm:$0xff]
    %v90 = vld [vmem:[%s1 + $0x218] sm:$0xff]
    %v91 = vld [vmem:[%s1 + $0x220] sm:$0xff]
    %v92 = vld [vmem:[%s1 + $0x228] sm:$0xff]
    %v93 = vld [vmem:[%s1 + $0x230] sm:$0xff]
    %v94 = vld [vmem:[%s1 + $0x238] sm:$0xff]
    %v95 = vld [vmem:[%s1 + $0x240] sm:$0xff]
    %v96 = vld [vmem:[%s1 + $0x248] sm:$0xff]
    %v97 = vld [vmem:[%s1 + $0x250] sm:$0xff]
    %v98 = vld [vmem:[%s1 + $0x258] sm:$0xff]
    %v99 = vld [vmem:[%s1 + $0x260] sm:$0xff]
    %v100 = vld [vmem:[%s1 + $0x268] sm:$0xff]
    %v101 = vld [vmem:[%s1 + $0x270] sm:$0xff]
    %v102 = vld [vmem:[%s1 + $0x278] sm:$0xff]
    %v103 = vld [vmem:[%s1 + $0x280] sm:$0xff]
    %v104 = vld [vmem:[%s1 + $0x288] sm:$0xff]
    %v105 = vld [vmem:[%s1 + $0x290] sm:$0xff]
    %v106 = vld [vmem:[%s1 + $0x298] sm:$0xff]
    %v107 = vld [vmem:[%s1 + $0x2a0] sm:$0xff]
    %v108 = vld [vmem:[%s1 + $0x2a8] sm:$0xff]
    %v109 = vld [vmem:[%s1 + $0x2b0] sm:$0xff]
    %v110 = vld [vmem:[%s1 + $0x2b8] sm:$0xff]
    %v111 = vld [vmem:[%s1 + $0x2c0] sm:$0xff]
    %v112 = vld [vmem:[%s1 + $0x2c8] sm:$0xff]
    %v113 = vld [vmem:[%s1 + $0x2d0] sm:$0xff]
    %v114 = vld [vmem:[%s1 + $0x2d8] sm:$0xff]
    %v115 = vld [vmem:[%s1 + $0x2e0] sm:$0xff]
    %v116 = vld [vmem:[%s1 + $0x2e8] sm:$0xff]
    %v117 = vld [vmem:[%s1 + $0x2f0] sm:$0xff]
    %v118 = vld [vmem:[%s1 + $0x2f8] sm:$0xff]
    %v119 = vld [vmem:[%s1 + $0x300] sm:$0xff]
    %v120 = vld [vmem:[%s1 + $0x308] sm:$0xff]
    %v121 = vld [vmem:[%s1 + $0x310] sm:$0xff]
    %v122 = vld [vmem:[%s1 + $0x318] sm:$0xff]
    %v123 = vld [vmem:[%s1 + $0x320] sm:$0xff]
    %v124 = vld [vmem:[%s1 + $0x328] sm:$0xff]
    %v125 = vld [vmem:[%s1 + $0x330] sm:$0xff]
    %v126 = vld [vmem:[%s1 + $0x338] sm:$0xff]
    %v127 = vld [vmem:[%s1 + $0x340] sm:$0xff]
    %v128 = vld [vmem:[%s1 + $0x348] sm:$0xff]
    %v129 = vld [vmem:[%s1 + $0x350] sm:$0xff]
    %v130 = vld [vmem:[%s1 + $0x358] sm:$0xff]
    %v131 = vld [vmem:[%s1 + $0x360] sm:$0xff]
    %v132 = vld [vmem:[%s1 + $0x368] sm:$0xff]
    %v133 = vld [vmem:[%s1 + $0x370] sm:$0xff]
    %v134 = vld [vmem:[%s1 + $0x378] sm:$0xff]
    %v135 = vld [vmem:[%s1 + $0x380] sm:$0xff]
    %v136 = vld [vmem:[%s1 + $0x388] sm:$0xff]
    %v137 = vld [vmem:[%s1 + $0x390] sm:$0xff]
    %v138 = vld [vmem:[%s1 + $0x398] sm:$0xff]
    %v139 = vld [vmem:[%s1 + $0x3a0] sm:$0xff]
    %v140 = vld [vmem:[%s1 + $0x3a8] sm:$0xff]
    %v141 = vld [vmem:[%s1 + $0x3b0] sm:$0xff]
    %v142 = vld [vmem:[%s1 + $0x3b8] sm:$0xff]
    %v143 = vld [vmem:[%s1 + $0x3c0] sm:$0xff]
    %v144 = vld [vmem:[%s1 + $0x3c8] sm:$0xff]
    %v145 = vld [vmem:[%s1 + $0x3d0] sm:$0xff]
    %v146 = vld [vmem:[%s1 + $0x3d8] sm:$0xff]
    %v147 = vld [vmem:[%s1 + $0x3e0] sm:$0xff]
    %v148 = vld [vmem:[%s1 + $0x3e8] sm:$0xff]
    %v149 = vld [vmem:[%s1 + $0x3f0] sm:$0xff]
    %v150 = vld [vmem:[%s1 + $0x3f8] sm:$0xff]
    %v151 = vld [vmem:[%s1 + $0x400] sm:$0xff]
    %v152 = vld [vmem:[%s1 + $0x408] sm:$0xff]
    %v153 = vld [vmem:[%s1 + $0x410] sm:$0xff]
    %v154 = vld [vmem:[%s1 + $0x418] sm:$0xff]
    %v155 = vld [vmem:[%s1 + $0x420] sm:$0xff]
    %v156 = vld [vmem:[%s1 + $0x428] sm:$0xff]
    %v157 = vld [vmem:[%s1 + $0x430] sm:$0xff]
    %v158 = vld [vmem:[%s1 + $0x438] sm:$0xff]
    %v159 = vld [vmem:[%s1 + $0x440] sm:$0xff]
    %v160 = vld [vmem:[%s1 + $0x448] sm:$0xff]
    %v161 = vld [vmem:[%s1 + $0x450] sm:$0xff]
    %v162 = vld [vmem:[%s1 + $0x458] sm:$0xff]
    %v163 = vld [vmem:[%s1 + $0x460] sm:$0xff]
    %v164 = vld [vmem:[%s1 + $0x468] sm:$0xff]
    %v165 = vld [vmem:[%s1 + $0x470] sm:$0xff]
    %v166 = vld [vmem:[%s1 + $0x478] sm:$0xff]
    %v167 = vld [vmem:[%s1 + $0x480] sm:$0xff]
    %v168 = vld [vmem:[%s1 + $0x488] sm:$0xff]
    %v169 = vld [vmem:[%s1 + $0x490] sm:$0xff]
    %v170 = vld [vmem:[%s1 + $0x498] sm:$0xff]
    %v171 = vld [vmem:[%s1 + $0x4a0] sm:$0xff]
    %v172 = vld [vmem:[%s1 + $0x4a8] sm:$0xff]
    %v173 = vld [vmem:[%s1 + $0x4b0] sm:$0xff]
    %v174 = vld [vmem:[%s1 + $0x4b8] sm:$0xff]
    %v175 = vld [vmem:[%s1 + $0x4c0] sm:$0xff]
    %v176 = vld [vmem:[%s1 + $0x4c8] sm:$0xff]
    %v177 = vld [vmem:[%s1 + $0x4d0] sm:$0xff]
    %v178 = vld [vmem:[%s1 + $0x4d8] sm:$0xff]
    %v179 = vld [vmem:[%s1 + $0x4e0] sm:$0xff]
    %v180 = vld [vmem:[%s1 + $0x4e8] sm:$0xff]
    %v181 = vld [vmem:[%s1 + $0x4f0] sm:$0xff]
    %v182 = vld [vmem:[%s1 + $0x4f8] sm:$0xff]
    %v183 = vld [vmem:[%s2] sm:$0x3]
    %v185 = vlaneseq
    %v186 = vshrl.u32 %v185, 7
    %v187 = vsub.s32 0, %v186
    %v188 = vrot.slane %v183, %v187
    %v189 = vlaneseq
    %v190 = vshrl.u32 %v189, 7
    %v191 = vsub.s32 1, %v190
    %v192 = vrot.slane %v183, %v191
    %v197 = vcombine.high %v21, %v21
    %v199 = vunpack.c.l.s4 1983009808
    %v200 = vunpack.c.0.s8 %v199
    %v201 = vlaneseq
    %v202 = vshrl.u32 %v201, 7
    %v203 = vsub.s32 %v200, %v202
    %v204 = vrot.slane %v21, %v203
    %v206 = vunpack.c.l.s4 1983009808
    %v207 = vunpack.c.0.s8 %v206
    %v208 = vlaneseq
    %v209 = vshrl.u32 %v208, 7
    %v210 = vsub.s32 %v207, %v209
    %v211 = vrot.slane %v197, %v210
    %v212 = vcombine.high %v204, %v204
    %v213 = vcombine.high %v211, %v211
    %v215 = vunpack.c.l.s4 1983009808
    %v216 = vunpack.c.0.s8 %v215
    %v217 = vlaneseq
    %v218 = vshrl.u32 %v217, 7
    %v219 = vsub.s32 %v216, %v218
    %v220 = vrot.slane %v22, %v219
    %226 = vmatprep.subr.mxu0 %v24
    %227 = vmatpush1.msra.mxu0 %v23
    %228 = vmatprep.subr.mxu0 %v26
    %229 = vmatpush1.msra.mxu0 %v25
    %230 = vmatprep.subr.mxu0 %v28
    %231 = vmatpush1.msra.mxu0 %v27
    %232 = vmatprep.subr.mxu0 %v30
    %233 = vmatpush1.msra.mxu0 %v29
    %234 = vmatprep.subr.mxu0 %v32
    %235 = vmatpush1.msra.mxu0 %v31
    %236 = vmatprep.subr.mxu0 %v34
    %237 = vmatpush1.msra.mxu0 %v33
    %238 = vmatprep.subr.mxu0 %v36
    %239 = vmatpush1.msra.mxu0 %v35
    %240 = vmatprep.subr.mxu0 %v38
    %241 = vmatpush1.msra.mxu0 %v37
    %242 = vmatprep.subr.mxu0 %v40
    %243 = vmatpush1.msra.mxu0 %v39
    %244 = vmatprep.subr.mxu0 %v42
    %245 = vmatpush1.msra.mxu0 %v41
    %246 = vmatprep.subr.mxu0 %v44
    %247 = vmatpush1.msra.mxu0 %v43
    %248 = vmatprep.subr.mxu0 %v46
    %249 = vmatpush1.msra.mxu0 %v45
    %250 = vmatprep.subr.mxu0 %v48
    %251 = vmatpush1.msra.mxu0 %v47
    %252 = vmatprep.subr.mxu0 %v50
    %253 = vmatpush1.msra.mxu0 %v49
    %254 = vmatprep.subr.mxu0 %v52
    %255 = vmatpush1.msra.mxu0 %v51
    %256 = vmatprep.subr.mxu0 %v54
    %257 = vmatpush1.msra.mxu0 %v53
    %258 = vmatprep.subr.mxu0 %v56
    %259 = vmatpush1.msra.mxu0 %v55
    %260 = vmatprep.subr.mxu0 %v58
    %261 = vmatpush1.msra.mxu0 %v57
    %262 = vmatprep.subr.mxu0 %v60
    %263 = vmatpush1.msra.mxu0 %v59
    %264 = vmatprep.subr.mxu0 %v62
    %265 = vmatpush1.msra.mxu0 %v61
    %266 = vmatprep.subr.mxu0 %v64
    %267 = vmatpush1.msra.mxu0 %v63
    %268 = vmatprep.subr.mxu0 %v66
    %269 = vmatpush1.msra.mxu0 %v65
    %270 = vmatprep.subr.mxu0 %v68
    %271 = vmatpush1.msra.mxu0 %v67
    %272 = vmatprep.subr.mxu0 %v70
    %273 = vmatpush1.msra.mxu0 %v69
    %274 = vmatprep.subr.mxu0 %v72
    %275 = vmatpush1.msra.mxu0 %v71
    %276 = vmatprep.subr.mxu0 %v74
    %277 = vmatpush1.msra.mxu0 %v73
    %278 = vmatprep.subr.mxu0 %v76
    %279 = vmatpush1.msra.mxu0 %v75
    %280 = vmatprep.subr.mxu0 %v78
    %281 = vmatpush1.msra.mxu0 %v77
    %282 = vmatprep.subr.mxu0 %v80
    %283 = vmatpush1.msra.mxu0 %v79
    %284 = vmatprep.subr.mxu0 %v82
    %285 = vmatpush1.msra.mxu0 %v81
    %286 = vmatprep.subr.mxu0 %v84
    %287 = vmatpush1.msra.mxu0 %v83
    %288 = vmatprep.subr.mxu0 %v86
    %289 = vmatpush1.msra.mxu0 %v85
    %290 = vmatprep.mubr.f32.mxu0 %v212
    %291 = vmatmul.mubr.f32.gmra.mrb[0].mxu0 %v204
    %v292 = vpop.f32.mrb[0].mxu0
    %v293 = vadd.f32 %v188, %v292
    %v294 = vpop.f32.mrb[0].mxu0
    %v295 = vadd.f32 %v192, %v294
    %296 = vdwg.mxu0
    %297 = vmatprep.subr.mxu0 %v88
    %298 = vmatpush1.msra.mxu0 %v87
    %299 = vmatprep.subr.mxu0 %v90
    %300 = vmatpush1.msra.mxu0 %v89
    %301 = vmatprep.subr.mxu0 %v92
    %302 = vmatpush1.msra.mxu0 %v91
    %303 = vmatprep.subr.mxu0 %v94
    %304 = vmatpush1.msra.mxu0 %v93
    %305 = vmatprep.subr.mxu0 %v96
    %306 = vmatpush1.msra.mxu0 %v95
    %307 = vmatprep.subr.mxu0 %v98
    %308 = vmatpush1.msra.mxu0 %v97
    %309 = vmatprep.subr.mxu0 %v100
    %310 = vmatpush1.msra.mxu0 %v99
    %311 = vmatprep.subr.mxu0 %v102
    %312 = vmatpush1.msra.mxu0 %v101
    %313 = vmatprep.subr.mxu0 %v104
    %314 = vmatpush1.msra.mxu0 %v103
    %315 = vmatprep.subr.mxu0 %v106
    %316 = vmatpush1.msra.mxu0 %v105
    %317 = vmatprep.subr.mxu0 %v108
    %318 = vmatpush1.msra.mxu0 %v107
    %319 = vmatprep.subr.mxu0 %v110
    %320 = vmatpush1.msra.mxu0 %v109
    %321 = vmatprep.subr.mxu0 %v112
    %322 = vmatpush1.msra.mxu0 %v111
    %323 = vmatprep.subr.mxu0 %v114
    %324 = vmatpush1.msra.mxu0 %v113
    %325 = vmatprep.subr.mxu0 %v116
    %326 = vmatpush1.msra.mxu0 %v115
    %327 = vmatprep.subr.mxu0 %v118
    %328 = vmatpush1.msra.mxu0 %v117
    %329 = vmatprep.subr.mxu0 %v120
    %330 = vmatpush1.msra.mxu0 %v119
    %331 = vmatprep.subr.mxu0 %v122
    %332 = vmatpush1.msra.mxu0 %v121
    %333 = vmatprep.subr.mxu0 %v124
    %334 = vmatpush1.msra.mxu0 %v123
    %335 = vmatprep.subr.mxu0 %v126
    %336 = vmatpush1.msra.mxu0 %v125
    %337 = vmatprep.subr.mxu0 %v128
    %338 = vmatpush1.msra.mxu0 %v127
    %339 = vmatprep.subr.mxu0 %v130
    %340 = vmatpush1.msra.mxu0 %v129
    %341 = vmatprep.subr.mxu0 %v132
    %342 = vmatpush1.msra.mxu0 %v131
    %343 = vmatprep.subr.mxu0 %v134
    %344 = vmatpush1.msra.mxu0 %v133
    %345 = vmatprep.subr.mxu0 %v136
    %346 = vmatpush1.msra.mxu0 %v135
    %347 = vmatprep.subr.mxu0 %v138
    %348 = vmatpush1.msra.mxu0 %v137
    %349 = vmatprep.subr.mxu0 %v140
    %350 = vmatpush1.msra.mxu0 %v139
    %351 = vmatprep.subr.mxu0 %v142
    %352 = vmatpush1.msra.mxu0 %v141
    %353 = vmatprep.subr.mxu0 %v144
    %354 = vmatpush1.msra.mxu0 %v143
    %355 = vmatprep.subr.mxu0 %v146
    %356 = vmatpush1.msra.mxu0 %v145
    %357 = vmatprep.subr.mxu0 %v148
    %358 = vmatpush1.msra.mxu0 %v147
    %359 = vmatprep.subr.mxu0 %v150
    %360 = vmatpush1.msra.mxu0 %v149
    %361 = vmatprep.mubr.f32.mxu0 %v213
    %362 = vmatmul.mubr.f32.gmra.mrb[0].mxu0 %v211
    %v363 = vpop.f32.mrb[0].mxu0
    %v364 = vadd.f32 %v293, %v363
    %v365 = vpop.f32.mrb[0].mxu0
    %v366 = vadd.f32 %v295, %v365
    %367 = vdwg.mxu0
    %368 = vmatprep.subr.mxu0 %v152
    %369 = vmatpush1.msra.mxu0 %v151
    %370 = vmatprep.subr.mxu0 %v154
    %371 = vmatpush1.msra.mxu0 %v153
    %372 = vmatprep.subr.mxu0 %v156
    %373 = vmatpush1.msra.mxu0 %v155
    %374 = vmatprep.subr.mxu0 %v158
    %375 = vmatpush1.msra.mxu0 %v157
    %376 = vmatprep.subr.mxu0 %v160
    %377 = vmatpush1.msra.mxu0 %v159
    %378 = vmatprep.subr.mxu0 %v162
    %379 = vmatpush1.msra.mxu0 %v161
    %380 = vmatprep.subr.mxu0 %v164
    %381 = vmatpush1.msra.mxu0 %v163
    %382 = vmatprep.subr.mxu0 %v166
    %383 = vmatpush1.msra.mxu0 %v165
    %384 = vmatprep.subr.mxu0 %v168
    %385 = vmatpush1.msra.mxu0 %v167
    %386 = vmatprep.subr.mxu0 %v170
    %387 = vmatpush1.msra.mxu0 %v169
    %388 = vmatprep.subr.mxu0 %v172
    %389 = vmatpush1.msra.mxu0 %v171
    %390 = vmatprep.subr.mxu0 %v174
    %391 = vmatpush1.msra.mxu0 %v173
    %392 = vmatprep.subr.mxu0 %v176
    %393 = vmatpush1.msra.mxu0 %v175
    %394 = vmatprep.subr.mxu0 %v178
    %395 = vmatpush1.msra.mxu0 %v177
    %396 = vmatprep.subr.mxu0 %v180
    %397 = vmatpush1.msra.mxu0 %v179
    %398 = vmatprep.subr.mxu0 %v182
    %399 = vmatpush1.msra.mxu0 %v181
    %400 = vmatprep.subr.mxu0 0.0
    %401 = vmatpush1.msra.mxu0 0.0
    %402 = vmatprep.subr.mxu0 0.0
    %403 = vmatpush1.msra.mxu0 0.0
    %404 = vmatprep.subr.mxu0 0.0
    %405 = vmatpush1.msra.mxu0 0.0
    %406 = vmatprep.subr.mxu0 0.0
    %407 = vmatpush1.msra.mxu0 0.0
    %408 = vmatprep.subr.mxu0 0.0
    %409 = vmatpush1.msra.mxu0 0.0
    %410 = vmatprep.subr.mxu0 0.0
    %411 = vmatpush1.msra.mxu0 0.0
    %412 = vmatprep.subr.mxu0 0.0
    %413 = vmatpush1.msra.mxu0 0.0
    %414 = vmatprep.subr.mxu0 0.0
    %415 = vmatpush1.msra.mxu0 0.0
    %416 = vmatprep.subr.mxu0 0.0
    %417 = vmatpush1.msra.mxu0 0.0
    %418 = vmatprep.subr.mxu0 0.0
    %419 = vmatpush1.msra.mxu0 0.0
    %420 = vmatprep.subr.mxu0 0.0
    %421 = vmatpush1.msra.mxu0 0.0
    %422 = vmatprep.subr.mxu0 0.0
    %423 = vmatpush1.msra.mxu0 0.0
    %424 = vmatprep.subr.mxu0 0.0
    %425 = vmatpush1.msra.mxu0 0.0
    %426 = vmatprep.subr.mxu0 0.0
    %427 = vmatpush1.msra.mxu0 0.0
    %428 = vmatprep.subr.mxu0 0.0
    %429 = vmatpush1.msra.mxu0 0.0
    %430 = vmatprep.subr.mxu0 0.0
    %431 = vmatpush1.msra.mxu0 0.0
    %432 = vmatprep.mubr.f32.mxu0 0.0
    %433 = vmatmul.mubr.f32.gmra.mrb[0].mxu0 %v220
    %v434 = vpop.f32.mrb[0].mxu0
    %v435 = vadd.f32 %v364, %v434
    %v436 = vpop.f32.mrb[0].mxu0
    %v437 = vadd.f32 %v366, %v436
    %438 = vdwg.mxu0
    %v439 = vmax.f32 %v435, 0.0
    %v440 = vmax.f32 %v437, 0.0
    %v441 = vld [vmem:[%s3] sm:$0xff]
    %v442 = vld [vmem:[%s3 + $0x8] sm:$0xff]
    %v443 = vld [vmem:[%s3 + $0x10] sm:$0xff]
    %v444 = vld [vmem:[%s3 + $0x18] sm:$0xff]
    %v445 = vld [vmem:[%s3 + $0x20] sm:$0xff]
    %v446 = vld [vmem:[%s3 + $0x28] sm:$0xff]
    %v447 = vld [vmem:[%s3 + $0x30] sm:$0xff]
    %v448 = vld [vmem:[%s3 + $0x38] sm:$0xff]
    %v449 = vld [vmem:[%s3 + $0x40] sm:$0xff]
    %v450 = vld [vmem:[%s3 + $0x48] sm:$0xff]
    %v451 = vld [vmem:[%s3 + $0x50] sm:$0xff]
    %v452 = vld [vmem:[%s3 + $0x58] sm:$0xff]
    %v453 = vld [vmem:[%s3 + $0x60] sm:$0xff]
    %v454 = vld [vmem:[%s3 + $0x68] sm:$0xff]
    %v455 = vld [vmem:[%s3 + $0x70] sm:$0xff]
    %v456 = vld [vmem:[%s3 + $0x78] sm:$0xff]
    %v457 = vld [vmem:[%s3 + $0x80] sm:$0xff]
    %v458 = vld [vmem:[%s3 + $0x88] sm:$0xff]
    %v459 = vld [vmem:[%s3 + $0x90] sm:$0xff]
    %v460 = vld [vmem:[%s3 + $0x98] sm:$0xff]
    %v461 = vld [vmem:[%s3 + $0xa0] sm:$0xff]
    %v462 = vld [vmem:[%s3 + $0xa8] sm:$0xff]
    %v463 = vld [vmem:[%s3 + $0xb0] sm:$0xff]
    %v464 = vld [vmem:[%s3 + $0xb8] sm:$0xff]
    %v465 = vld [vmem:[%s3 + $0xc0] sm:$0xff]
    %v466 = vld [vmem:[%s3 + $0xc8] sm:$0xff]
    %v467 = vld [vmem:[%s3 + $0xd0] sm:$0xff]
    %v468 = vld [vmem:[%s3 + $0xd8] sm:$0xff]
    %v469 = vld [vmem:[%s3 + $0xe0] sm:$0xff]
    %v470 = vld [vmem:[%s3 + $0xe8] sm:$0xff]
    %v471 = vld [vmem:[%s3 + $0xf0] sm:$0xff]
    %v472 = vld [vmem:[%s3 + $0xf8] sm:$0xff]
    %v473 = vld [vmem:[%s4] sm:$0x1]
    %v475 = vlaneseq
    %v476 = vshrl.u32 %v475, 7
    %v477 = vsub.s32 0, %v476
    %v478 = vrot.slane %v473, %v477
    %480 = vmatprep.subr.mxu0 0.0
    %481 = vmatpush1.msra.mxu0 %v441
    %482 = vmatprep.subr.mxu0 0.0
    %483 = vmatpush1.msra.mxu0 %v442
    %484 = vmatprep.subr.mxu0 0.0
    %485 = vmatpush1.msra.mxu0 %v443
    %486 = vmatprep.subr.mxu0 0.0
    %487 = vmatpush1.msra.mxu0 %v444
    %488 = vmatprep.subr.mxu0 0.0
    %489 = vmatpush1.msra.mxu0 %v445
    %490 = vmatprep.subr.mxu0 0.0
    %491 = vmatpush1.msra.mxu0 %v446
    %492 = vmatprep.subr.mxu0 0.0
    %493 = vmatpush1.msra.mxu0 %v447
    %494 = vmatprep.subr.mxu0 0.0
    %495 = vmatpush1.msra.mxu0 %v448
    %496 = vmatprep.subr.mxu0 0.0
    %497 = vmatpush1.msra.mxu0 %v449
    %498 = vmatprep.subr.mxu0 0.0
    %499 = vmatpush1.msra.mxu0 %v450
    %500 = vmatprep.subr.mxu0 0.0
    %501 = vmatpush1.msra.mxu0 %v451
    %502 = vmatprep.subr.mxu0 0.0
    %503 = vmatpush1.msra.mxu0 %v452
    %504 = vmatprep.subr.mxu0 0.0
    %505 = vmatpush1.msra.mxu0 %v453
    %506 = vmatprep.subr.mxu0 0.0
    %507 = vmatpush1.msra.mxu0 %v454
    %508 = vmatprep.subr.mxu0 0.0
    %509 = vmatpush1.msra.mxu0 %v455
    %510 = vmatprep.subr.mxu0 0.0
    %511 = vmatpush1.msra.mxu0 %v456
    %512 = vmatprep.subr.mxu0 0.0
    %513 = vmatpush1.msra.mxu0 %v457
    %514 = vmatprep.subr.mxu0 0.0
    %515 = vmatpush1.msra.mxu0 %v458
    %516 = vmatprep.subr.mxu0 0.0
    %517 = vmatpush1.msra.mxu0 %v459
    %518 = vmatprep.subr.mxu0 0.0
    %519 = vmatpush1.msra.mxu0 %v460
    %520 = vmatprep.subr.mxu0 0.0
    %521 = vmatpush1.msra.mxu0 %v461
    %522 = vmatprep.subr.mxu0 0.0
    %523 = vmatpush1.msra.mxu0 %v462
    %524 = vmatprep.subr.mxu0 0.0
    %525 = vmatpush1.msra.mxu0 %v463
    %526 = vmatprep.subr.mxu0 0.0
    %527 = vmatpush1.msra.mxu0 %v464
    %528 = vmatprep.subr.mxu0 0.0
    %529 = vmatpush1.msra.mxu0 %v465
    %530 = vmatprep.subr.mxu0 0.0
    %531 = vmatpush1.msra.mxu0 %v466
    %532 = vmatprep.subr.mxu0 0.0
    %533 = vmatpush1.msra.mxu0 %v467
    %534 = vmatprep.subr.mxu0 0.0
    %535 = vmatpush1.msra.mxu0 %v468
    %536 = vmatprep.subr.mxu0 0.0
    %537 = vmatpush1.msra.mxu0 %v469
    %538 = vmatprep.subr.mxu0 0.0
    %539 = vmatpush1.msra.mxu0 %v470
    %540 = vmatprep.subr.mxu0 0.0
    %541 = vmatpush1.msra.mxu0 %v471
    %542 = vmatprep.subr.mxu0 0.0
    %543 = vmatpush1.msra.mxu0 %v472
    %544 = vmatprep.mubr.f32.mxu0 %v440
    %545 = vmatmul.mubr.f32.gmra.mrb[0].mxu0 %v439
    %v546 = vpop.f32.mrb[0].mxu0
    %v547 = vadd.f32 %v478, %v546
    %v548 = vpop.f32.mrb[0].mxu0
    %549 = vdwg.mxu0
    %v550 = vsub.f32 0.0, %v547
    %v551 = vmul.f32 %v550, 1.442695
    %v552 = vpow.pop %v551
    %v553 = vadd.f32 %v552, 1.0
    %v554 = vrcp.pop %v553
    %v555 = vmul.f32 1.0, %v554
    %556 = vst [vmem:[#allocation2] sm:$0x3] %v555
    // Predicated region
    $region22: #{another_disc2d_forward.13} parent=1 // pred_check
      _
    $region23: #{another_disc2d_forward.13} parent=1 // pred_check_branch
      %558 = sbr.rel (0) target = $region25
    $region24: #{another_disc2d_forward.13} parent=1 // pred_region
      %s560 = ssub.s32 32, 32
      %561 = vsyncadd [#allocation3], %s560
      %s563 = sshll.u32 [#allocation2], 4
      %s564 = int_to_ptr.vmem [resolvable:$true] %s563
      %566 = dma.vmem_to_hbm [thread:$0]  %s564, 32, %s5, [#allocation3]
    $region25: #{another_disc2d_forward.13} parent=1 // pred_fallthru
      _
    // Predicated region
    $region26: #{another_disc2d_forward.13} parent=1 // pred_check
      _
    $region27: #{another_disc2d_forward.13} parent=1 // pred_check_branch
      %568 = sbr.rel (0) target = $region29
    $region28: #{another_disc2d_forward.13} parent=1 // pred_region
      %569 = dma.done [#allocation3], 32
    $region29: #{another_disc2d_forward.13} parent=1 // pred_fallthru
      _
    %570 = vsyncpa [#allocation3], 1

</llo_original>
